<compile_context>
chip_gen: v6e
topology: v6e:2x2x1
jax: 0.10.0
libtpu: 0.0.40
codegen_flags: <defaults>
</compile_context>

<pallas_src>
import functools
import math

import jax
import jax.numpy as jnp
from jax.experimental import pallas as pl
from jax.experimental.pallas import tpu as pltpu


# --------------------------------------------------------------------------
# Tiled matmul kernel (bf16 operands, f32 accumulation) -- used for patch embed.
# --------------------------------------------------------------------------

def _matmul_kernel(x_ref, w_ref, o_ref, acc_ref):
    k = pl.program_id(2)

    @pl.when(k == 0)
    def _():
        acc_ref[...] = jnp.zeros_like(acc_ref)

    acc_ref[...] += jnp.dot(x_ref[...], w_ref[...],
                            preferred_element_type=jnp.float32)

    @pl.when(k == pl.num_programs(2) - 1)
    def _():
        o_ref[...] = acc_ref[...].astype(o_ref.dtype)


def pallas_matmul(x, w):
    """x @ w (no bias), tiled + pipelined, bf16 MXU / f32 accumulate."""
    M, K = x.shape
    K2, N = w.shape
    assert K == K2

    def rup(v, m):
        return ((v + m - 1) // m) * m

    tm = min(256, rup(M, 8))
    tn = min(256, rup(N, 128))
    tk = min(512, rup(K, 128))
    Mp, Kp, Np = rup(M, tm), rup(K, tk), rup(N, tn)

    xp = jnp.pad(x.astype(jnp.bfloat16), ((0, Mp - M), (0, Kp - K)))
    wp = jnp.pad(w.astype(jnp.bfloat16), ((0, Kp - K), (0, Np - N)))

    out = pl.pallas_call(
        _matmul_kernel,
        grid=(Mp // tm, Np // tn, Kp // tk),
        in_specs=[
            pl.BlockSpec((tm, tk), lambda i, j, k: (i, k)),
            pl.BlockSpec((tk, tn), lambda i, j, k: (k, j)),
        ],
        out_specs=pl.BlockSpec((tm, tn), lambda i, j, k: (i, j)),
        out_shape=jax.ShapeDtypeStruct((Mp, Np), jnp.float32),
        scratch_shapes=[pltpu.VMEM((tm, tn), jnp.float32)],
        compiler_params=pltpu.CompilerParams(
            dimension_semantics=("parallel", "parallel", "arbitrary")),
    )(xp, wp)
    return out[:M, :N]


# --------------------------------------------------------------------------
# Fused LayerNorm + projection (vision ln_post+proj, text ln_final+proj).
# Projection output is padded to a lane-dense (>=128) width, sliced on host.
# --------------------------------------------------------------------------

def _ln_proj_kernel(x_ref, g_ref, b_ref, w_ref, o_ref, *, eps):
    x = x_ref[...].astype(jnp.float32)
    mu = jnp.mean(x, axis=-1, keepdims=True)
    var = jnp.mean(jnp.square(x - mu), axis=-1, keepdims=True)
    h = (x - mu) * jax.lax.rsqrt(var + eps) * g_ref[...] + b_ref[...]
    o_ref[...] = jnp.dot(h.astype(jnp.bfloat16), w_ref[...],
                         preferred_element_type=jnp.float32).astype(o_ref.dtype)


def pallas_ln_proj(x, g, b, w, eps=1e-5):
    B, D = x.shape
    E = w.shape[1]
    Ep = max(128, ((E + 127) // 128) * 128)
    wp = jnp.pad(w.astype(jnp.bfloat16), ((0, 0), (0, Ep - E)))
    out = pl.pallas_call(
        functools.partial(_ln_proj_kernel, eps=eps),
        grid=(1,),
        in_specs=[
            pl.BlockSpec((B, D), lambda i: (0, 0)),
            pl.BlockSpec((1, D), lambda i: (0, 0)),
            pl.BlockSpec((1, D), lambda i: (0, 0)),
            pl.BlockSpec((D, Ep), lambda i: (0, 0)),
        ],
        out_specs=pl.BlockSpec((B, Ep), lambda i: (0, 0)),
        out_shape=jax.ShapeDtypeStruct((B, Ep), jnp.float32),
    )(x.astype(jnp.float32),
      g.reshape(1, D).astype(jnp.float32),
      b.reshape(1, D).astype(jnp.float32),
      wp)
    return out[:, :E]


# --------------------------------------------------------------------------
# Fused transformer tower: grid over layers, x resident in VMEM scratch.
# Each grid step = one full residual block (LN1+QKV+attn+out-proj, LN2+MLP).
# Optional pre-LN (vision ln_pre) is applied in the l==0 phase.
# --------------------------------------------------------------------------

def _tower_kernel(x_in_ref, pre_g_ref, pre_b_ref,
                  ln1_g_ref, ln1_b_ref, wqkv_ref, bqkv_ref, wo_ref, bo_ref,
                  ln2_g_ref, ln2_b_ref, w1_ref, b1_ref, w2_ref, b2_ref,
                  out_ref, x_vmem,
                  *, n_head, causal, valid_len, pre_ln, eps=1e-5):
    l = pl.program_id(0)
    n_layers = pl.num_programs(0)

    B, S, D = x_vmem.shape
    BS = B * S
    Dh = D // n_head
    scale = 1.0 / math.sqrt(Dh)

    def layer_norm(v, g, b):
        mu = jnp.mean(v, axis=-1, keepdims=True)
        var = jnp.mean(jnp.square(v - mu), axis=-1, keepdims=True)
        return (v - mu) * jax.lax.rsqrt(var + eps) * g + b

    def quick_gelu(v):                      # x * sigmoid(1.702 x)
        return v * pl.reciprocal(1.0 + jnp.exp(-1.702 * v), approx=True)

    @pl.when(l == 0)
    def _():
        x0 = x_in_ref[...].astype(jnp.float32)
        if pre_ln:
            x0 = layer_norm(x0.reshape(BS, D), pre_g_ref[...], pre_b_ref[...]
                            ).reshape(B, S, D)
        x_vmem[...] = x0

    # Per-layer weights (leading dim of each block is the layer axis, size 1).
    g1 = ln1_g_ref[0]      # (1, D)
    be1 = ln1_b_ref[0]
    g2 = ln2_g_ref[0]
    be2 = ln2_b_ref[0]
    wqkv = wqkv_ref[0]     # (D, 3D)  bf16
    bqkv = bqkv_ref[0]     # (1, 3D)  f32
    wo = wo_ref[0]         # (D, D)   bf16
    bo = bo_ref[0]         # (1, D)   f32
    w1 = w1_ref[0]         # (D, 4D)  bf16
    b1 = b1_ref[0]         # (1, 4D)  f32
    w2 = w2_ref[0]         # (4D, D)  bf16
    b2 = b2_ref[0]         # (1, D)   f32

    # Static attention mask (causal for text, key-padding for padded vision seq).
    neg_mask = None
    if causal or valid_len < S:
        col = jax.lax.broadcasted_iota(jnp.int32, (S, S), 1)
        m = jnp.zeros((S, S), jnp.float32)
        if causal:
            row = jax.lax.broadcasted_iota(jnp.int32, (S, S), 0)
            m = jnp.where(col <= row, m, -1e9)
        if valid_len < S:
            m = jnp.where(col < valid_len, m, -1e9)
        neg_mask = m

    x2 = x_vmem[...].reshape(BS, D)                           # (B*S, D) f32

    # ---- attention sub-block: LN1 + QKV + per-head SDPA + out-proj ----
    h = layer_norm(x2, g1, be1).astype(jnp.bfloat16)
    qkv = jnp.dot(h, wqkv, preferred_element_type=jnp.float32) + bqkv     # (BS, 3D)
    qkv3 = qkv.reshape(B, S, 3 * D)

    attn = jnp.zeros((BS, D), jnp.float32)
    for hh in range(n_head):
        q = (qkv3[:, :, hh * Dh:(hh + 1) * Dh] * scale).astype(jnp.bfloat16)
        k = qkv3[:, :, D + hh * Dh:D + (hh + 1) * Dh].astype(jnp.bfloat16)
        v = qkv3[:, :, 2 * D + hh * Dh:2 * D + (hh + 1) * Dh].astype(jnp.bfloat16)

        s = jnp.einsum('bqd,bkd->bqk', q, k,
                       preferred_element_type=jnp.float32)                # (B,S,S)
        if neg_mask is not None:
            s = s + neg_mask
        s = s - jnp.max(s, axis=-1, keepdims=True)
        p = jnp.exp(s)
        p = p * pl.reciprocal(jnp.sum(p, axis=-1, keepdims=True), approx=True)

        o_h = jnp.einsum('bqk,bkd->bqd', p.astype(jnp.bfloat16), v,
                         preferred_element_type=jnp.float32)              # (B,S,Dh)
        # out-proj accumulated per head: concat_h(o_h) @ Wo == sum_h o_h @ Wo[h]
        attn = attn + jnp.dot(o_h.reshape(BS, Dh).astype(jnp.bfloat16),
                              wo[hh * Dh:(hh + 1) * Dh, :],
                              preferred_element_type=jnp.float32)
    x2 = x2 + attn + bo

    # ---- MLP sub-block: LN2 + W1 + QuickGELU + W2 ----
    h = layer_norm(x2, g2, be2).astype(jnp.bfloat16)
    h1 = jnp.dot(h, w1, preferred_element_type=jnp.float32) + b1
    h1 = quick_gelu(h1)
    h2 = jnp.dot(h1.astype(jnp.bfloat16), w2,
                 preferred_element_type=jnp.float32) + b2
    x2 = x2 + h2

    x_vmem[...] = x2.reshape(B, S, D)

    @pl.when(l == n_layers - 1)
    def _():
        out_ref[...] = x_vmem[...].astype(out_ref.dtype)


def pallas_tower(x, blocks, n_head, causal, valid_len=None, pre_ln=None):
    B, S, D = x.shape
    if valid_len is None:
        valid_len = S
    L = blocks["wqkv"].shape[0]
    D3 = blocks["wqkv"].shape[-1]
    Dff = blocks["w1"].shape[-1]

    if pre_ln is not None:
        pre_g = pre_ln[0].reshape(1, D).astype(jnp.float32)
        pre_b = pre_ln[1].reshape(1, D).astype(jnp.float32)
    else:
        pre_g = jnp.ones((1, D), jnp.float32)
        pre_b = jnp.zeros((1, D), jnp.float32)

    kernel = functools.partial(_tower_kernel, n_head=n_head, causal=causal,
                               valid_len=valid_len, pre_ln=pre_ln is not None)
    return pl.pallas_call(
        kernel,
        grid=(L,),
        in_specs=[
            pl.BlockSpec((B, S, D), lambda l: (0, 0, 0)),      # x (read at l==0)
            pl.BlockSpec((1, D), lambda l: (0, 0)),            # pre-LN gamma
            pl.BlockSpec((1, D), lambda l: (0, 0)),            # pre-LN beta
            pl.BlockSpec((1, 1, D), lambda l: (l, 0, 0)),      # ln1_g
            pl.BlockSpec((1, 1, D), lambda l: (l, 0, 0)),      # ln1_b
            pl.BlockSpec((1, D, D3), lambda l: (l, 0, 0)),     # wqkv
            pl.BlockSpec((1, 1, D3), lambda l: (l, 0, 0)),     # bqkv
            pl.BlockSpec((1, D, D), lambda l: (l, 0, 0)),      # wo
            pl.BlockSpec((1, 1, D), lambda l: (l, 0, 0)),      # bo
            pl.BlockSpec((1, 1, D), lambda l: (l, 0, 0)),      # ln2_g
            pl.BlockSpec((1, 1, D), lambda l: (l, 0, 0)),      # ln2_b
            pl.BlockSpec((1, D, Dff), lambda l: (l, 0, 0)),    # w1
            pl.BlockSpec((1, 1, Dff), lambda l: (l, 0, 0)),    # b1
            pl.BlockSpec((1, Dff, D), lambda l: (l, 0, 0)),    # w2
            pl.BlockSpec((1, 1, D), lambda l: (l, 0, 0)),      # b2
        ],
        out_specs=pl.BlockSpec((B, S, D), lambda l: (0, 0, 0)),
        out_shape=jax.ShapeDtypeStruct((B, S, D), jnp.float32),
        scratch_shapes=[pltpu.VMEM((B, S, D), jnp.float32)],
        compiler_params=pltpu.CompilerParams(
            dimension_semantics=("arbitrary",),
            vmem_limit_bytes=32 * 1024 * 1024),
    )(x.astype(jnp.float32), pre_g, pre_b,
      blocks["ln1_g"], blocks["ln1_b"], blocks["wqkv"], blocks["bqkv"],
      blocks["wo"], blocks["bo"], blocks["ln2_g"], blocks["ln2_b"],
      blocks["w1"], blocks["b1"], blocks["w2"], blocks["b2"])


# --------------------------------------------------------------------------
# CLIP encoders (host glue: im2col, class token, pos emb, embedding gathers)
# --------------------------------------------------------------------------

def encode_image(images, vp, cfg):
    # images NCHW (B, 3, H, W) like PyTorch; stride=patch conv == im2col matmul.
    B, C, H, W = images.shape
    p = cfg["patch"]
    D = cfg["width"]
    nH, nW = H // p, W // p
    patches = images.reshape(B, C, nH, p, nW, p).transpose(0, 2, 4, 1, 3, 5)
    patches = patches.reshape(B * nH * nW, C * p * p)
    x = pallas_matmul(patches, vp["conv_w"]).reshape(B, nH * nW, D)
    cls = jnp.broadcast_to(vp["class_emb"].reshape(1, 1, D), (B, 1, D))
    x = jnp.concatenate([cls, x], axis=1) + vp["pos_emb"][None]     # (B, nP+1, D)
    S_real = x.shape[1]
    S_pad = ((S_real + 7) // 8) * 8        # sublane-align the sequence axis
    x = jnp.pad(x, ((0, 0), (0, S_pad - S_real), (0, 0)))
    x = pallas_tower(x, vp["blocks"], cfg["heads"], causal=False,
                     valid_len=S_real,
                     pre_ln=(vp["ln_pre_g"], vp["ln_pre_b"]))
    return pallas_ln_proj(x[:, 0, :], vp["ln_post_g"], vp["ln_post_b"], vp["proj"])


def encode_text(tokens, tp, cfg):
    B, S = tokens.shape
    x = jnp.take(tp["tok_emb"], tokens, axis=0) + tp["pos_emb"][None]
    x = pallas_tower(x, tp["blocks"], cfg["heads"], causal=True)
    eot = jnp.argmax(tokens, axis=-1)                 # CLIP: EOT has max token id
    feats = x[jnp.arange(B), eot]                     # (B, D)
    return pallas_ln_proj(feats, tp["ln_f_g"], tp["ln_f_b"], tp["proj"])


def clip_forward(images, tokens, params, cfg):
    # Mirrors CLIPModel.forward: returns (image_features, text_features)
    return (encode_image(images, params["visual"], cfg),
            encode_text(tokens, params["text"], cfg))


# --------------------------------------------------------------------------
# parameter init (per-layer weights stacked along a leading L axis)
# --------------------------------------------------------------------------

def init_tower_params(key, D, L):
    s = 0.02

    def one(k):
        k0, k1, k2, k3 = jax.random.split(k, 4)
        return {
            "ln1_g": jnp.ones((1, D), jnp.float32),
            "ln1_b": jnp.zeros((1, D), jnp.float32),
            "wqkv": (jax.random.normal(k0, (D, 3 * D), jnp.float32) * s
                     ).astype(jnp.bfloat16),
            "bqkv": jnp.zeros((1, 3 * D), jnp.float32),
            "wo": (jax.random.normal(k1, (D, D), jnp.float32) * s
                   ).astype(jnp.bfloat16),
            "bo": jnp.zeros((1, D), jnp.float32),
            "ln2_g": jnp.ones((1, D), jnp.float32),
            "ln2_b": jnp.zeros((1, D), jnp.float32),
            "w1": (jax.random.normal(k2, (D, 4 * D), jnp.float32) * s
                   ).astype(jnp.bfloat16),
            "b1": jnp.zeros((1, 4 * D), jnp.float32),
            "w2": (jax.random.normal(k3, (4 * D, D), jnp.float32) * s
                   ).astype(jnp.bfloat16),
            "b2": jnp.zeros((1, D), jnp.float32),
        }

    per = [one(k) for k in jax.random.split(key, L)]
    return {name: jnp.stack([p[name] for p in per], axis=0) for name in per[0]}


def init_params(key, cfg):
    D, p, C = cfg["width"], cfg["patch"], 3
    nP = (cfg["image_size"] // p) ** 2
    kv, kt = jax.random.split(key)
    kv0, kv1, kv2, kv3, kvb = jax.random.split(kv, 5)
    kt0, kt1, kt2, ktb = jax.random.split(kt, 4)
    s = 0.02
    visual = {
        "conv_w": jax.random.normal(kv0, (C * p * p, D), jnp.float32) * s,
        "class_emb": jax.random.normal(kv1, (D,), jnp.float32) * s,
        "pos_emb": jax.random.normal(kv2, (nP + 1, D), jnp.float32) * s,
        "ln_pre_g": jnp.ones((D,), jnp.float32),
        "ln_pre_b": jnp.zeros((D,), jnp.float32),
        "ln_post_g": jnp.ones((D,), jnp.float32),
        "ln_post_b": jnp.zeros((D,), jnp.float32),
        "proj": jax.random.normal(kv3, (D, cfg["embed_dim"]), jnp.float32) * s,
        "blocks": init_tower_params(kvb, D, cfg["layers"]),
    }
    text = {
        "tok_emb": jax.random.normal(kt0, (cfg["vocab"], D), jnp.float32) * s,
        "pos_emb": jax.random.normal(kt1, (cfg["context"], D), jnp.float32) * s,
        "ln_f_g": jnp.ones((D,), jnp.float32),
        "ln_f_b": jnp.zeros((D,), jnp.float32),
        "proj": jax.random.normal(kt2, (D, cfg["embed_dim"]), jnp.float32) * s,
        "blocks": init_tower_params(ktb, D, cfg["layers"]),
    }
    return {"visual": visual, "text": text}


# ------------------------------------ main ------------------------------------

if __name__ == "__main__":
    cfg = dict(image_size=16, patch=8, width=128, heads=2, layers=2,
               embed_dim=64, vocab=64, context=8)

    key = jax.random.PRNGKey(0)
    kp, ki, kt = jax.random.split(key, 3)

    params = init_params(kp, cfg)

    B = 2
    images = jax.random.normal(ki, (B, 3, cfg["image_size"], cfg["image_size"]),
                               jnp.float32)                     # NCHW like PyTorch
    tokens = jax.random.randint(kt, (B, cfg["context"]), 1, cfg["vocab"] - 1,
                                dtype=jnp.int32)
    tokens = tokens.at[:, -1].set(cfg["vocab"] - 1)             # EOT = largest id

    fwd = jax.jit(functools.partial(clip_forward, cfg=cfg))
    img_feat, txt_feat = fwd(images, tokens, params)
    jax.block_until_ready((img_feat, txt_feat))

    assert img_feat.shape == (B, cfg["embed_dim"])
    assert txt_feat.shape == (B, cfg["embed_dim"])
    assert jnp.all(jnp.isfinite(img_feat)) and jnp.all(jnp.isfinite(txt_feat))
    print("KERNEL_OK")
</pallas_src>

<mosaic_0001>
module attributes {stable_mosaic.version = 11 : i64} {
  func.func @_matmul_kernel(%arg0: i32, %arg1: i32, %arg2: i32, %arg3: memref<8x256xbf16, #tpu.memory_space<vmem>>, %arg4: memref<256x128xbf16, #tpu.memory_space<vmem>>, %arg5: memref<8x128xf32, #tpu.memory_space<vmem>>, %arg6: memref<8x128xf32, #tpu.memory_space<vmem>>) attributes {dimension_semantics = [#tpu.dimension_semantics<parallel>, #tpu.dimension_semantics<parallel>, #tpu.dimension_semantics<arbitrary>], iteration_bounds = array<i64: 1, 1, 1>, scalar_prefetch = 0 : i64, scratch_operands = 1 : i64, tpu.core_type = #tpu.core_type<tc>, window_params = [{transform_indices = @transform_0, window_bounds = array<i64: 8, 256>}, {transform_indices = @transform_1, window_bounds = array<i64: 256, 128>}, {transform_indices = @transform_2, window_bounds = array<i64: 8, 128>}]} {
    %c0_i32 = arith.constant 0 : i32
    %0 = arith.cmpi eq, %arg2, %c0_i32 : i32
    %1 = arith.extui %0 : i1 to i32
    %c0_i32_0 = arith.constant 0 : i32
    %2 = arith.cmpi ne, %1, %c0_i32_0 : i32
    scf.if %2 {
      %cst_10 = arith.constant 0.000000e+00 : f32
      %12 = vector.broadcast %cst_10 : f32 to vector<8x128xf32>
      %c0_11 = arith.constant 0 : index
      %c0_12 = arith.constant 0 : index
      %13 = vector.load %arg6[%c0_11, %c0_12] : memref<8x128xf32, #tpu.memory_space<vmem>>, vector<8x128xf32>
      tpu.vector_store %arg6[%c0_11, %c0_12], %12 {strides = array<i32>} : memref<8x128xf32, #tpu.memory_space<vmem>>, vector<8x128xf32>,
    } else {
    }
    %c0 = arith.constant 0 : index
    %c0_1 = arith.constant 0 : index
    %3 = vector.load %arg6[%c0, %c0_1] : memref<8x128xf32, #tpu.memory_space<vmem>>, vector<8x128xf32>
    %c0_2 = arith.constant 0 : index
    %c0_3 = arith.constant 0 : index
    %4 = vector.load %arg3[%c0_2, %c0_3] : memref<8x256xbf16, #tpu.memory_space<vmem>>, vector<8x256xbf16>
    %c0_4 = arith.constant 0 : index
    %c0_5 = arith.constant 0 : index
    %5 = vector.load %arg4[%c0_4, %c0_5] : memref<256x128xbf16, #tpu.memory_space<vmem>>, vector<256x128xbf16>
    %cst = arith.constant dense<0.000000e+00> : vector<8x128xf32>
    %6 = tpu.matmul %4, %5, %cst {dimension_numbers = #tpu.dot_dimension_numbers<[1], [0], [0], [1], [0, 0, 1, 1], [], []>} : vector<8x256xbf16>, vector<256x128xbf16>, vector<8x128xf32> -> vector<8x128xf32>
    %7 = arith.addf %3, %6 : vector<8x128xf32>
    %c0_6 = arith.constant 0 : index
    %c0_7 = arith.constant 0 : index
    %8 = vector.load %arg6[%c0_6, %c0_7] : memref<8x128xf32, #tpu.memory_space<vmem>>, vector<8x128xf32>
    tpu.vector_store %arg6[%c0_6, %c0_7], %7 {strides = array<i32>} : memref<8x128xf32, #tpu.memory_space<vmem>>, vector<8x128xf32>,
    %c0_i32_8 = arith.constant 0 : i32
    %9 = arith.cmpi eq, %arg2, %c0_i32_8 : i32
    %10 = arith.extui %9 : i1 to i32
    %c0_i32_9 = arith.constant 0 : i32
    %11 = arith.cmpi ne, %10, %c0_i32_9 : i32
    scf.if %11 {
      %c0_10 = arith.constant 0 : index
      %c0_11 = arith.constant 0 : index
      %12 = vector.load %arg6[%c0_10, %c0_11] : memref<8x128xf32, #tpu.memory_space<vmem>>, vector<8x128xf32>
      %c0_12 = arith.constant 0 : index
      %c0_13 = arith.constant 0 : index
      %13 = vector.load %arg5[%c0_12, %c0_13] : memref<8x128xf32, #tpu.memory_space<vmem>>, vector<8x128xf32>
      tpu.vector_store %arg5[%c0_12, %c0_13], %12 {strides = array<i32>} : memref<8x128xf32, #tpu.memory_space<vmem>>, vector<8x128xf32>,
    } else {
    }
    return
  }
  func.func @transform_0(%arg0: i32, %arg1: i32, %arg2: i32) -> (i32, i32) {
    %c0_i32 = arith.constant 0 : i32
    return %arg0, %arg2 : i32, i32
  }
  func.func @transform_1(%arg0: i32, %arg1: i32, %arg2: i32) -> (i32, i32) {
    %c0_i32 = arith.constant 0 : i32
    return %arg2, %arg1 : i32, i32
  }
  func.func @transform_2(%arg0: i32, %arg1: i32, %arg2: i32) -> (i32, i32) {
    %c0_i32 = arith.constant 0 : i32
    return %arg0, %arg1 : i32, i32
  }
}

module attributes {stable_mosaic.version = 11 : i64} {
  func.func @_tower_kernel(%arg0: i32, %arg1: memref<2x8x128xf32, #tpu.memory_space<vmem>>, %arg2: memref<1x128xf32, #tpu.memory_space<vmem>>, %arg3: memref<1x128xf32, #tpu.memory_space<vmem>>, %arg4: memref<1x1x128xf32, #tpu.memory_space<vmem>>, %arg5: memref<1x1x128xf32, #tpu.memory_space<vmem>>, %arg6: memref<1x128x384xbf16, #tpu.memory_space<vmem>>, %arg7: memref<1x1x384xf32, #tpu.memory_space<vmem>>, %arg8: memref<1x128x128xbf16, #tpu.memory_space<vmem>>, %arg9: memref<1x1x128xf32, #tpu.memory_space<vmem>>, %arg10: memref<1x1x128xf32, #tpu.memory_space<vmem>>, %arg11: memref<1x1x128xf32, #tpu.memory_space<vmem>>, %arg12: memref<1x128x512xbf16, #tpu.memory_space<vmem>>, %arg13: memref<1x1x512xf32, #tpu.memory_space<vmem>>, %arg14: memref<1x512x128xbf16, #tpu.memory_space<vmem>>, %arg15: memref<1x1x128xf32, #tpu.memory_space<vmem>>, %arg16: memref<2x8x128xf32, #tpu.memory_space<vmem>>, %arg17: memref<2x8x128xf32, #tpu.memory_space<vmem>>) attributes {dimension_semantics = [#tpu.dimension_semantics<arbitrary>], iteration_bounds = array<i64: 2>, scalar_prefetch = 0 : i64, scratch_operands = 1 : i64, tpu.core_type = #tpu.core_type<tc>, window_params = [{pipeline_mode = #tpu.pipeline_mode<synchronous>, transform_indices = @transform_0, window_bounds = array<i64: 2, 8, 128>}, {pipeline_mode = #tpu.pipeline_mode<synchronous>, transform_indices = @transform_1, window_bounds = array<i64: 1, 128>}, {pipeline_mode = #tpu.pipeline_mode<synchronous>, transform_indices = @transform_2, window_bounds = array<i64: 1, 128>}, {transform_indices = @transform_3, window_bounds = array<i64: 1, 1, 128>}, {transform_indices = @transform_4, window_bounds = array<i64: 1, 1, 128>}, {transform_indices = @transform_5, window_bounds = array<i64: 1, 128, 384>}, {transform_indices = @transform_6, window_bounds = array<i64: 1, 1, 384>}, {transform_indices = @transform_7, window_bounds = array<i64: 1, 128, 128>}, {transform_indices = @transform_8, window_bounds = array<i64: 1, 1, 128>}, {transform_indices = @transform_9, window_bounds = array<i64: 1, 1, 128>}, {transform_indices = @transform_10, window_bounds = array<i64: 1, 1, 128>}, {transform_indices = @transform_11, window_bounds = array<i64: 1, 128, 512>}, {transform_indices = @transform_12, window_bounds = array<i64: 1, 1, 512>}, {transform_indices = @transform_13, window_bounds = array<i64: 1, 512, 128>}, {transform_indices = @transform_14, window_bounds = array<i64: 1, 1, 128>}, {pipeline_mode = #tpu.pipeline_mode<synchronous>, transform_indices = @transform_15, window_bounds = array<i64: 2, 8, 128>}]} {
    %c0_i32 = arith.constant 0 : i32
    %0 = arith.cmpi eq, %arg0, %c0_i32 : i32
    %1 = arith.extui %0 : i1 to i32
    %c0_i32_0 = arith.constant 0 : i32
    %2 = arith.cmpi ne, %1, %c0_i32_0 : i32
    scf.if %2 {
      %c0_72 = arith.constant 0 : index
      %c0_73 = arith.constant 0 : index
      %c0_74 = arith.constant 0 : index
      %167 = vector.load %arg1[%c0_72, %c0_73, %c0_74] : memref<2x8x128xf32, #tpu.memory_space<vmem>>, vector<2x8x128xf32>
      %168 = vector.shape_cast %167 : vector<2x8x128xf32> to vector<16x128xf32>
      %c0_75 = arith.constant 0 : index
      %c0_76 = arith.constant 0 : index
      %169 = vector.load %arg2[%c0_75, %c0_76] : memref<1x128xf32, #tpu.memory_space<vmem>>, vector<1x128xf32>
      %c0_77 = arith.constant 0 : index
      %c0_78 = arith.constant 0 : index
      %170 = vector.load %arg3[%c0_77, %c0_78] : memref<1x128xf32, #tpu.memory_space<vmem>>, vector<1x128xf32>
      %cst_79 = arith.constant dense<0.000000e+00> : vector<16xf32>
      %171 = vector.multi_reduction <add>, %168, %cst_79 [1] : vector<16x128xf32> to vector<16xf32>
      %172 = vector.shape_cast %171 : vector<16xf32> to vector<16x1xf32>
      %cst_80 = arith.constant 1.280000e+02 : f32
      %173 = vector.broadcast %cst_80 : f32 to vector<16x1xf32>
      %174 = arith.divf %172, %173 : vector<16x1xf32>
      %175 = vector.broadcast %174 : vector<16x1xf32> to vector<16x128xf32>
      %176 = arith.subf %168, %175 : vector<16x128xf32>
      %177 = arith.mulf %176, %176 : vector<16x128xf32>
      %cst_81 = arith.constant dense<0.000000e+00> : vector<16xf32>
      %178 = vector.multi_reduction <add>, %177, %cst_81 [1] : vector<16x128xf32> to vector<16xf32>
      %179 = vector.shape_cast %178 : vector<16xf32> to vector<16x1xf32>
      %cst_82 = arith.constant 1.280000e+02 : f32
      %180 = vector.broadcast %cst_82 : f32 to vector<16x1xf32>
      %181 = arith.divf %179, %180 : vector<16x1xf32>
      %182 = vector.broadcast %174 : vector<16x1xf32> to vector<16x128xf32>
      %183 = arith.subf %168, %182 : vector<16x128xf32>
      %cst_83 = arith.constant 9.99999974E-6 : f32
      %184 = vector.broadcast %cst_83 : f32 to vector<16x1xf32>
      %185 = arith.addf %181, %184 : vector<16x1xf32>
      %186 = math.rsqrt %185 : vector<16x1xf32>
      %187 = vector.broadcast %186 : vector<16x1xf32> to vector<16x128xf32>
      %188 = arith.mulf %183, %187 : vector<16x128xf32>
      %189 = vector.broadcast %169 : vector<1x128xf32> to vector<16x128xf32>
      %190 = arith.mulf %188, %189 : vector<16x128xf32>
      %191 = vector.broadcast %170 : vector<1x128xf32> to vector<16x128xf32>
      %192 = arith.addf %190, %191 : vector<16x128xf32>
      %193 = vector.shape_cast %192 : vector<16x128xf32> to vector<2x8x128xf32>
      %c0_84 = arith.constant 0 : index
      %c0_85 = arith.constant 0 : index
      %c0_86 = arith.constant 0 : index
      %194 = vector.load %arg17[%c0_84, %c0_85, %c0_86] : memref<2x8x128xf32, #tpu.memory_space<vmem>>, vector<2x8x128xf32>
      tpu.vector_store %arg17[%c0_84, %c0_85, %c0_86], %193 {strides = array<i32>} : memref<2x8x128xf32, #tpu.memory_space<vmem>>, vector<2x8x128xf32>,
    } else {
    }
    %c0 = arith.constant 0 : index
    %c0_1 = arith.constant 0 : index
    %c0_2 = arith.constant 0 : index
    %3 = vector.load %arg4[%c0, %c0_1, %c0_2] : memref<1x1x128xf32, #tpu.memory_space<vmem>>, vector<1x1x128xf32>
    %4 = vector.shape_cast %3 : vector<1x1x128xf32> to vector<1x128xf32>
    %c0_3 = arith.constant 0 : index
    %c0_4 = arith.constant 0 : index
    %c0_5 = arith.constant 0 : index
    %5 = vector.load %arg5[%c0_3, %c0_4, %c0_5] : memref<1x1x128xf32, #tpu.memory_space<vmem>>, vector<1x1x128xf32>
    %6 = vector.shape_cast %5 : vector<1x1x128xf32> to vector<1x128xf32>
    %c0_6 = arith.constant 0 : index
    %c0_7 = arith.constant 0 : index
    %c0_8 = arith.constant 0 : index
    %7 = vector.load %arg10[%c0_6, %c0_7, %c0_8] : memref<1x1x128xf32, #tpu.memory_space<vmem>>, vector<1x1x128xf32>
    %8 = vector.shape_cast %7 : vector<1x1x128xf32> to vector<1x128xf32>
    %c0_9 = arith.constant 0 : index
    %c0_10 = arith.constant 0 : index
    %c0_11 = arith.constant 0 : index
    %9 = vector.load %arg11[%c0_9, %c0_10, %c0_11] : memref<1x1x128xf32, #tpu.memory_space<vmem>>, vector<1x1x128xf32>
    %10 = vector.shape_cast %9 : vector<1x1x128xf32> to vector<1x128xf32>
    %c0_12 = arith.constant 0 : index
    %c0_13 = arith.constant 0 : index
    %c0_14 = arith.constant 0 : index
    %11 = vector.load %arg6[%c0_12, %c0_13, %c0_14] : memref<1x128x384xbf16, #tpu.memory_space<vmem>>, vector<1x128x384xbf16>
    %12 = vector.shape_cast %11 : vector<1x128x384xbf16> to vector<128x384xbf16>
    %c0_15 = arith.constant 0 : index
    %c0_16 = arith.constant 0 : index
    %c0_17 = arith.constant 0 : index
    %13 = vector.load %arg7[%c0_15, %c0_16, %c0_17] : memref<1x1x384xf32, #tpu.memory_space<vmem>>, vector<1x1x384xf32>
    %14 = vector.shape_cast %13 : vector<1x1x384xf32> to vector<1x384xf32>
    %c0_18 = arith.constant 0 : index
    %c0_19 = arith.constant 0 : index
    %c0_20 = arith.constant 0 : index
    %15 = vector.load %arg8[%c0_18, %c0_19, %c0_20] : memref<1x128x128xbf16, #tpu.memory_space<vmem>>, vector<1x128x128xbf16>
    %16 = vector.shape_cast %15 : vector<1x128x128xbf16> to vector<128x128xbf16>
    %c0_21 = arith.constant 0 : index
    %c0_22 = arith.constant 0 : index
    %c0_23 = arith.constant 0 : index
    %17 = vector.load %arg9[%c0_21, %c0_22, %c0_23] : memref<1x1x128xf32, #tpu.memory_space<vmem>>, vector<1x1x128xf32>
    %18 = vector.shape_cast %17 : vector<1x1x128xf32> to vector<1x128xf32>
    %c0_24 = arith.constant 0 : index
    %c0_25 = arith.constant 0 : index
    %c0_26 = arith.constant 0 : index
    %19 = vector.load %arg12[%c0_24, %c0_25, %c0_26] : memref<1x128x512xbf16, #tpu.memory_space<vmem>>, vector<1x128x512xbf16>
    %20 = vector.shape_cast %19 : vector<1x128x512xbf16> to vector<128x512xbf16>
    %c0_27 = arith.constant 0 : index
    %c0_28 = arith.constant 0 : index
    %c0_29 = arith.constant 0 : index
    %21 = vector.load %arg13[%c0_27, %c0_28, %c0_29] : memref<1x1x512xf32, #tpu.memory_space<vmem>>, vector<1x1x512xf32>
    %22 = vector.shape_cast %21 : vector<1x1x512xf32> to vector<1x512xf32>
    %c0_30 = arith.constant 0 : index
    %c0_31 = arith.constant 0 : index
    %c0_32 = arith.constant 0 : index
    %23 = vector.load %arg14[%c0_30, %c0_31, %c0_32] : memref<1x512x128xbf16, #tpu.memory_space<vmem>>, vector<1x512x128xbf16>
    %24 = vector.shape_cast %23 : vector<1x512x128xbf16> to vector<512x128xbf16>
    %c0_33 = arith.constant 0 : index
    %c0_34 = arith.constant 0 : index
    %c0_35 = arith.constant 0 : index
    %25 = vector.load %arg15[%c0_33, %c0_34, %c0_35] : memref<1x1x128xf32, #tpu.memory_space<vmem>>, vector<1x1x128xf32>
    %26 = vector.shape_cast %25 : vector<1x1x128xf32> to vector<1x128xf32>
    %27 = tpu.iota {dimensions = array<i32: 1>} : vector<8x8xi32>
    %cst = arith.constant 0.000000e+00 : f32
    %28 = vector.broadcast %cst : f32 to vector<8x8xf32>
    %c5_i32 = arith.constant 5 : i32
    %29 = vector.broadcast %c5_i32 : i32 to vector<8x8xi32>
    %30 = arith.cmpi slt, %27, %29 : vector<8x8xi32>
    %cst_36 = arith.constant -1.000000e+09 : f32
    %31 = vector.broadcast %cst_36 : f32 to vector<8x8xf32>
    %32 = arith.select %30, %28, %31 : vector<8x8xi1>, vector<8x8xf32>
    %c0_37 = arith.constant 0 : index
    %c0_38 = arith.constant 0 : index
    %c0_39 = arith.constant 0 : index
    %33 = vector.load %arg17[%c0_37, %c0_38, %c0_39] : memref<2x8x128xf32, #tpu.memory_space<vmem>>, vector<2x8x128xf32>
    %34 = vector.shape_cast %33 : vector<2x8x128xf32> to vector<16x128xf32>
    %cst_40 = arith.constant dense<0.000000e+00> : vector<16xf32>
    %35 = vector.multi_reduction <add>, %34, %cst_40 [1] : vector<16x128xf32> to vector<16xf32>
    %36 = vector.shape_cast %35 : vector<16xf32> to vector<16x1xf32>
    %cst_41 = arith.constant 1.280000e+02 : f32
    %37 = vector.broadcast %cst_41 : f32 to vector<16x1xf32>
    %38 = arith.divf %36, %37 : vector<16x1xf32>
    %39 = vector.broadcast %38 : vector<16x1xf32> to vector<16x128xf32>
    %40 = arith.subf %34, %39 : vector<16x128xf32>
    %41 = arith.mulf %40, %40 : vector<16x128xf32>
    %cst_42 = arith.constant dense<0.000000e+00> : vector<16xf32>
    %42 = vector.multi_reduction <add>, %41, %cst_42 [1] : vector<16x128xf32> to vector<16xf32>
    %43 = vector.shape_cast %42 : vector<16xf32> to vector<16x1xf32>
    %cst_43 = arith.constant 1.280000e+02 : f32
    %44 = vector.broadcast %cst_43 : f32 to vector<16x1xf32>
    %45 = arith.divf %43, %44 : vector<16x1xf32>
    %46 = vector.broadcast %38 : vector<16x1xf32> to vector<16x128xf32>
    %47 = arith.subf %34, %46 : vector<16x128xf32>
    %cst_44 = arith.constant 9.99999974E-6 : f32
    %48 = vector.broadcast %cst_44 : f32 to vector<16x1xf32>
    %49 = arith.addf %45, %48 : vector<16x1xf32>
    %50 = math.rsqrt %49 : vector<16x1xf32>
    %51 = vector.broadcast %50 : vector<16x1xf32> to vector<16x128xf32>
    %52 = arith.mulf %47, %51 : vector<16x128xf32>
    %53 = vector.broadcast %4 : vector<1x128xf32> to vector<16x128xf32>
    %54 = arith.mulf %52, %53 : vector<16x128xf32>
    %55 = vector.broadcast %6 : vector<1x128xf32> to vector<16x128xf32>
    %56 = arith.addf %54, %55 : vector<16x128xf32>
    %57 = arith.truncf %56 : vector<16x128xf32> to vector<16x128xbf16>
    %cst_45 = arith.constant dense<0.000000e+00> : vector<16x384xf32>
    %58 = tpu.matmul %57, %12, %cst_45 {dimension_numbers = #tpu.dot_dimension_numbers<[1], [0], [0], [1], [0, 0, 1, 1], [], []>} : vector<16x128xbf16>, vector<128x384xbf16>, vector<16x384xf32> -> vector<16x384xf32>
    %59 = vector.broadcast %14 : vector<1x384xf32> to vector<16x384xf32>
    %60 = arith.addf %58, %59 : vector<16x384xf32>
    %61 = vector.shape_cast %60 : vector<16x384xf32> to vector<2x8x384xf32>
    %cst_46 = arith.constant 0.000000e+00 : f32
    %62 = vector.broadcast %cst_46 : f32 to vector<16x128xf32>
    %63 = vector.extract_strided_slice %61 {offsets = [0, 0, 0], sizes = [2, 8, 64], strides = [1, 1, 1]} : vector<2x8x384xf32> to vector<2x8x64xf32>
    %cst_47 = arith.constant 1.250000e-01 : f32
    %64 = vector.broadcast %cst_47 : f32 to vector<2x8x64xf32>
    %65 = arith.mulf %63, %64 : vector<2x8x64xf32>
    %66 = arith.truncf %65 : vector<2x8x64xf32> to vector<2x8x64xbf16>
    %67 = vector.extract_strided_slice %61 {offsets = [0, 0, 128], sizes = [2, 8, 64], strides = [1, 1, 1]} : vector<2x8x384xf32> to vector<2x8x64xf32>
    %68 = arith.truncf %67 : vector<2x8x64xf32> to vector<2x8x64xbf16>
    %69 = vector.extract_strided_slice %61 {offsets = [0, 0, 256], sizes = [2, 8, 64], strides = [1, 1, 1]} : vector<2x8x384xf32> to vector<2x8x64xf32>
    %70 = arith.truncf %69 : vector<2x8x64xf32> to vector<2x8x64xbf16>
    "tpu.trace_start"() <{level = 10 : i32, message = "bqd,bkd->bqk"}> : () -> ()
    %cst_48 = arith.constant dense<0.000000e+00> : vector<2x8x8xf32>
    %71 = tpu.matmul %66, %68, %cst_48 {dimension_numbers = #tpu.dot_dimension_numbers<[2], [2], [1], [1], [0, 0, 0, 1, 1, 1], [0], [0]>} : vector<2x8x64xbf16>, vector<2x8x64xbf16>, vector<2x8x8xf32> -> vector<2x8x8xf32>
    "tpu.trace_stop"() : () -> ()
    %72 = vector.shape_cast %32 : vector<8x8xf32> to vector<1x8x8xf32>
    %73 = vector.broadcast %72 : vector<1x8x8xf32> to vector<2x8x8xf32>
    %74 = arith.addf %71, %73 : vector<2x8x8xf32>
    %cst_49 = arith.constant dense<0xFF800000> : vector<2x8xf32>
    %75 = vector.multi_reduction <maximumf>, %74, %cst_49 [2] : vector<2x8x8xf32> to vector<2x8xf32>
    %76 = vector.shape_cast %75 : vector<2x8xf32> to vector<2x8x1xf32>
    %77 = vector.broadcast %76 : vector<2x8x1xf32> to vector<2x8x8xf32>
    %78 = arith.subf %74, %77 : vector<2x8x8xf32>
    %79 = math.exp %78 : vector<2x8x8xf32>
    %cst_50 = arith.constant dense<0.000000e+00> : vector<2x8xf32>
    %80 = vector.multi_reduction <add>, %79, %cst_50 [2] : vector<2x8x8xf32> to vector<2x8xf32>
    %81 = vector.shape_cast %80 : vector<2x8xf32> to vector<2x8x1xf32>
    %82 = tpu.reciprocal %81 {approx = true} : vector<2x8x1xf32> -> vector<2x8x1xf32>
    %83 = vector.broadcast %82 : vector<2x8x1xf32> to vector<2x8x8xf32>
    %84 = arith.mulf %79, %83 : vector<2x8x8xf32>
    %85 = arith.truncf %84 : vector<2x8x8xf32> to vector<2x8x8xbf16>
    "tpu.trace_start"() <{level = 10 : i32, message = "bqk,bkd->bqd"}> : () -> ()
    %cst_51 = arith.constant dense<0.000000e+00> : vector<2x8x64xf32>
    %86 = tpu.matmul %85, %70, %cst_51 {dimension_numbers = #tpu.dot_dimension_numbers<[2], [1], [1], [2], [0, 0, 0, 1, 1, 2], [0], [0]>} : vector<2x8x8xbf16>, vector<2x8x64xbf16>, vector<2x8x64xf32> -> vector<2x8x64xf32>
    "tpu.trace_stop"() : () -> ()
    %87 = vector.shape_cast %86 : vector<2x8x64xf32> to vector<16x64xf32>
    %88 = arith.truncf %87 : vector<16x64xf32> to vector<16x64xbf16>
    %89 = vector.extract_strided_slice %16 {offsets = [0, 0], sizes = [64, 128], strides = [1, 1]} : vector<128x128xbf16> to vector<64x128xbf16>
    %cst_52 = arith.constant dense<0.000000e+00> : vector<16x128xf32>
    %90 = tpu.matmul %88, %89, %cst_52 {dimension_numbers = #tpu.dot_dimension_numbers<[1], [0], [0], [1], [0, 0, 1, 1], [], []>} : vector<16x64xbf16>, vector<64x128xbf16>, vector<16x128xf32> -> vector<16x128xf32>
    %91 = arith.addf %62, %90 : vector<16x128xf32>
    %92 = vector.extract_strided_slice %61 {offsets = [0, 0, 64], sizes = [2, 8, 64], strides = [1, 1, 1]} : vector<2x8x384xf32> to vector<2x8x64xf32>
    %cst_53 = arith.constant 1.250000e-01 : f32
    %93 = vector.broadcast %cst_53 : f32 to vector<2x8x64xf32>
    %94 = arith.mulf %92, %93 : vector<2x8x64xf32>
    %95 = arith.truncf %94 : vector<2x8x64xf32> to vector<2x8x64xbf16>
    %96 = vector.extract_strided_slice %61 {offsets = [0, 0, 192], sizes = [2, 8, 64], strides = [1, 1, 1]} : vector<2x8x384xf32> to vector<2x8x64xf32>
    %97 = arith.truncf %96 : vector<2x8x64xf32> to vector<2x8x64xbf16>
    %98 = vector.extract_strided_slice %61 {offsets = [0, 0, 320], sizes = [2, 8, 64], strides = [1, 1, 1]} : vector<2x8x384xf32> to vector<2x8x64xf32>
    %99 = arith.truncf %98 : vector<2x8x64xf32> to vector<2x8x64xbf16>
    "tpu.trace_start"() <{level = 10 : i32, message = "bqd,bkd->bqk"}> : () -> ()
    %cst_54 = arith.constant dense<0.000000e+00> : vector<2x8x8xf32>
    %100 = tpu.matmul %95, %97, %cst_54 {dimension_numbers = #tpu.dot_dimension_numbers<[2], [2], [1], [1], [0, 0, 0, 1, 1, 1], [0], [0]>} : vector<2x8x64xbf16>, vector<2x8x64xbf16>, vector<2x8x8xf32> -> vector<2x8x8xf32>
    "tpu.trace_stop"() : () -> ()
    %101 = vector.shape_cast %32 : vector<8x8xf32> to vector<1x8x8xf32>
    %102 = vector.broadcast %101 : vector<1x8x8xf32> to vector<2x8x8xf32>
    %103 = arith.addf %100, %102 : vector<2x8x8xf32>
    %cst_55 = arith.constant dense<0xFF800000> : vector<2x8xf32>
    %104 = vector.multi_reduction <maximumf>, %103, %cst_55 [2] : vector<2x8x8xf32> to vector<2x8xf32>
    %105 = vector.shape_cast %104 : vector<2x8xf32> to vector<2x8x1xf32>
    %106 = vector.broadcast %105 : vector<2x8x1xf32> to vector<2x8x8xf32>
    %107 = arith.subf %103, %106 : vector<2x8x8xf32>
    %108 = math.exp %107 : vector<2x8x8xf32>
    %cst_56 = arith.constant dense<0.000000e+00> : vector<2x8xf32>
    %109 = vector.multi_reduction <add>, %108, %cst_56 [2] : vector<2x8x8xf32> to vector<2x8xf32>
    %110 = vector.shape_cast %109 : vector<2x8xf32> to vector<2x8x1xf32>
    %111 = tpu.reciprocal %110 {approx = true} : vector<2x8x1xf32> -> vector<2x8x1xf32>
    %112 = vector.broadcast %111 : vector<2x8x1xf32> to vector<2x8x8xf32>
    %113 = arith.mulf %108, %112 : vector<2x8x8xf32>
    %114 = arith.truncf %113 : vector<2x8x8xf32> to vector<2x8x8xbf16>
    "tpu.trace_start"() <{level = 10 : i32, message = "bqk,bkd->bqd"}> : () -> ()
    %cst_57 = arith.constant dense<0.000000e+00> : vector<2x8x64xf32>
    %115 = tpu.matmul %114, %99, %cst_57 {dimension_numbers = #tpu.dot_dimension_numbers<[2], [1], [1], [2], [0, 0, 0, 1, 1, 2], [0], [0]>} : vector<2x8x8xbf16>, vector<2x8x64xbf16>, vector<2x8x64xf32> -> vector<2x8x64xf32>
    "tpu.trace_stop"() : () -> ()
    %116 = vector.shape_cast %115 : vector<2x8x64xf32> to vector<16x64xf32>
    %117 = arith.truncf %116 : vector<16x64xf32> to vector<16x64xbf16>
    %118 = vector.extract_strided_slice %16 {offsets = [64, 0], sizes = [64, 128], strides = [1, 1]} : vector<128x128xbf16> to vector<64x128xbf16>
    %cst_58 = arith.constant dense<0.000000e+00> : vector<16x128xf32>
    %119 = tpu.matmul %117, %118, %cst_58 {dimension_numbers = #tpu.dot_dimension_numbers<[1], [0], [0], [1], [0, 0, 1, 1], [], []>} : vector<16x64xbf16>, vector<64x128xbf16>, vector<16x128xf32> -> vector<16x128xf32>
    %120 = arith.addf %91, %119 : vector<16x128xf32>
    %121 = arith.addf %34, %120 : vector<16x128xf32>
    %122 = vector.broadcast %18 : vector<1x128xf32> to vector<16x128xf32>
    %123 = arith.addf %121, %122 : vector<16x128xf32>
    %cst_59 = arith.constant dense<0.000000e+00> : vector<16xf32>
    %124 = vector.multi_reduction <add>, %123, %cst_59 [1] : vector<16x128xf32> to vector<16xf32>
    %125 = vector.shape_cast %124 : vector<16xf32> to vector<16x1xf32>
    %cst_60 = arith.constant 1.280000e+02 : f32
    %126 = vector.broadcast %cst_60 : f32 to vector<16x1xf32>
    %127 = arith.divf %125, %126 : vector<16x1xf32>
    %128 = vector.broadcast %127 : vector<16x1xf32> to vector<16x128xf32>
    %129 = arith.subf %123, %128 : vector<16x128xf32>
    %130 = arith.mulf %129, %129 : vector<16x128xf32>
    %cst_61 = arith.constant dense<0.000000e+00> : vector<16xf32>
    %131 = vector.multi_reduction <add>, %130, %cst_61 [1] : vector<16x128xf32> to vector<16xf32>
    %132 = vector.shape_cast %131 : vector<16xf32> to vector<16x1xf32>
    %cst_62 = arith.constant 1.280000e+02 : f32
    %133 = vector.broadcast %cst_62 : f32 to vector<16x1xf32>
    %134 = arith.divf %132, %133 : vector<16x1xf32>
    %135 = vector.broadcast %127 : vector<16x1xf32> to vector<16x128xf32>
    %136 = arith.subf %123, %135 : vector<16x128xf32>
    %cst_63 = arith.constant 9.99999974E-6 : f32
    %137 = vector.broadcast %cst_63 : f32 to vector<16x1xf32>
    %138 = arith.addf %134, %137 : vector<16x1xf32>
    %139 = math.rsqrt %138 : vector<16x1xf32>
    %140 = vector.broadcast %139 : vector<16x1xf32> to vector<16x128xf32>
    %141 = arith.mulf %136, %140 : vector<16x128xf32>
    %142 = vector.broadcast %8 : vector<1x128xf32> to vector<16x128xf32>
    %143 = arith.mulf %141, %142 : vector<16x128xf32>
    %144 = vector.broadcast %10 : vector<1x128xf32> to vector<16x128xf32>
    %145 = arith.addf %143, %144 : vector<16x128xf32>
    %146 = arith.truncf %145 : vector<16x128xf32> to vector<16x128xbf16>
    %cst_64 = arith.constant dense<0.000000e+00> : vector<16x512xf32>
    %147 = tpu.matmul %146, %20, %cst_64 {dimension_numbers = #tpu.dot_dimension_numbers<[1], [0], [0], [1], [0, 0, 1, 1], [], []>} : vector<16x128xbf16>, vector<128x512xbf16>, vector<16x512xf32> -> vector<16x512xf32>
    %148 = vector.broadcast %22 : vector<1x512xf32> to vector<16x512xf32>
    %149 = arith.addf %147, %148 : vector<16x512xf32>
    %cst_65 = arith.constant -1.702000e+00 : f32
    %150 = vector.broadcast %cst_65 : f32 to vector<16x512xf32>
    %151 = arith.mulf %150, %149 : vector<16x512xf32>
    %152 = math.exp %151 : vector<16x512xf32>
    %cst_66 = arith.constant 1.000000e+00 : f32
    %153 = vector.broadcast %cst_66 : f32 to vector<16x512xf32>
    %154 = arith.addf %153, %152 : vector<16x512xf32>
    %155 = tpu.reciprocal %154 {approx = true} : vector<16x512xf32> -> vector<16x512xf32>
    %156 = arith.mulf %149, %155 : vector<16x512xf32>
    %157 = arith.truncf %156 : vector<16x512xf32> to vector<16x512xbf16>
    %cst_67 = arith.constant dense<0.000000e+00> : vector<16x128xf32>
    %158 = tpu.matmul %157, %24, %cst_67 {dimension_numbers = #tpu.dot_dimension_numbers<[1], [0], [0], [1], [0, 0, 1, 1], [], []>} : vector<16x512xbf16>, vector<512x128xbf16>, vector<16x128xf32> -> vector<16x128xf32>
    %159 = vector.broadcast %26 : vector<1x128xf32> to vector<16x128xf32>
    %160 = arith.addf %158, %159 : vector<16x128xf32>
    %161 = arith.addf %123, %160 : vector<16x128xf32>
    %162 = vector.shape_cast %161 : vector<16x128xf32> to vector<2x8x128xf32>
    %c0_68 = arith.constant 0 : index
    %c0_69 = arith.constant 0 : index
    %c0_70 = arith.constant 0 : index
    %163 = vector.load %arg17[%c0_68, %c0_69, %c0_70] : memref<2x8x128xf32, #tpu.memory_space<vmem>>, vector<2x8x128xf32>
    tpu.vector_store %arg17[%c0_68, %c0_69, %c0_70], %162 {strides = array<i32>} : memref<2x8x128xf32, #tpu.memory_space<vmem>>, vector<2x8x128xf32>,
    %c1_i32 = arith.constant 1 : i32
    %164 = arith.cmpi eq, %arg0, %c1_i32 : i32
    %165 = arith.extui %164 : i1 to i32
    %c0_i32_71 = arith.constant 0 : i32
    %166 = arith.cmpi ne, %165, %c0_i32_71 : i32
    scf.if %166 {
      %c0_72 = arith.constant 0 : index
      %c0_73 = arith.constant 0 : index
      %c0_74 = arith.constant 0 : index
      %167 = vector.load %arg17[%c0_72, %c0_73, %c0_74] : memref<2x8x128xf32, #tpu.memory_space<vmem>>, vector<2x8x128xf32>
      %c0_75 = arith.constant 0 : index
      %c0_76 = arith.constant 0 : index
      %c0_77 = arith.constant 0 : index
      %168 = vector.load %arg16[%c0_75, %c0_76, %c0_77] : memref<2x8x128xf32, #tpu.memory_space<vmem>>, vector<2x8x128xf32>
      tpu.vector_store %arg16[%c0_75, %c0_76, %c0_77], %167 {strides = array<i32>} : memref<2x8x128xf32, #tpu.memory_space<vmem>>, vector<2x8x128xf32>,
    } else {
    }
    return
  }
  func.func @transform_0(%arg0: i32) -> (i32, i32, i32) {
    %c0_i32 = arith.constant 0 : i32
    %c0_i32_0 = arith.constant 0 : i32
    %c0_i32_1 = arith.constant 0 : i32
    %c0_i32_2 = arith.constant 0 : i32
    return %c0_i32, %c0_i32_0, %c0_i32_1 : i32, i32, i32
  }
  func.func @transform_1(%arg0: i32) -> (i32, i32) {
    %c0_i32 = arith.constant 0 : i32
    %c0_i32_0 = arith.constant 0 : i32
    %c0_i32_1 = arith.constant 0 : i32
    return %c0_i32, %c0_i32_0 : i32, i32
  }
  func.func @transform_2(%arg0: i32) -> (i32, i32) {
    %c0_i32 = arith.constant 0 : i32
    %c0_i32_0 = arith.constant 0 : i32
    %c0_i32_1 = arith.constant 0 : i32
    return %c0_i32, %c0_i32_0 : i32, i32
  }
  func.func @transform_3(%arg0: i32) -> (i32, i32, i32) {
    %c0_i32 = arith.constant 0 : i32
    %c0_i32_0 = arith.constant 0 : i32
    %c0_i32_1 = arith.constant 0 : i32
    return %arg0, %c0_i32, %c0_i32_0 : i32, i32, i32
  }
  func.func @transform_4(%arg0: i32) -> (i32, i32, i32) {
    %c0_i32 = arith.constant 0 : i32
    %c0_i32_0 = arith.constant 0 : i32
    %c0_i32_1 = arith.constant 0 : i32
    return %arg0, %c0_i32, %c0_i32_0 : i32, i32, i32
  }
  func.func @transform_5(%arg0: i32) -> (i32, i32, i32) {
    %c0_i32 = arith.constant 0 : i32
    %c0_i32_0 = arith.constant 0 : i32
    %c0_i32_1 = arith.constant 0 : i32
    return %arg0, %c0_i32, %c0_i32_0 : i32, i32, i32
  }
  func.func @transform_6(%arg0: i32) -> (i32, i32, i32) {
    %c0_i32 = arith.constant 0 : i32
    %c0_i32_0 = arith.constant 0 : i32
    %c0_i32_1 = arith.constant 0 : i32
    return %arg0, %c0_i32, %c0_i32_0 : i32, i32, i32
  }
  func.func @transform_7(%arg0: i32) -> (i32, i32, i32) {
    %c0_i32 = arith.constant 0 : i32
    %c0_i32_0 = arith.constant 0 : i32
    %c0_i32_1 = arith.constant 0 : i32
    return %arg0, %c0_i32, %c0_i32_0 : i32, i32, i32
  }
  func.func @transform_8(%arg0: i32) -> (i32, i32, i32) {
    %c0_i32 = arith.constant 0 : i32
    %c0_i32_0 = arith.constant 0 : i32
    %c0_i32_1 = arith.constant 0 : i32
    return %arg0, %c0_i32, %c0_i32_0 : i32, i32, i32
  }
  func.func @transform_9(%arg0: i32) -> (i32, i32, i32) {
    %c0_i32 = arith.constant 0 : i32
    %c0_i32_0 = arith.constant 0 : i32
    %c0_i32_1 = arith.constant 0 : i32
    return %arg0, %c0_i32, %c0_i32_0 : i32, i32, i32
  }
  func.func @transform_10(%arg0: i32) -> (i32, i32, i32) {
    %c0_i32 = arith.constant 0 : i32
    %c0_i32_0 = arith.constant 0 : i32
    %c0_i32_1 = arith.constant 0 : i32
    return %arg0, %c0_i32, %c0_i32_0 : i32, i32, i32
  }
  func.func @transform_11(%arg0: i32) -> (i32, i32, i32) {
    %c0_i32 = arith.constant 0 : i32
    %c0_i32_0 = arith.constant 0 : i32
    %c0_i32_1 = arith.constant 0 : i32
    return %arg0, %c0_i32, %c0_i32_0 : i32, i32, i32
  }
  func.func @transform_12(%arg0: i32) -> (i32, i32, i32) {
    %c0_i32 = arith.constant 0 : i32
    %c0_i32_0 = arith.constant 0 : i32
    %c0_i32_1 = arith.constant 0 : i32
    return %arg0, %c0_i32, %c0_i32_0 : i32, i32, i32
  }
  func.func @transform_13(%arg0: i32) -> (i32, i32, i32) {
    %c0_i32 = arith.constant 0 : i32
    %c0_i32_0 = arith.constant 0 : i32
    %c0_i32_1 = arith.constant 0 : i32
    return %arg0, %c0_i32, %c0_i32_0 : i32, i32, i32
  }
  func.func @transform_14(%arg0: i32) -> (i32, i32, i32) {
    %c0_i32 = arith.constant 0 : i32
    %c0_i32_0 = arith.constant 0 : i32
    %c0_i32_1 = arith.constant 0 : i32
    return %arg0, %c0_i32, %c0_i32_0 : i32, i32, i32
  }
  func.func @transform_15(%arg0: i32) -> (i32, i32, i32) {
    %c0_i32 = arith.constant 0 : i32
    %c0_i32_0 = arith.constant 0 : i32
    %c0_i32_1 = arith.constant 0 : i32
    %c0_i32_2 = arith.constant 0 : i32
    return %c0_i32, %c0_i32_0, %c0_i32_1 : i32, i32, i32
  }
}

module attributes {stable_mosaic.version = 11 : i64} {
  func.func @_ln_proj_kernel(%arg0: i32, %arg1: memref<2x128xf32, #tpu.memory_space<vmem>>, %arg2: memref<1x128xf32, #tpu.memory_space<vmem>>, %arg3: memref<1x128xf32, #tpu.memory_space<vmem>>, %arg4: memref<128x128xbf16, #tpu.memory_space<vmem>>, %arg5: memref<2x128xf32, #tpu.memory_space<vmem>>) attributes {dimension_semantics = [#tpu.dimension_semantics<arbitrary>], iteration_bounds = array<i64: 1>, scalar_prefetch = 0 : i64, scratch_operands = 0 : i64, tpu.core_type = #tpu.core_type<tc>, window_params = [{pipeline_mode = #tpu.pipeline_mode<synchronous>, transform_indices = @transform_0, window_bounds = array<i64: 2, 128>}, {pipeline_mode = #tpu.pipeline_mode<synchronous>, transform_indices = @transform_1, window_bounds = array<i64: 1, 128>}, {pipeline_mode = #tpu.pipeline_mode<synchronous>, transform_indices = @transform_2, window_bounds = array<i64: 1, 128>}, {pipeline_mode = #tpu.pipeline_mode<synchronous>, transform_indices = @transform_3, window_bounds = array<i64: 128, 128>}, {pipeline_mode = #tpu.pipeline_mode<synchronous>, transform_indices = @transform_4, window_bounds = array<i64: 2, 128>}]} {
    %c0 = arith.constant 0 : index
    %c0_0 = arith.constant 0 : index
    %0 = vector.load %arg1[%c0, %c0_0] : memref<2x128xf32, #tpu.memory_space<vmem>>, vector<2x128xf32>
    %cst = arith.constant dense<0.000000e+00> : vector<2xf32>
    %1 = vector.multi_reduction <add>, %0, %cst [1] : vector<2x128xf32> to vector<2xf32>
    %2 = vector.shape_cast %1 : vector<2xf32> to vector<2x1xf32>
    %cst_1 = arith.constant 1.280000e+02 : f32
    %3 = vector.broadcast %cst_1 : f32 to vector<2x1xf32>
    %4 = arith.divf %2, %3 : vector<2x1xf32>
    %5 = vector.broadcast %4 : vector<2x1xf32> to vector<2x128xf32>
    %6 = arith.subf %0, %5 : vector<2x128xf32>
    %7 = arith.mulf %6, %6 : vector<2x128xf32>
    %cst_2 = arith.constant dense<0.000000e+00> : vector<2xf32>
    %8 = vector.multi_reduction <add>, %7, %cst_2 [1] : vector<2x128xf32> to vector<2xf32>
    %9 = vector.shape_cast %8 : vector<2xf32> to vector<2x1xf32>
    %cst_3 = arith.constant 1.280000e+02 : f32
    %10 = vector.broadcast %cst_3 : f32 to vector<2x1xf32>
    %11 = arith.divf %9, %10 : vector<2x1xf32>
    %12 = vector.broadcast %4 : vector<2x1xf32> to vector<2x128xf32>
    %13 = arith.subf %0, %12 : vector<2x128xf32>
    %cst_4 = arith.constant 9.99999974E-6 : f32
    %14 = vector.broadcast %cst_4 : f32 to vector<2x1xf32>
    %15 = arith.addf %11, %14 : vector<2x1xf32>
    %16 = math.rsqrt %15 : vector<2x1xf32>
    %17 = vector.broadcast %16 : vector<2x1xf32> to vector<2x128xf32>
    %18 = arith.mulf %13, %17 : vector<2x128xf32>
    %c0_5 = arith.constant 0 : index
    %c0_6 = arith.constant 0 : index
    %19 = vector.load %arg2[%c0_5, %c0_6] : memref<1x128xf32, #tpu.memory_space<vmem>>, vector<1x128xf32>
    %20 = vector.broadcast %19 : vector<1x128xf32> to vector<2x128xf32>
    %21 = arith.mulf %18, %20 : vector<2x128xf32>
    %c0_7 = arith.constant 0 : index
    %c0_8 = arith.constant 0 : index
    %22 = vector.load %arg3[%c0_7, %c0_8] : memref<1x128xf32, #tpu.memory_space<vmem>>, vector<1x128xf32>
    %23 = vector.broadcast %22 : vector<1x128xf32> to vector<2x128xf32>
    %24 = arith.addf %21, %23 : vector<2x128xf32>
    %25 = arith.truncf %24 : vector<2x128xf32> to vector<2x128xbf16>
    %c0_9 = arith.constant 0 : index
    %c0_10 = arith.constant 0 : index
    %26 = vector.load %arg4[%c0_9, %c0_10] : memref<128x128xbf16, #tpu.memory_space<vmem>>, vector<128x128xbf16>
    %cst_11 = arith.constant dense<0.000000e+00> : vector<2x128xf32>
    %27 = tpu.matmul %25, %26, %cst_11 {dimension_numbers = #tpu.dot_dimension_numbers<[1], [0], [0], [1], [0, 0, 1, 1], [], []>} : vector<2x128xbf16>, vector<128x128xbf16>, vector<2x128xf32> -> vector<2x128xf32>
    %c0_12 = arith.constant 0 : index
    %c0_13 = arith.constant 0 : index
    %28 = vector.load %arg5[%c0_12, %c0_13] : memref<2x128xf32, #tpu.memory_space<vmem>>, vector<2x128xf32>
    tpu.vector_store %arg5[%c0_12, %c0_13], %27 {strides = array<i32>} : memref<2x128xf32, #tpu.memory_space<vmem>>, vector<2x128xf32>,
    return
  }
  func.func @transform_0(%arg0: i32) -> (i32, i32) {
    %c0_i32 = arith.constant 0 : i32
    %c0_i32_0 = arith.constant 0 : i32
    %c0_i32_1 = arith.constant 0 : i32
    return %c0_i32, %c0_i32_0 : i32, i32
  }
  func.func @transform_1(%arg0: i32) -> (i32, i32) {
    %c0_i32 = arith.constant 0 : i32
    %c0_i32_0 = arith.constant 0 : i32
    %c0_i32_1 = arith.constant 0 : i32
    return %c0_i32, %c0_i32_0 : i32, i32
  }
  func.func @transform_2(%arg0: i32) -> (i32, i32) {
    %c0_i32 = arith.constant 0 : i32
    %c0_i32_0 = arith.constant 0 : i32
    %c0_i32_1 = arith.constant 0 : i32
    return %c0_i32, %c0_i32_0 : i32, i32
  }
  func.func @transform_3(%arg0: i32) -> (i32, i32) {
    %c0_i32 = arith.constant 0 : i32
    %c0_i32_0 = arith.constant 0 : i32
    %c0_i32_1 = arith.constant 0 : i32
    return %c0_i32, %c0_i32_0 : i32, i32
  }
  func.func @transform_4(%arg0: i32) -> (i32, i32) {
    %c0_i32 = arith.constant 0 : i32
    %c0_i32_0 = arith.constant 0 : i32
    %c0_i32_1 = arith.constant 0 : i32
    return %c0_i32, %c0_i32_0 : i32, i32
  }
}

module attributes {stable_mosaic.version = 11 : i64} {
  func.func @_tower_kernel(%arg0: i32, %arg1: memref<2x8x128xf32, #tpu.memory_space<vmem>>, %arg2: memref<1x128xf32, #tpu.memory_space<vmem>>, %arg3: memref<1x128xf32, #tpu.memory_space<vmem>>, %arg4: memref<1x1x128xf32, #tpu.memory_space<vmem>>, %arg5: memref<1x1x128xf32, #tpu.memory_space<vmem>>, %arg6: memref<1x128x384xbf16, #tpu.memory_space<vmem>>, %arg7: memref<1x1x384xf32, #tpu.memory_space<vmem>>, %arg8: memref<1x128x128xbf16, #tpu.memory_space<vmem>>, %arg9: memref<1x1x128xf32, #tpu.memory_space<vmem>>, %arg10: memref<1x1x128xf32, #tpu.memory_space<vmem>>, %arg11: memref<1x1x128xf32, #tpu.memory_space<vmem>>, %arg12: memref<1x128x512xbf16, #tpu.memory_space<vmem>>, %arg13: memref<1x1x512xf32, #tpu.memory_space<vmem>>, %arg14: memref<1x512x128xbf16, #tpu.memory_space<vmem>>, %arg15: memref<1x1x128xf32, #tpu.memory_space<vmem>>, %arg16: memref<2x8x128xf32, #tpu.memory_space<vmem>>, %arg17: memref<2x8x128xf32, #tpu.memory_space<vmem>>) attributes {dimension_semantics = [#tpu.dimension_semantics<arbitrary>], iteration_bounds = array<i64: 2>, scalar_prefetch = 0 : i64, scratch_operands = 1 : i64, tpu.core_type = #tpu.core_type<tc>, window_params = [{pipeline_mode = #tpu.pipeline_mode<synchronous>, transform_indices = @transform_0, window_bounds = array<i64: 2, 8, 128>}, {pipeline_mode = #tpu.pipeline_mode<synchronous>, transform_indices = @transform_1, window_bounds = array<i64: 1, 128>}, {pipeline_mode = #tpu.pipeline_mode<synchronous>, transform_indices = @transform_2, window_bounds = array<i64: 1, 128>}, {transform_indices = @transform_3, window_bounds = array<i64: 1, 1, 128>}, {transform_indices = @transform_4, window_bounds = array<i64: 1, 1, 128>}, {transform_indices = @transform_5, window_bounds = array<i64: 1, 128, 384>}, {transform_indices = @transform_6, window_bounds = array<i64: 1, 1, 384>}, {transform_indices = @transform_7, window_bounds = array<i64: 1, 128, 128>}, {transform_indices = @transform_8, window_bounds = array<i64: 1, 1, 128>}, {transform_indices = @transform_9, window_bounds = array<i64: 1, 1, 128>}, {transform_indices = @transform_10, window_bounds = array<i64: 1, 1, 128>}, {transform_indices = @transform_11, window_bounds = array<i64: 1, 128, 512>}, {transform_indices = @transform_12, window_bounds = array<i64: 1, 1, 512>}, {transform_indices = @transform_13, window_bounds = array<i64: 1, 512, 128>}, {transform_indices = @transform_14, window_bounds = array<i64: 1, 1, 128>}, {pipeline_mode = #tpu.pipeline_mode<synchronous>, transform_indices = @transform_15, window_bounds = array<i64: 2, 8, 128>}]} {
    %c0_i32 = arith.constant 0 : i32
    %0 = arith.cmpi eq, %arg0, %c0_i32 : i32
    %1 = arith.extui %0 : i1 to i32
    %c0_i32_0 = arith.constant 0 : i32
    %2 = arith.cmpi ne, %1, %c0_i32_0 : i32
    scf.if %2 {
      %c0_72 = arith.constant 0 : index
      %c0_73 = arith.constant 0 : index
      %c0_74 = arith.constant 0 : index
      %167 = vector.load %arg1[%c0_72, %c0_73, %c0_74] : memref<2x8x128xf32, #tpu.memory_space<vmem>>, vector<2x8x128xf32>
      %c0_75 = arith.constant 0 : index
      %c0_76 = arith.constant 0 : index
      %c0_77 = arith.constant 0 : index
      %168 = vector.load %arg17[%c0_75, %c0_76, %c0_77] : memref<2x8x128xf32, #tpu.memory_space<vmem>>, vector<2x8x128xf32>
      tpu.vector_store %arg17[%c0_75, %c0_76, %c0_77], %167 {strides = array<i32>} : memref<2x8x128xf32, #tpu.memory_space<vmem>>, vector<2x8x128xf32>,
    } else {
    }
    %c0 = arith.constant 0 : index
    %c0_1 = arith.constant 0 : index
    %c0_2 = arith.constant 0 : index
    %3 = vector.load %arg4[%c0, %c0_1, %c0_2] : memref<1x1x128xf32, #tpu.memory_space<vmem>>, vector<1x1x128xf32>
    %4 = vector.shape_cast %3 : vector<1x1x128xf32> to vector<1x128xf32>
    %c0_3 = arith.constant 0 : index
    %c0_4 = arith.constant 0 : index
    %c0_5 = arith.constant 0 : index
    %5 = vector.load %arg5[%c0_3, %c0_4, %c0_5] : memref<1x1x128xf32, #tpu.memory_space<vmem>>, vector<1x1x128xf32>
    %6 = vector.shape_cast %5 : vector<1x1x128xf32> to vector<1x128xf32>
    %c0_6 = arith.constant 0 : index
    %c0_7 = arith.constant 0 : index
    %c0_8 = arith.constant 0 : index
    %7 = vector.load %arg10[%c0_6, %c0_7, %c0_8] : memref<1x1x128xf32, #tpu.memory_space<vmem>>, vector<1x1x128xf32>
    %8 = vector.shape_cast %7 : vector<1x1x128xf32> to vector<1x128xf32>
    %c0_9 = arith.constant 0 : index
    %c0_10 = arith.constant 0 : index
    %c0_11 = arith.constant 0 : index
    %9 = vector.load %arg11[%c0_9, %c0_10, %c0_11] : memref<1x1x128xf32, #tpu.memory_space<vmem>>, vector<1x1x128xf32>
    %10 = vector.shape_cast %9 : vector<1x1x128xf32> to vector<1x128xf32>
    %c0_12 = arith.constant 0 : index
    %c0_13 = arith.constant 0 : index
    %c0_14 = arith.constant 0 : index
    %11 = vector.load %arg6[%c0_12, %c0_13, %c0_14] : memref<1x128x384xbf16, #tpu.memory_space<vmem>>, vector<1x128x384xbf16>
    %12 = vector.shape_cast %11 : vector<1x128x384xbf16> to vector<128x384xbf16>
    %c0_15 = arith.constant 0 : index
    %c0_16 = arith.constant 0 : index
    %c0_17 = arith.constant 0 : index
    %13 = vector.load %arg7[%c0_15, %c0_16, %c0_17] : memref<1x1x384xf32, #tpu.memory_space<vmem>>, vector<1x1x384xf32>
    %14 = vector.shape_cast %13 : vector<1x1x384xf32> to vector<1x384xf32>
    %c0_18 = arith.constant 0 : index
    %c0_19 = arith.constant 0 : index
    %c0_20 = arith.constant 0 : index
    %15 = vector.load %arg8[%c0_18, %c0_19, %c0_20] : memref<1x128x128xbf16, #tpu.memory_space<vmem>>, vector<1x128x128xbf16>
    %16 = vector.shape_cast %15 : vector<1x128x128xbf16> to vector<128x128xbf16>
    %c0_21 = arith.constant 0 : index
    %c0_22 = arith.constant 0 : index
    %c0_23 = arith.constant 0 : index
    %17 = vector.load %arg9[%c0_21, %c0_22, %c0_23] : memref<1x1x128xf32, #tpu.memory_space<vmem>>, vector<1x1x128xf32>
    %18 = vector.shape_cast %17 : vector<1x1x128xf32> to vector<1x128xf32>
    %c0_24 = arith.constant 0 : index
    %c0_25 = arith.constant 0 : index
    %c0_26 = arith.constant 0 : index
    %19 = vector.load %arg12[%c0_24, %c0_25, %c0_26] : memref<1x128x512xbf16, #tpu.memory_space<vmem>>, vector<1x128x512xbf16>
    %20 = vector.shape_cast %19 : vector<1x128x512xbf16> to vector<128x512xbf16>
    %c0_27 = arith.constant 0 : index
    %c0_28 = arith.constant 0 : index
    %c0_29 = arith.constant 0 : index
    %21 = vector.load %arg13[%c0_27, %c0_28, %c0_29] : memref<1x1x512xf32, #tpu.memory_space<vmem>>, vector<1x1x512xf32>
    %22 = vector.shape_cast %21 : vector<1x1x512xf32> to vector<1x512xf32>
    %c0_30 = arith.constant 0 : index
    %c0_31 = arith.constant 0 : index
    %c0_32 = arith.constant 0 : index
    %23 = vector.load %arg14[%c0_30, %c0_31, %c0_32] : memref<1x512x128xbf16, #tpu.memory_space<vmem>>, vector<1x512x128xbf16>
    %24 = vector.shape_cast %23 : vector<1x512x128xbf16> to vector<512x128xbf16>
    %c0_33 = arith.constant 0 : index
    %c0_34 = arith.constant 0 : index
    %c0_35 = arith.constant 0 : index
    %25 = vector.load %arg15[%c0_33, %c0_34, %c0_35] : memref<1x1x128xf32, #tpu.memory_space<vmem>>, vector<1x1x128xf32>
    %26 = vector.shape_cast %25 : vector<1x1x128xf32> to vector<1x128xf32>
    %27 = tpu.iota {dimensions = array<i32: 1>} : vector<8x8xi32>
    %cst = arith.constant 0.000000e+00 : f32
    %28 = vector.broadcast %cst : f32 to vector<8x8xf32>
    %29 = tpu.iota {dimensions = array<i32: 0>} : vector<8x8xi32>
    %30 = arith.cmpi sle, %27, %29 : vector<8x8xi32>
    %cst_36 = arith.constant -1.000000e+09 : f32
    %31 = vector.broadcast %cst_36 : f32 to vector<8x8xf32>
    %32 = arith.select %30, %28, %31 : vector<8x8xi1>, vector<8x8xf32>
    %c0_37 = arith.constant 0 : index
    %c0_38 = arith.constant 0 : index
    %c0_39 = arith.constant 0 : index
    %33 = vector.load %arg17[%c0_37, %c0_38, %c0_39] : memref<2x8x128xf32, #tpu.memory_space<vmem>>, vector<2x8x128xf32>
    %34 = vector.shape_cast %33 : vector<2x8x128xf32> to vector<16x128xf32>
    %cst_40 = arith.constant dense<0.000000e+00> : vector<16xf32>
    %35 = vector.multi_reduction <add>, %34, %cst_40 [1] : vector<16x128xf32> to vector<16xf32>
    %36 = vector.shape_cast %35 : vector<16xf32> to vector<16x1xf32>
    %cst_41 = arith.constant 1.280000e+02 : f32
    %37 = vector.broadcast %cst_41 : f32 to vector<16x1xf32>
    %38 = arith.divf %36, %37 : vector<16x1xf32>
    %39 = vector.broadcast %38 : vector<16x1xf32> to vector<16x128xf32>
    %40 = arith.subf %34, %39 : vector<16x128xf32>
    %41 = arith.mulf %40, %40 : vector<16x128xf32>
    %cst_42 = arith.constant dense<0.000000e+00> : vector<16xf32>
    %42 = vector.multi_reduction <add>, %41, %cst_42 [1] : vector<16x128xf32> to vector<16xf32>
    %43 = vector.shape_cast %42 : vector<16xf32> to vector<16x1xf32>
    %cst_43 = arith.constant 1.280000e+02 : f32
    %44 = vector.broadcast %cst_43 : f32 to vector<16x1xf32>
    %45 = arith.divf %43, %44 : vector<16x1xf32>
    %46 = vector.broadcast %38 : vector<16x1xf32> to vector<16x128xf32>
    %47 = arith.subf %34, %46 : vector<16x128xf32>
    %cst_44 = arith.constant 9.99999974E-6 : f32
    %48 = vector.broadcast %cst_44 : f32 to vector<16x1xf32>
    %49 = arith.addf %45, %48 : vector<16x1xf32>
    %50 = math.rsqrt %49 : vector<16x1xf32>
    %51 = vector.broadcast %50 : vector<16x1xf32> to vector<16x128xf32>
    %52 = arith.mulf %47, %51 : vector<16x128xf32>
    %53 = vector.broadcast %4 : vector<1x128xf32> to vector<16x128xf32>
    %54 = arith.mulf %52, %53 : vector<16x128xf32>
    %55 = vector.broadcast %6 : vector<1x128xf32> to vector<16x128xf32>
    %56 = arith.addf %54, %55 : vector<16x128xf32>
    %57 = arith.truncf %56 : vector<16x128xf32> to vector<16x128xbf16>
    %cst_45 = arith.constant dense<0.000000e+00> : vector<16x384xf32>
    %58 = tpu.matmul %57, %12, %cst_45 {dimension_numbers = #tpu.dot_dimension_numbers<[1], [0], [0], [1], [0, 0, 1, 1], [], []>} : vector<16x128xbf16>, vector<128x384xbf16>, vector<16x384xf32> -> vector<16x384xf32>
    %59 = vector.broadcast %14 : vector<1x384xf32> to vector<16x384xf32>
    %60 = arith.addf %58, %59 : vector<16x384xf32>
    %61 = vector.shape_cast %60 : vector<16x384xf32> to vector<2x8x384xf32>
    %cst_46 = arith.constant 0.000000e+00 : f32
    %62 = vector.broadcast %cst_46 : f32 to vector<16x128xf32>
    %63 = vector.extract_strided_slice %61 {offsets = [0, 0, 0], sizes = [2, 8, 64], strides = [1, 1, 1]} : vector<2x8x384xf32> to vector<2x8x64xf32>
    %cst_47 = arith.constant 1.250000e-01 : f32
    %64 = vector.broadcast %cst_47 : f32 to vector<2x8x64xf32>
    %65 = arith.mulf %63, %64 : vector<2x8x64xf32>
    %66 = arith.truncf %65 : vector<2x8x64xf32> to vector<2x8x64xbf16>
    %67 = vector.extract_strided_slice %61 {offsets = [0, 0, 128], sizes = [2, 8, 64], strides = [1, 1, 1]} : vector<2x8x384xf32> to vector<2x8x64xf32>
    %68 = arith.truncf %67 : vector<2x8x64xf32> to vector<2x8x64xbf16>
    %69 = vector.extract_strided_slice %61 {offsets = [0, 0, 256], sizes = [2, 8, 64], strides = [1, 1, 1]} : vector<2x8x384xf32> to vector<2x8x64xf32>
    %70 = arith.truncf %69 : vector<2x8x64xf32> to vector<2x8x64xbf16>
    "tpu.trace_start"() <{level = 10 : i32, message = "bqd,bkd->bqk"}> : () -> ()
    %cst_48 = arith.constant dense<0.000000e+00> : vector<2x8x8xf32>
    %71 = tpu.matmul %66, %68, %cst_48 {dimension_numbers = #tpu.dot_dimension_numbers<[2], [2], [1], [1], [0, 0, 0, 1, 1, 1], [0], [0]>} : vector<2x8x64xbf16>, vector<2x8x64xbf16>, vector<2x8x8xf32> -> vector<2x8x8xf32>
    "tpu.trace_stop"() : () -> ()
    %72 = vector.shape_cast %32 : vector<8x8xf32> to vector<1x8x8xf32>
    %73 = vector.broadcast %72 : vector<1x8x8xf32> to vector<2x8x8xf32>
    %74 = arith.addf %71, %73 : vector<2x8x8xf32>
    %cst_49 = arith.constant dense<0xFF800000> : vector<2x8xf32>
    %75 = vector.multi_reduction <maximumf>, %74, %cst_49 [2] : vector<2x8x8xf32> to vector<2x8xf32>
    %76 = vector.shape_cast %75 : vector<2x8xf32> to vector<2x8x1xf32>
    %77 = vector.broadcast %76 : vector<2x8x1xf32> to vector<2x8x8xf32>
    %78 = arith.subf %74, %77 : vector<2x8x8xf32>
    %79 = math.exp %78 : vector<2x8x8xf32>
    %cst_50 = arith.constant dense<0.000000e+00> : vector<2x8xf32>
    %80 = vector.multi_reduction <add>, %79, %cst_50 [2] : vector<2x8x8xf32> to vector<2x8xf32>
    %81 = vector.shape_cast %80 : vector<2x8xf32> to vector<2x8x1xf32>
    %82 = tpu.reciprocal %81 {approx = true} : vector<2x8x1xf32> -> vector<2x8x1xf32>
    %83 = vector.broadcast %82 : vector<2x8x1xf32> to vector<2x8x8xf32>
    %84 = arith.mulf %79, %83 : vector<2x8x8xf32>
    %85 = arith.truncf %84 : vector<2x8x8xf32> to vector<2x8x8xbf16>
    "tpu.trace_start"() <{level = 10 : i32, message = "bqk,bkd->bqd"}> : () -> ()
    %cst_51 = arith.constant dense<0.000000e+00> : vector<2x8x64xf32>
    %86 = tpu.matmul %85, %70, %cst_51 {dimension_numbers = #tpu.dot_dimension_numbers<[2], [1], [1], [2], [0, 0, 0, 1, 1, 2], [0], [0]>} : vector<2x8x8xbf16>, vector<2x8x64xbf16>, vector<2x8x64xf32> -> vector<2x8x64xf32>
    "tpu.trace_stop"() : () -> ()
    %87 = vector.shape_cast %86 : vector<2x8x64xf32> to vector<16x64xf32>
    %88 = arith.truncf %87 : vector<16x64xf32> to vector<16x64xbf16>
    %89 = vector.extract_strided_slice %16 {offsets = [0, 0], sizes = [64, 128], strides = [1, 1]} : vector<128x128xbf16> to vector<64x128xbf16>
    %cst_52 = arith.constant dense<0.000000e+00> : vector<16x128xf32>
    %90 = tpu.matmul %88, %89, %cst_52 {dimension_numbers = #tpu.dot_dimension_numbers<[1], [0], [0], [1], [0, 0, 1, 1], [], []>} : vector<16x64xbf16>, vector<64x128xbf16>, vector<16x128xf32> -> vector<16x128xf32>
    %91 = arith.addf %62, %90 : vector<16x128xf32>
    %92 = vector.extract_strided_slice %61 {offsets = [0, 0, 64], sizes = [2, 8, 64], strides = [1, 1, 1]} : vector<2x8x384xf32> to vector<2x8x64xf32>
    %cst_53 = arith.constant 1.250000e-01 : f32
    %93 = vector.broadcast %cst_53 : f32 to vector<2x8x64xf32>
    %94 = arith.mulf %92, %93 : vector<2x8x64xf32>
    %95 = arith.truncf %94 : vector<2x8x64xf32> to vector<2x8x64xbf16>
    %96 = vector.extract_strided_slice %61 {offsets = [0, 0, 192], sizes = [2, 8, 64], strides = [1, 1, 1]} : vector<2x8x384xf32> to vector<2x8x64xf32>
    %97 = arith.truncf %96 : vector<2x8x64xf32> to vector<2x8x64xbf16>
    %98 = vector.extract_strided_slice %61 {offsets = [0, 0, 320], sizes = [2, 8, 64], strides = [1, 1, 1]} : vector<2x8x384xf32> to vector<2x8x64xf32>
    %99 = arith.truncf %98 : vector<2x8x64xf32> to vector<2x8x64xbf16>
    "tpu.trace_start"() <{level = 10 : i32, message = "bqd,bkd->bqk"}> : () -> ()
    %cst_54 = arith.constant dense<0.000000e+00> : vector<2x8x8xf32>
    %100 = tpu.matmul %95, %97, %cst_54 {dimension_numbers = #tpu.dot_dimension_numbers<[2], [2], [1], [1], [0, 0, 0, 1, 1, 1], [0], [0]>} : vector<2x8x64xbf16>, vector<2x8x64xbf16>, vector<2x8x8xf32> -> vector<2x8x8xf32>
    "tpu.trace_stop"() : () -> ()
    %101 = vector.shape_cast %32 : vector<8x8xf32> to vector<1x8x8xf32>
    %102 = vector.broadcast %101 : vector<1x8x8xf32> to vector<2x8x8xf32>
    %103 = arith.addf %100, %102 : vector<2x8x8xf32>
    %cst_55 = arith.constant dense<0xFF800000> : vector<2x8xf32>
    %104 = vector.multi_reduction <maximumf>, %103, %cst_55 [2] : vector<2x8x8xf32> to vector<2x8xf32>
    %105 = vector.shape_cast %104 : vector<2x8xf32> to vector<2x8x1xf32>
    %106 = vector.broadcast %105 : vector<2x8x1xf32> to vector<2x8x8xf32>
    %107 = arith.subf %103, %106 : vector<2x8x8xf32>
    %108 = math.exp %107 : vector<2x8x8xf32>
    %cst_56 = arith.constant dense<0.000000e+00> : vector<2x8xf32>
    %109 = vector.multi_reduction <add>, %108, %cst_56 [2] : vector<2x8x8xf32> to vector<2x8xf32>
    %110 = vector.shape_cast %109 : vector<2x8xf32> to vector<2x8x1xf32>
    %111 = tpu.reciprocal %110 {approx = true} : vector<2x8x1xf32> -> vector<2x8x1xf32>
    %112 = vector.broadcast %111 : vector<2x8x1xf32> to vector<2x8x8xf32>
    %113 = arith.mulf %108, %112 : vector<2x8x8xf32>
    %114 = arith.truncf %113 : vector<2x8x8xf32> to vector<2x8x8xbf16>
    "tpu.trace_start"() <{level = 10 : i32, message = "bqk,bkd->bqd"}> : () -> ()
    %cst_57 = arith.constant dense<0.000000e+00> : vector<2x8x64xf32>
    %115 = tpu.matmul %114, %99, %cst_57 {dimension_numbers = #tpu.dot_dimension_numbers<[2], [1], [1], [2], [0, 0, 0, 1, 1, 2], [0], [0]>} : vector<2x8x8xbf16>, vector<2x8x64xbf16>, vector<2x8x64xf32> -> vector<2x8x64xf32>
    "tpu.trace_stop"() : () -> ()
    %116 = vector.shape_cast %115 : vector<2x8x64xf32> to vector<16x64xf32>
    %117 = arith.truncf %116 : vector<16x64xf32> to vector<16x64xbf16>
    %118 = vector.extract_strided_slice %16 {offsets = [64, 0], sizes = [64, 128], strides = [1, 1]} : vector<128x128xbf16> to vector<64x128xbf16>
    %cst_58 = arith.constant dense<0.000000e+00> : vector<16x128xf32>
    %119 = tpu.matmul %117, %118, %cst_58 {dimension_numbers = #tpu.dot_dimension_numbers<[1], [0], [0], [1], [0, 0, 1, 1], [], []>} : vector<16x64xbf16>, vector<64x128xbf16>, vector<16x128xf32> -> vector<16x128xf32>
    %120 = arith.addf %91, %119 : vector<16x128xf32>
    %121 = arith.addf %34, %120 : vector<16x128xf32>
    %122 = vector.broadcast %18 : vector<1x128xf32> to vector<16x128xf32>
    %123 = arith.addf %121, %122 : vector<16x128xf32>
    %cst_59 = arith.constant dense<0.000000e+00> : vector<16xf32>
    %124 = vector.multi_reduction <add>, %123, %cst_59 [1] : vector<16x128xf32> to vector<16xf32>
    %125 = vector.shape_cast %124 : vector<16xf32> to vector<16x1xf32>
    %cst_60 = arith.constant 1.280000e+02 : f32
    %126 = vector.broadcast %cst_60 : f32 to vector<16x1xf32>
    %127 = arith.divf %125, %126 : vector<16x1xf32>
    %128 = vector.broadcast %127 : vector<16x1xf32> to vector<16x128xf32>
    %129 = arith.subf %123, %128 : vector<16x128xf32>
    %130 = arith.mulf %129, %129 : vector<16x128xf32>
    %cst_61 = arith.constant dense<0.000000e+00> : vector<16xf32>
    %131 = vector.multi_reduction <add>, %130, %cst_61 [1] : vector<16x128xf32> to vector<16xf32>
    %132 = vector.shape_cast %131 : vector<16xf32> to vector<16x1xf32>
    %cst_62 = arith.constant 1.280000e+02 : f32
    %133 = vector.broadcast %cst_62 : f32 to vector<16x1xf32>
    %134 = arith.divf %132, %133 : vector<16x1xf32>
    %135 = vector.broadcast %127 : vector<16x1xf32> to vector<16x128xf32>
    %136 = arith.subf %123, %135 : vector<16x128xf32>
    %cst_63 = arith.constant 9.99999974E-6 : f32
    %137 = vector.broadcast %cst_63 : f32 to vector<16x1xf32>
    %138 = arith.addf %134, %137 : vector<16x1xf32>
    %139 = math.rsqrt %138 : vector<16x1xf32>
    %140 = vector.broadcast %139 : vector<16x1xf32> to vector<16x128xf32>
    %141 = arith.mulf %136, %140 : vector<16x128xf32>
    %142 = vector.broadcast %8 : vector<1x128xf32> to vector<16x128xf32>
    %143 = arith.mulf %141, %142 : vector<16x128xf32>
    %144 = vector.broadcast %10 : vector<1x128xf32> to vector<16x128xf32>
    %145 = arith.addf %143, %144 : vector<16x128xf32>
    %146 = arith.truncf %145 : vector<16x128xf32> to vector<16x128xbf16>
    %cst_64 = arith.constant dense<0.000000e+00> : vector<16x512xf32>
    %147 = tpu.matmul %146, %20, %cst_64 {dimension_numbers = #tpu.dot_dimension_numbers<[1], [0], [0], [1], [0, 0, 1, 1], [], []>} : vector<16x128xbf16>, vector<128x512xbf16>, vector<16x512xf32> -> vector<16x512xf32>
    %148 = vector.broadcast %22 : vector<1x512xf32> to vector<16x512xf32>
    %149 = arith.addf %147, %148 : vector<16x512xf32>
    %cst_65 = arith.constant -1.702000e+00 : f32
    %150 = vector.broadcast %cst_65 : f32 to vector<16x512xf32>
    %151 = arith.mulf %150, %149 : vector<16x512xf32>
    %152 = math.exp %151 : vector<16x512xf32>
    %cst_66 = arith.constant 1.000000e+00 : f32
    %153 = vector.broadcast %cst_66 : f32 to vector<16x512xf32>
    %154 = arith.addf %153, %152 : vector<16x512xf32>
    %155 = tpu.reciprocal %154 {approx = true} : vector<16x512xf32> -> vector<16x512xf32>
    %156 = arith.mulf %149, %155 : vector<16x512xf32>
    %157 = arith.truncf %156 : vector<16x512xf32> to vector<16x512xbf16>
    %cst_67 = arith.constant dense<0.000000e+00> : vector<16x128xf32>
    %158 = tpu.matmul %157, %24, %cst_67 {dimension_numbers = #tpu.dot_dimension_numbers<[1], [0], [0], [1], [0, 0, 1, 1], [], []>} : vector<16x512xbf16>, vector<512x128xbf16>, vector<16x128xf32> -> vector<16x128xf32>
    %159 = vector.broadcast %26 : vector<1x128xf32> to vector<16x128xf32>
    %160 = arith.addf %158, %159 : vector<16x128xf32>
    %161 = arith.addf %123, %160 : vector<16x128xf32>
    %162 = vector.shape_cast %161 : vector<16x128xf32> to vector<2x8x128xf32>
    %c0_68 = arith.constant 0 : index
    %c0_69 = arith.constant 0 : index
    %c0_70 = arith.constant 0 : index
    %163 = vector.load %arg17[%c0_68, %c0_69, %c0_70] : memref<2x8x128xf32, #tpu.memory_space<vmem>>, vector<2x8x128xf32>
    tpu.vector_store %arg17[%c0_68, %c0_69, %c0_70], %162 {strides = array<i32>} : memref<2x8x128xf32, #tpu.memory_space<vmem>>, vector<2x8x128xf32>,
    %c1_i32 = arith.constant 1 : i32
    %164 = arith.cmpi eq, %arg0, %c1_i32 : i32
    %165 = arith.extui %164 : i1 to i32
    %c0_i32_71 = arith.constant 0 : i32
    %166 = arith.cmpi ne, %165, %c0_i32_71 : i32
    scf.if %166 {
      %c0_72 = arith.constant 0 : index
      %c0_73 = arith.constant 0 : index
      %c0_74 = arith.constant 0 : index
      %167 = vector.load %arg17[%c0_72, %c0_73, %c0_74] : memref<2x8x128xf32, #tpu.memory_space<vmem>>, vector<2x8x128xf32>
      %c0_75 = arith.constant 0 : index
      %c0_76 = arith.constant 0 : index
      %c0_77 = arith.constant 0 : index
      %168 = vector.load %arg16[%c0_75, %c0_76, %c0_77] : memref<2x8x128xf32, #tpu.memory_space<vmem>>, vector<2x8x128xf32>
      tpu.vector_store %arg16[%c0_75, %c0_76, %c0_77], %167 {strides = array<i32>} : memref<2x8x128xf32, #tpu.memory_space<vmem>>, vector<2x8x128xf32>,
    } else {
    }
    return
  }
  func.func @transform_0(%arg0: i32) -> (i32, i32, i32) {
    %c0_i32 = arith.constant 0 : i32
    %c0_i32_0 = arith.constant 0 : i32
    %c0_i32_1 = arith.constant 0 : i32
    %c0_i32_2 = arith.constant 0 : i32
    return %c0_i32, %c0_i32_0, %c0_i32_1 : i32, i32, i32
  }
  func.func @transform_1(%arg0: i32) -> (i32, i32) {
    %c0_i32 = arith.constant 0 : i32
    %c0_i32_0 = arith.constant 0 : i32
    %c0_i32_1 = arith.constant 0 : i32
    return %c0_i32, %c0_i32_0 : i32, i32
  }
  func.func @transform_2(%arg0: i32) -> (i32, i32) {
    %c0_i32 = arith.constant 0 : i32
    %c0_i32_0 = arith.constant 0 : i32
    %c0_i32_1 = arith.constant 0 : i32
    return %c0_i32, %c0_i32_0 : i32, i32
  }
  func.func @transform_3(%arg0: i32) -> (i32, i32, i32) {
    %c0_i32 = arith.constant 0 : i32
    %c0_i32_0 = arith.constant 0 : i32
    %c0_i32_1 = arith.constant 0 : i32
    return %arg0, %c0_i32, %c0_i32_0 : i32, i32, i32
  }
  func.func @transform_4(%arg0: i32) -> (i32, i32, i32) {
    %c0_i32 = arith.constant 0 : i32
    %c0_i32_0 = arith.constant 0 : i32
    %c0_i32_1 = arith.constant 0 : i32
    return %arg0, %c0_i32, %c0_i32_0 : i32, i32, i32
  }
  func.func @transform_5(%arg0: i32) -> (i32, i32, i32) {
    %c0_i32 = arith.constant 0 : i32
    %c0_i32_0 = arith.constant 0 : i32
    %c0_i32_1 = arith.constant 0 : i32
    return %arg0, %c0_i32, %c0_i32_0 : i32, i32, i32
  }
  func.func @transform_6(%arg0: i32) -> (i32, i32, i32) {
    %c0_i32 = arith.constant 0 : i32
    %c0_i32_0 = arith.constant 0 : i32
    %c0_i32_1 = arith.constant 0 : i32
    return %arg0, %c0_i32, %c0_i32_0 : i32, i32, i32
  }
  func.func @transform_7(%arg0: i32) -> (i32, i32, i32) {
    %c0_i32 = arith.constant 0 : i32
    %c0_i32_0 = arith.constant 0 : i32
    %c0_i32_1 = arith.constant 0 : i32
    return %arg0, %c0_i32, %c0_i32_0 : i32, i32, i32
  }
  func.func @transform_8(%arg0: i32) -> (i32, i32, i32) {
    %c0_i32 = arith.constant 0 : i32
    %c0_i32_0 = arith.constant 0 : i32
    %c0_i32_1 = arith.constant 0 : i32
    return %arg0, %c0_i32, %c0_i32_0 : i32, i32, i32
  }
  func.func @transform_9(%arg0: i32) -> (i32, i32, i32) {
    %c0_i32 = arith.constant 0 : i32
    %c0_i32_0 = arith.constant 0 : i32
    %c0_i32_1 = arith.constant 0 : i32
    return %arg0, %c0_i32, %c0_i32_0 : i32, i32, i32
  }
  func.func @transform_10(%arg0: i32) -> (i32, i32, i32) {
    %c0_i32 = arith.constant 0 : i32
    %c0_i32_0 = arith.constant 0 : i32
    %c0_i32_1 = arith.constant 0 : i32
    return %arg0, %c0_i32, %c0_i32_0 : i32, i32, i32
  }
  func.func @transform_11(%arg0: i32) -> (i32, i32, i32) {
    %c0_i32 = arith.constant 0 : i32
    %c0_i32_0 = arith.constant 0 : i32
    %c0_i32_1 = arith.constant 0 : i32
    return %arg0, %c0_i32, %c0_i32_0 : i32, i32, i32
  }
  func.func @transform_12(%arg0: i32) -> (i32, i32, i32) {
    %c0_i32 = arith.constant 0 : i32
    %c0_i32_0 = arith.constant 0 : i32
    %c0_i32_1 = arith.constant 0 : i32
    return %arg0, %c0_i32, %c0_i32_0 : i32, i32, i32
  }
  func.func @transform_13(%arg0: i32) -> (i32, i32, i32) {
    %c0_i32 = arith.constant 0 : i32
    %c0_i32_0 = arith.constant 0 : i32
    %c0_i32_1 = arith.constant 0 : i32
    return %arg0, %c0_i32, %c0_i32_0 : i32, i32, i32
  }
  func.func @transform_14(%arg0: i32) -> (i32, i32, i32) {
    %c0_i32 = arith.constant 0 : i32
    %c0_i32_0 = arith.constant 0 : i32
    %c0_i32_1 = arith.constant 0 : i32
    return %arg0, %c0_i32, %c0_i32_0 : i32, i32, i32
  }
  func.func @transform_15(%arg0: i32) -> (i32, i32, i32) {
    %c0_i32 = arith.constant 0 : i32
    %c0_i32_0 = arith.constant 0 : i32
    %c0_i32_1 = arith.constant 0 : i32
    %c0_i32_2 = arith.constant 0 : i32
    return %c0_i32, %c0_i32_0, %c0_i32_1 : i32, i32, i32
  }
}

</mosaic_0001>

<llo_original>
// kernel: clip_forward.7
$region0: #{clip_forward.7}
  #allocation0 [shape = 'u32[]', space=smem, size = 0x4, offset = 0x4, fixed_abs, tag = 'smem constant byte address 0x4 - core index']
  #allocation1 [shape = 'u32[144,128]{1,0:T(1,128)}', space=vmem, size = 0x12000, scoped, tag = 'internal scratch']
  %s0 = inlined_call_operand.vmem [shape: f32[2,128], index: 0, kind: input, shape index: {}]
  %s1 = inlined_call_operand.vmem [shape: f32[1,128], index: 1, kind: input, shape index: {}]
  %s2 = inlined_call_operand.vmem [shape: f32[1,128], index: 2, kind: input, shape index: {}]
  %s3 = inlined_call_operand.vmem [shape: bf16[128,128], index: 3, kind: input, shape index: {}]
  %s4 = inlined_call_operand.hbm [shape: f32[2,128], index: 4, kind: output, shape index: {}]
  %s5 = sld [smem:[#allocation0]]
  $region26: #{clip_forward.7} parent=0
    _
  %s7 = ssub.s32 1, %s5
  %s8 = scalar_select 0, %s7, %s5
  $region1: #{clip_forward.7} parent=0
    #allocation2 [shape = 'u8[1024]{0}', space=vmem, size = 0x400, scoped, tag = 'output window, operand 0, single buffered']
    #allocation3 [shape = 's32[1]{0}', space=sflag, size = 0x4, scoped, tag = 'scoped memory for clip_forward.7']
    %9 = vsyncpa [#allocation3], 0
    // Predicated region
    $region2: #{clip_forward.7} parent=1 // pred_check
      _
    $region3: #{clip_forward.7} parent=1 // pred_check_branch
      %11 = sbr.rel (0) target = $region5
    $region4: #{clip_forward.7} parent=1 // pred_region
      _
    $region5: #{clip_forward.7} parent=1 // pred_fallthru
      _
    // Predicated region
    $region6: #{clip_forward.7} parent=1 // pred_check
      _
    $region7: #{clip_forward.7} parent=1 // pred_check_branch
      %13 = sbr.rel (0) target = $region9
    $region8: #{clip_forward.7} parent=1 // pred_region
      _
    $region9: #{clip_forward.7} parent=1 // pred_fallthru
      _
    // Predicated region
    $region10: #{clip_forward.7} parent=1 // pred_check
      _
    $region11: #{clip_forward.7} parent=1 // pred_check_branch
      %15 = sbr.rel (0) target = $region13
    $region12: #{clip_forward.7} parent=1 // pred_region
      _
    $region13: #{clip_forward.7} parent=1 // pred_fallthru
      _
    // Predicated region
    $region14: #{clip_forward.7} parent=1 // pred_check
      _
    $region15: #{clip_forward.7} parent=1 // pred_check_branch
      %17 = sbr.rel (0) target = $region17
    $region16: #{clip_forward.7} parent=1 // pred_region
      _
    $region17: #{clip_forward.7} parent=1 // pred_fallthru
      _
    %v19 = vld [vmem:[%s0] sm:$0x3]
    %vm20 = vcmask 1041408
    %v21 = vsel %vm20, %v19, 0.0
    %22 = vadd.xlane.f32.xlu0 %v21
    %v23 = vpop.xlane.xlu0 %22
    %v24 = vrcp.pop 128.0
    %v25 = vmul.f32 %v23, %v24
    %v26 = vsub.f32 %v19, %v25
    %v27 = vmul.f32 %v26, %v26
    %v28 = vsel %vm20, %v27, 0.0
    %29 = vadd.xlane.f32.xlu0 %v28
    %v30 = vpop.xlane.xlu0 %29
    %v31 = vmul.f32 %v30, %v24
    %v32 = vadd.f32 %v31, 1e-05
    %v33 = vrsqrt.pop %v32
    %v34 = vmul.f32 %v26, %v33
    %v35 = vld [vmem:[%s1] sm:$0x1]
    %v37 = vlaneseq
    %v38 = vshrl.u32 %v37, 7
    %v39 = vsub.s32 0, %v38
    %v40 = vrot.slane %v35, %v39
    %v42 = vmul.f32 %v34, %v40
    %v43 = vld [vmem:[%s2] sm:$0x1]
    %v45 = vlaneseq
    %v46 = vshrl.u32 %v45, 7
    %v47 = vsub.s32 0, %v46
    %v48 = vrot.slane %v43, %v47
    %v50 = vadd.f32 %v42, %v48
    %v51 = vpack.c.bf16 %v50, %v50
    %v52 = vld [vmem:[%s3] sm:$0xf]
    %v53 = vld [vmem:[%s3 + $0x4] sm:$0xf]
    %v54 = vld [vmem:[%s3 + $0x8] sm:$0xf]
    %v55 = vld [vmem:[%s3 + $0xc] sm:$0xf]
    %v56 = vld [vmem:[%s3 + $0x10] sm:$0xf]
    %v57 = vld [vmem:[%s3 + $0x14] sm:$0xf]
    %v58 = vld [vmem:[%s3 + $0x18] sm:$0xf]
    %v59 = vld [vmem:[%s3 + $0x1c] sm:$0xf]
    %v60 = vld [vmem:[%s3 + $0x20] sm:$0xf]
    %v61 = vld [vmem:[%s3 + $0x24] sm:$0xf]
    %v62 = vld [vmem:[%s3 + $0x28] sm:$0xf]
    %v63 = vld [vmem:[%s3 + $0x2c] sm:$0xf]
    %v64 = vld [vmem:[%s3 + $0x30] sm:$0xf]
    %v65 = vld [vmem:[%s3 + $0x34] sm:$0xf]
    %v66 = vld [vmem:[%s3 + $0x38] sm:$0xf]
    %v67 = vld [vmem:[%s3 + $0x3c] sm:$0xf]
    %v84 = vunpack.c.l.b16 %v52
    %v85 = vunpack.c.l.b16 %v53
    %v86 = vunpack.c.l.b16 %v54
    %v87 = vunpack.c.l.b16 %v55
    %v88 = vunpack.c.l.b16 %v56
    %v89 = vunpack.c.l.b16 %v57
    %v90 = vunpack.c.l.b16 %v58
    %v91 = vunpack.c.l.b16 %v59
    %v92 = vunpack.c.l.b16 %v60
    %v93 = vunpack.c.l.b16 %v61
    %v94 = vunpack.c.l.b16 %v62
    %v95 = vunpack.c.l.b16 %v63
    %v96 = vunpack.c.l.b16 %v64
    %v97 = vunpack.c.l.b16 %v65
    %v98 = vunpack.c.l.b16 %v66
    %v99 = vunpack.c.l.b16 %v67
    %v100 = vpack.c.b16 %v85, %v84
    %v101 = vpack.c.b16 %v87, %v86
    %v102 = vpack.c.b16 %v89, %v88
    %v103 = vpack.c.b16 %v91, %v90
    %v104 = vpack.c.b16 %v93, %v92
    %v105 = vpack.c.b16 %v95, %v94
    %v106 = vpack.c.b16 %v97, %v96
    %v107 = vpack.c.b16 %v99, %v98
    %116 = vmatprep.subr.bf16.mxu0 0
    %117 = vmatpush1.bf16.msra.mxu0 %v107
    %118 = vmatprep.subr.bf16.mxu0 0
    %119 = vmatpush1.bf16.msra.mxu0 %v106
    %120 = vmatprep.subr.bf16.mxu0 0
    %121 = vmatpush1.bf16.msra.mxu0 %v105
    %122 = vmatprep.subr.bf16.mxu0 0
    %123 = vmatpush1.bf16.msra.mxu0 %v104
    %124 = vmatprep.subr.bf16.mxu0 0
    %125 = vmatpush1.bf16.msra.mxu0 %v103
    %126 = vmatprep.subr.bf16.mxu0 0
    %127 = vmatpush1.bf16.msra.mxu0 %v102
    %128 = vmatprep.subr.bf16.mxu0 0
    %129 = vmatpush1.bf16.msra.mxu0 %v101
    %130 = vmatprep.subr.bf16.mxu0 0
    %131 = vmatpush1.bf16.msra.mxu0 %v100
    %132 = vmatprep.subr.bf16.mxu0 0
    %133 = vmatpush2.bf16.msra.mxu0 0
    %134 = vmatprep.subr.bf16.mxu0 0
    %135 = vmatpush2.bf16.msra.mxu0 0
    %136 = vmatprep.subr.bf16.mxu0 0
    %137 = vmatpush2.bf16.msra.mxu0 0
    %138 = vmatprep.subr.bf16.mxu0 0
    %139 = vmatpush2.bf16.msra.mxu0 0
    %140 = vmatprep.subr.bf16.mxu0 0
    %141 = vmatpush2.bf16.msra.mxu0 0
    %142 = vmatprep.subr.bf16.mxu0 0
    %143 = vmatpush2.bf16.msra.mxu0 0
    %144 = vmatprep.subr.bf16.mxu0 0
    %145 = vmatpush2.bf16.msra.mxu0 0
    %146 = vmatprep.subr.bf16.mxu0 0
    %147 = vmatpush2.bf16.msra.mxu0 0
    %148 = vmatprep.mubr.bf16.mxu0 0
    %149 = vmatmul.mubr.bf16.gmra.mxu0 %v51
    %v150 = vpop.f32.mrf.mxu0
    %v151 = vadd.f32 0.0, %v150
    %v152 = vpop.f32.mrf.mxu0
    %v153 = vpop.f32.mrf.mxu0
    %v154 = vpop.f32.mrf.mxu0
    %155 = vdwg.mxu0
    %156 = vst [vmem:[#allocation2] sm:$0x3] %v151
    // Predicated region
    $region18: #{clip_forward.7} parent=1 // pred_check
      _
    $region19: #{clip_forward.7} parent=1 // pred_check_branch
      %158 = sbr.rel (0) target = $region21
    $region20: #{clip_forward.7} parent=1 // pred_region
      %s160 = ssub.s32 32, 32
      %161 = vsyncadd [#allocation3], %s160
      %s163 = sshll.u32 [#allocation2], 4
      %s164 = int_to_ptr.vmem [resolvable:$true] %s163
      %166 = dma.vmem_to_hbm [thread:$0]  %s164, 32, %s4, [#allocation3]
    $region21: #{clip_forward.7} parent=1 // pred_fallthru
      _
    // Predicated region
    $region22: #{clip_forward.7} parent=1 // pred_check
      _
    $region23: #{clip_forward.7} parent=1 // pred_check_branch
      %168 = sbr.rel (0) target = $region25
    $region24: #{clip_forward.7} parent=1 // pred_region
      %169 = dma.done [#allocation3], 32
    $region25: #{clip_forward.7} parent=1 // pred_fallthru
      _
    %170 = vsyncpa [#allocation3], 1

// kernel: clip_forward.5
$region0: #{clip_forward.5}
  #allocation0 [shape = 'u32[]', space=smem, size = 0x4, offset = 0x4, fixed_abs, tag = 'smem constant byte address 0x4 - core index']
  #allocation1 [shape = 'u32[144,128]{1,0:T(1,128)}', space=vmem, size = 0x12000, scoped, tag = 'internal scratch']
  #allocation2 [shape = 'f32[8,128]{1,0:T(8,128)}', space=vmem, size = 0x1000, scoped, tag = 'scratch operand']
  %s0 = inlined_call_operand.vmem [shape: bf16[8,256], index: 0, kind: input, shape index: {}]
  %s1 = inlined_call_operand.vmem [shape: bf16[256,128], index: 1, kind: input, shape index: {}]
  %s2 = inlined_call_operand.vmem [shape: f32[8,128], index: 2, kind: output, shape index: {}]
  %s3 = sld [smem:[#allocation0]]
  $region26: #{clip_forward.5} parent=0
    _
  %s5 = ssub.s32 1, %s3
  %s6 = scalar_select 0, %s5, %s3
  // Predicated region
  $region2: #{clip_forward.5} parent=0 // pred_check
    _
  $region3: #{clip_forward.5} parent=0 // pred_check_branch
    %8 = sbr.rel (0) target = $region5
  $region4: #{clip_forward.5} parent=0 // pred_region
    _
  $region5: #{clip_forward.5} parent=0 // pred_fallthru
    _
  // Predicated region
  $region6: #{clip_forward.5} parent=0 // pred_check
    _
  $region7: #{clip_forward.5} parent=0 // pred_check_branch
    %10 = sbr.rel (0) target = $region9
  $region8: #{clip_forward.5} parent=0 // pred_region
    _
  $region9: #{clip_forward.5} parent=0 // pred_fallthru
    _
  %p12 = scmp.eq.s32.totalorder 0, 0
  // Predicated region
  $region10: #{clip_forward.5} parent=0 // pred_check
    %p13 = pneg %p12
  $region11: #{clip_forward.5} parent=0 // pred_check_branch
    %15 = sbr.rel (%p13) target = $region13
  $region12: #{clip_forward.5} parent=0 // pred_region
    %16 = vst [vmem:[#allocation2] sm:$0xff] 0.0
  $region13: #{clip_forward.5} parent=0 // pred_fallthru
    _
  %v17 = vld [vmem:[#allocation2] sm:$0xff]
  %v18 = vld [vmem:[%s0] sm:$0xff]
  %v19 = vld [vmem:[%s1] sm:$0xf]
  %v20 = vld [vmem:[%s1 + $0x4] sm:$0xf]
  %v21 = vld [vmem:[%s1 + $0x8] sm:$0xf]
  %v22 = vld [vmem:[%s1 + $0xc] sm:$0xf]
  %v23 = vld [vmem:[%s1 + $0x10] sm:$0xf]
  %v24 = vld [vmem:[%s1 + $0x14] sm:$0xf]
  %v25 = vld [vmem:[%s1 + $0x18] sm:$0xf]
  %v26 = vld [vmem:[%s1 + $0x1c] sm:$0xf]
  %v27 = vld [vmem:[%s1 + $0x20] sm:$0xf]
  %v28 = vld [vmem:[%s1 + $0x24] sm:$0xf]
  %v29 = vld [vmem:[%s1 + $0x28] sm:$0xf]
  %v30 = vld [vmem:[%s1 + $0x2c] sm:$0xf]
  %v31 = vld [vmem:[%s1 + $0x30] sm:$0xf]
  %v32 = vld [vmem:[%s1 + $0x34] sm:$0xf]
  %v33 = vld [vmem:[%s1 + $0x38] sm:$0xf]
  %v34 = vld [vmem:[%s1 + $0x3c] sm:$0xf]
  %v35 = vld [vmem:[%s1 + $0x40] sm:$0xf]
  %v36 = vld [vmem:[%s1 + $0x44] sm:$0xf]
  %v37 = vld [vmem:[%s1 + $0x48] sm:$0xf]
  %v38 = vld [vmem:[%s1 + $0x4c] sm:$0xf]
  %v39 = vld [vmem:[%s1 + $0x50] sm:$0xf]
  %v40 = vld [vmem:[%s1 + $0x54] sm:$0xf]
  %v41 = vld [vmem:[%s1 + $0x58] sm:$0xf]
  %v42 = vld [vmem:[%s1 + $0x5c] sm:$0xf]
  %v43 = vld [vmem:[%s1 + $0x60] sm:$0xf]
  %v44 = vld [vmem:[%s1 + $0x64] sm:$0xf]
  %v45 = vld [vmem:[%s1 + $0x68] sm:$0xf]
  %v46 = vld [vmem:[%s1 + $0x6c] sm:$0xf]
  %v47 = vld [vmem:[%s1 + $0x70] sm:$0xf]
  %v48 = vld [vmem:[%s1 + $0x74] sm:$0xf]
  %v49 = vld [vmem:[%s1 + $0x78] sm:$0xf]
  %v50 = vld [vmem:[%s1 + $0x7c] sm:$0xf]
  %v52 = vunpack.c.l.b16 %v18
  %v53 = vunpack.c.h.b16 %v18
  %v54 = vpack.c.b16 %v52, %v52
  %v55 = vpack.c.b16 %v53, %v53
  %v90 = vunpack.c.l.b16 %v19
  %v91 = vunpack.c.l.b16 %v20
  %v92 = vunpack.c.l.b16 %v21
  %v93 = vunpack.c.l.b16 %v22
  %v94 = vunpack.c.l.b16 %v23
  %v95 = vunpack.c.l.b16 %v24
  %v96 = vunpack.c.l.b16 %v25
  %v97 = vunpack.c.l.b16 %v26
  %v98 = vunpack.c.l.b16 %v27
  %v99 = vunpack.c.l.b16 %v28
  %v100 = vunpack.c.l.b16 %v29
  %v101 = vunpack.c.l.b16 %v30
  %v102 = vunpack.c.l.b16 %v31
  %v103 = vunpack.c.l.b16 %v32
  %v104 = vunpack.c.l.b16 %v33
  %v105 = vunpack.c.l.b16 %v34
  %v106 = vunpack.c.l.b16 %v35
  %v107 = vunpack.c.l.b16 %v36
  %v108 = vunpack.c.l.b16 %v37
  %v109 = vunpack.c.l.b16 %v38
  %v110 = vunpack.c.l.b16 %v39
  %v111 = vunpack.c.l.b16 %v40
  %v112 = vunpack.c.l.b16 %v41
  %v113 = vunpack.c.l.b16 %v42
  %v114 = vunpack.c.l.b16 %v43
  %v115 = vunpack.c.l.b16 %v44
  %v116 = vunpack.c.l.b16 %v45
  %v117 = vunpack.c.l.b16 %v46
  %v118 = vunpack.c.l.b16 %v47
  %v119 = vunpack.c.l.b16 %v48
  %v120 = vunpack.c.l.b16 %v49
  %v121 = vunpack.c.l.b16 %v50
  %v122 = vpack.c.b16 %v91, %v90
  %v123 = vpack.c.b16 %v93, %v92
  %v124 = vpack.c.b16 %v95, %v94
  %v125 = vpack.c.b16 %v97, %v96
  %v126 = vpack.c.b16 %v99, %v98
  %v127 = vpack.c.b16 %v101, %v100
  %v128 = vpack.c.b16 %v103, %v102
  %v129 = vpack.c.b16 %v105, %v104
  %v130 = vpack.c.b16 %v107, %v106
  %v131 = vpack.c.b16 %v109, %v108
  %v132 = vpack.c.b16 %v111, %v110
  %v133 = vpack.c.b16 %v113, %v112
  %v134 = vpack.c.b16 %v115, %v114
  %v135 = vpack.c.b16 %v117, %v116
  %v136 = vpack.c.b16 %v119, %v118
  %v137 = vpack.c.b16 %v121, %v120
  %154 = vmatprep.subr.bf16.mxu0 0
  %155 = vmatpush1.bf16.msra.mxu0 %v129
  %156 = vmatprep.subr.bf16.mxu0 0
  %157 = vmatpush1.bf16.msra.mxu0 %v128
  %158 = vmatprep.subr.bf16.mxu0 0
  %159 = vmatpush1.bf16.msra.mxu0 %v127
  %160 = vmatprep.subr.bf16.mxu0 0
  %161 = vmatpush1.bf16.msra.mxu0 %v126
  %162 = vmatprep.subr.bf16.mxu0 0
  %163 = vmatpush1.bf16.msra.mxu0 %v125
  %164 = vmatprep.subr.bf16.mxu0 0
  %165 = vmatpush1.bf16.msra.mxu0 %v124
  %166 = vmatprep.subr.bf16.mxu0 0
  %167 = vmatpush1.bf16.msra.mxu0 %v123
  %168 = vmatprep.subr.bf16.mxu0 0
  %169 = vmatpush1.bf16.msra.mxu0 %v122
  %170 = vmatprep.subr.bf16.mxu0 0
  %171 = vmatpush2.bf16.msra.mxu0 %v137
  %172 = vmatprep.subr.bf16.mxu0 0
  %173 = vmatpush2.bf16.msra.mxu0 %v136
  %174 = vmatprep.subr.bf16.mxu0 0
  %175 = vmatpush2.bf16.msra.mxu0 %v135
  %176 = vmatprep.subr.bf16.mxu0 0
  %177 = vmatpush2.bf16.msra.mxu0 %v134
  %178 = vmatprep.subr.bf16.mxu0 0
  %179 = vmatpush2.bf16.msra.mxu0 %v133
  %180 = vmatprep.subr.bf16.mxu0 0
  %181 = vmatpush2.bf16.msra.mxu0 %v132
  %182 = vmatprep.subr.bf16.mxu0 0
  %183 = vmatpush2.bf16.msra.mxu0 %v131
  %184 = vmatprep.subr.bf16.mxu0 0
  %185 = vmatpush2.bf16.msra.mxu0 %v130
  %186 = vmatprep.mubr.bf16.mxu0 %v55
  %187 = vmatmul.mubr.bf16.gmra.mxu0 %v54
  %v188 = vpop.f32.mrf.mxu0
  %v189 = vadd.f32 0.0, %v188
  %v190 = vpop.f32.mrf.mxu0
  %v191 = vpop.f32.mrf.mxu0
  %v192 = vpop.f32.mrf.mxu0
  %193 = vdwg.mxu0
  %v194 = vadd.f32 %v17, %v189
  %195 = vst [vmem:[#allocation2] sm:$0xff] %v194
  // Predicated region
  $region14: #{clip_forward.5} parent=0 // pred_check
    %p196 = pneg %p12
  $region15: #{clip_forward.5} parent=0 // pred_check_branch
    %198 = sbr.rel (%p196) target = $region17
  $region16: #{clip_forward.5} parent=0 // pred_region
    %v199 = vld [vmem:[#allocation2] sm:$0xff]
    %200 = vst [vmem:[%s2] sm:$0xff] %v199
  $region17: #{clip_forward.5} parent=0 // pred_fallthru
    _
  // Predicated region
  $region18: #{clip_forward.5} parent=0 // pred_check
    _
  $region19: #{clip_forward.5} parent=0 // pred_check_branch
    %202 = sbr.rel (0) target = $region21
  $region20: #{clip_forward.5} parent=0 // pred_region
    _
  $region21: #{clip_forward.5} parent=0 // pred_fallthru
    _
  // Predicated region
  $region22: #{clip_forward.5} parent=0 // pred_check
    _
  $region23: #{clip_forward.5} parent=0 // pred_check_branch
    %204 = sbr.rel (0) target = $region25
  $region24: #{clip_forward.5} parent=0 // pred_region
    _
  $region25: #{clip_forward.5} parent=0 // pred_fallthru
    _

// kernel: clip_forward.6
$region0: #{clip_forward.6}
  #allocation0 [shape = 'u32[]', space=smem, size = 0x4, offset = 0x4, fixed_abs, tag = 'smem constant byte address 0x4 - core index']
  #allocation1 [shape = 'u32[144,128]{1,0:T(1,128)}', space=vmem, size = 0x12000, scoped, tag = 'internal scratch']
  #allocation2 [shape = 'f32[2,8,128]{2,1,0:T(8,128)}', space=vmem, size = 0x2000, scoped, tag = 'scratch operand']
  %s0 = inlined_call_operand.vmem [shape: f32[2,8,128], index: 0, kind: input, shape index: {}]
  %s1 = inlined_call_operand.vmem [shape: f32[1,128], index: 1, kind: input, shape index: {}]
  %s2 = inlined_call_operand.vmem [shape: f32[1,128], index: 2, kind: input, shape index: {}]
  %s3 = inlined_call_operand.vmem [shape: f32[2,1,128], index: 3, kind: input, shape index: {}]
  %s4 = inlined_call_operand.vmem [shape: f32[2,1,128], index: 4, kind: input, shape index: {}]
  %s5 = inlined_call_operand.hbm [shape: bf16[2,128,384], index: 5, kind: input, shape index: {}]
  %s6 = inlined_call_operand.vmem [shape: f32[2,1,384], index: 6, kind: input, shape index: {}]
  %s7 = inlined_call_operand.vmem [shape: bf16[2,128,128], index: 7, kind: input, shape index: {}]
  %s8 = inlined_call_operand.vmem [shape: f32[2,1,128], index: 8, kind: input, shape index: {}]
  %s9 = inlined_call_operand.vmem [shape: f32[2,1,128], index: 9, kind: input, shape index: {}]
  %s10 = inlined_call_operand.vmem [shape: f32[2,1,128], index: 10, kind: input, shape index: {}]
  %s11 = inlined_call_operand.vmem [shape: bf16[2,128,512], index: 11, kind: input, shape index: {}]
  %s12 = inlined_call_operand.vmem [shape: f32[2,1,512], index: 12, kind: input, shape index: {}]
  %s13 = inlined_call_operand.vmem [shape: bf16[2,512,128], index: 13, kind: input, shape index: {}]
  %s14 = inlined_call_operand.hbm [shape: f32[2,1,128], index: 14, kind: input, shape index: {}]
  %s15 = inlined_call_operand.vmem [shape: f32[2,8,128], index: 15, kind: output, shape index: {}]
  %s16 = sld [smem:[#allocation0]]
  $region109: #{clip_forward.6} parent=0
    _
  %s18 = ssub.s32 1, %s16
  %s19 = scalar_select 0, %s18, %s16
  $region1: #{clip_forward.6} parent=0
    #allocation3 [shape = 'u8[196608]{0}', space=vmem, size = 0x30000, scoped, tag = 'input window, operand 5']
    #allocation4 [shape = 's32[2]{0}', space=sflag, size = 0x8, scoped, tag = 'scoped memory for clip_forward.6']
    #allocation5 [shape = 'u8[1024]{0}', space=vmem, size = 0x400, scoped, tag = 'input window, operand 14']
    #allocation6 [shape = 's32[2]{0}', space=sflag, size = 0x8, scoped, tag = 'scoped memory for clip_forward.6']
    %20 = vsyncpa [#allocation4], 0
    %s21 = scalar_lea.sflag [#allocation4], 1
    %22 = vsyncpa %s21, 0
    %23 = vsyncpa [#allocation6], 0
    %s24 = scalar_lea.sflag [#allocation6], 1
    %25 = vsyncpa %s24, 0
    loop: start=0, step=1, limit=4
    $region2: #{clip_forward.6} parent=1 // loop_pre_header
      _
    $region3: #{clip_forward.6} parent=1 // loop_header
      %s27 = sphi 0, %s31
      %p28 = scmp.ge.s32.totalorder %s27, 4
      %s35 = sphi 0, %s35
      %s37 = sphi 0, %s35
      %s38 = sphi 0, %s37
      %s52 = sphi 0, %s38
      %s56 = sphi 0, %s56
      %s58 = sphi 0, %s56
      %s59 = sphi 0, %s58
      %s73 = sphi 0, %s59
      %s77 = sphi 0, %s77
      %s79 = sphi 0, %s77
      %s80 = sphi 0, %s79
      %s94 = sphi 0, %s80
      %s100 = sphi 0, %s102
      %s103 = sphi 0, %s100
      %s104 = sphi 0, %s103
      %s120 = sphi 0, %s104
      %s126 = sphi 0, %s128
      %s129 = sphi 0, %s126
      %s130 = sphi 0, %s129
      %s146 = sphi 0, %s130
      %s152 = sphi 0, %s154
      %s155 = sphi 0, %s152
      %s156 = sphi 0, %s155
      %s172 = sphi 0, %s156
      %s178 = sphi 0, %s180
      %s181 = sphi 0, %s178
      %s182 = sphi 0, %s181
      %s198 = sphi 0, %s182
      %s204 = sphi 0, %s206
      %s207 = sphi 0, %s204
      %s208 = sphi 0, %s207
      %s224 = sphi 0, %s208
      %s230 = sphi 0, %s232
      %s233 = sphi 0, %s230
      %s234 = sphi 0, %s233
      %s250 = sphi 0, %s234
      %s256 = sphi 0, %s258
      %s259 = sphi 0, %s256
      %s260 = sphi 0, %s259
      %s276 = sphi 0, %s260
      %s282 = sphi 0, %s284
      %s285 = sphi 0, %s282
      %s286 = sphi 0, %s285
      %s302 = sphi 0, %s286
      %s308 = sphi 0, %s310
      %s311 = sphi 0, %s308
      %s312 = sphi 0, %s311
      %s328 = sphi 0, %s312
      %s334 = sphi 0, %s336
      %s337 = sphi 0, %s334
      %s338 = sphi 0, %s337
      %s354 = sphi 0, %s338
      %s360 = sphi 0, %s362
      %s363 = sphi 0, %s360
      %s364 = sphi 0, %s363
      %s380 = sphi 0, %s364
      %s386 = sphi 0, %s388
      %s389 = sphi 0, %s386
      %s390 = sphi 0, %s389
      %s406 = sphi 0, %s390
      %s410 = sphi 0, %s410
      %s412 = sphi 0, %s410
      %s413 = sphi 0, %s412
      %s427 = sphi 0, %s413
    $region4: #{clip_forward.6} parent=1 // loop_header_branch
      %30 = sbr.rel (%p28) target = $region8
    $region5: #{clip_forward.6} parent=1 // loop_body
      %s32 = ssub.s32 %s27, 1
      %s33 = ssub.s32 %s27, 2
      %s34 = sadd.s32 %s27, 1
      %s36 = sadd.s32 %s35, 1
      %p39 = scmp.eq.s32.totalorder %s27, 1
      %p40 = scmp.ne.s32.totalorder %s35, %s37
      %p41 = scmp.eq.s32.totalorder %s27, 0
      %p42 = por %p40, %p41
      %p43 = scmp.ne.s32.totalorder %s35, %s37
      %p44 = scmp.eq.s32.totalorder %s32, 1
      %p45 = por %p43, %p44
      %p46 = scmp.ne.s32.totalorder %s37, %s38
      %p47 = scmp.eq.s32.totalorder %s32, 0
      %p48 = por %p46, %p47
      %p49 = scmp.ne.s32.totalorder %s37, %s38
      %p50 = scmp.eq.s32.totalorder %s33, 1
      %p51 = por %p49, %p50
      %p53 = scmp.ne.s32.totalorder %s38, %s52
      %p54 = scmp.eq.s32.totalorder %s33, 0
      %p55 = por %p53, %p54
      %s57 = sadd.s32 %s56, 1
      %p60 = scmp.eq.s32.totalorder %s27, 1
      %p61 = scmp.ne.s32.totalorder %s56, %s58
      %p62 = scmp.eq.s32.totalorder %s27, 0
      %p63 = por %p61, %p62
      %p64 = scmp.ne.s32.totalorder %s56, %s58
      %p65 = scmp.eq.s32.totalorder %s32, 1
      %p66 = por %p64, %p65
      %p67 = scmp.ne.s32.totalorder %s58, %s59
      %p68 = scmp.eq.s32.totalorder %s32, 0
      %p69 = por %p67, %p68
      %p70 = scmp.ne.s32.totalorder %s58, %s59
      %p71 = scmp.eq.s32.totalorder %s33, 1
      %p72 = por %p70, %p71
      %p74 = scmp.ne.s32.totalorder %s59, %s73
      %p75 = scmp.eq.s32.totalorder %s33, 0
      %p76 = por %p74, %p75
      %s78 = sadd.s32 %s77, 1
      %p81 = scmp.eq.s32.totalorder %s27, 1
      %p82 = scmp.ne.s32.totalorder %s77, %s79
      %p83 = scmp.eq.s32.totalorder %s27, 0
      %p84 = por %p82, %p83
      %p85 = scmp.ne.s32.totalorder %s77, %s79
      %p86 = scmp.eq.s32.totalorder %s32, 1
      %p87 = por %p85, %p86
      %p88 = scmp.ne.s32.totalorder %s79, %s80
      %p89 = scmp.eq.s32.totalorder %s32, 0
      %p90 = por %p88, %p89
      %p91 = scmp.ne.s32.totalorder %s79, %s80
      %p92 = scmp.eq.s32.totalorder %s33, 1
      %p93 = por %p91, %p92
      %p95 = scmp.ne.s32.totalorder %s80, %s94
      %p96 = scmp.eq.s32.totalorder %s33, 0
      %p97 = por %p95, %p96
      %s98 = ssub.s32 %s27, %s34
      %p99 = scmp.eq.s32.totalorder %s98, 0
      %s101 = sadd.s32 %s100, 1
      %s102 = scalar_select %p99, %s100, %s101
      %p105 = pneg %p99
      %p106 = scmp.eq.s32.totalorder %s27, 1
      %p107 = por %p105, %p106
      %p108 = scmp.ne.s32.totalorder %s100, %s103
      %p109 = scmp.eq.s32.totalorder %s27, 0
      %p110 = por %p108, %p109
      %p111 = scmp.ne.s32.totalorder %s100, %s103
      %p112 = scmp.eq.s32.totalorder %s32, 1
      %p113 = por %p111, %p112
      %p114 = scmp.ne.s32.totalorder %s103, %s104
      %p115 = scmp.eq.s32.totalorder %s32, 0
      %p116 = por %p114, %p115
      %p117 = scmp.ne.s32.totalorder %s103, %s104
      %p118 = scmp.eq.s32.totalorder %s33, 1
      %p119 = por %p117, %p118
      %p121 = scmp.ne.s32.totalorder %s104, %s120
      %p122 = scmp.eq.s32.totalorder %s33, 0
      %p123 = por %p121, %p122
      %s124 = ssub.s32 %s27, %s34
      %p125 = scmp.eq.s32.totalorder %s124, 0
      %s127 = sadd.s32 %s126, 1
      %s128 = scalar_select %p125, %s126, %s127
      %p131 = pneg %p125
      %p132 = scmp.eq.s32.totalorder %s27, 1
      %p133 = por %p131, %p132
      %p134 = scmp.ne.s32.totalorder %s126, %s129
      %p135 = scmp.eq.s32.totalorder %s27, 0
      %p136 = por %p134, %p135
      %p137 = scmp.ne.s32.totalorder %s126, %s129
      %p138 = scmp.eq.s32.totalorder %s32, 1
      %p139 = por %p137, %p138
      %p140 = scmp.ne.s32.totalorder %s129, %s130
      %p141 = scmp.eq.s32.totalorder %s32, 0
      %p142 = por %p140, %p141
      %p143 = scmp.ne.s32.totalorder %s129, %s130
      %p144 = scmp.eq.s32.totalorder %s33, 1
      %p145 = por %p143, %p144
      %p147 = scmp.ne.s32.totalorder %s130, %s146
      %p148 = scmp.eq.s32.totalorder %s33, 0
      %p149 = por %p147, %p148
      %s150 = ssub.s32 %s27, %s34
      %p151 = scmp.eq.s32.totalorder %s150, 0
      %s153 = sadd.s32 %s152, 1
      %s154 = scalar_select %p151, %s152, %s153
      %p157 = pneg %p151
      %p158 = scmp.eq.s32.totalorder %s27, 1
      %p159 = por %p157, %p158
      %p160 = scmp.ne.s32.totalorder %s152, %s155
      %p161 = scmp.eq.s32.totalorder %s27, 0
      %p162 = por %p160, %p161
      %p163 = scmp.ne.s32.totalorder %s152, %s155
      %p164 = scmp.eq.s32.totalorder %s32, 1
      %p165 = por %p163, %p164
      %p166 = scmp.ne.s32.totalorder %s155, %s156
      %p167 = scmp.eq.s32.totalorder %s32, 0
      %p168 = por %p166, %p167
      %p169 = scmp.ne.s32.totalorder %s155, %s156
      %p170 = scmp.eq.s32.totalorder %s33, 1
      %p171 = por %p169, %p170
      %p173 = scmp.ne.s32.totalorder %s156, %s172
      %p174 = scmp.eq.s32.totalorder %s33, 0
      %p175 = por %p173, %p174
      %s176 = ssub.s32 %s27, %s34
      %p177 = scmp.eq.s32.totalorder %s176, 0
      %s179 = sadd.s32 %s178, 1
      %s180 = scalar_select %p177, %s178, %s179
      %p183 = pneg %p177
      %p184 = scmp.eq.s32.totalorder %s27, 1
      %p185 = por %p183, %p184
      %p186 = scmp.ne.s32.totalorder %s178, %s181
      %p187 = scmp.eq.s32.totalorder %s27, 0
      %p188 = por %p186, %p187
      %p189 = scmp.ne.s32.totalorder %s178, %s181
      %p190 = scmp.eq.s32.totalorder %s32, 1
      %p191 = por %p189, %p190
      %p192 = scmp.ne.s32.totalorder %s181, %s182
      %p193 = scmp.eq.s32.totalorder %s32, 0
      %p194 = por %p192, %p193
      %p195 = scmp.ne.s32.totalorder %s181, %s182
      %p196 = scmp.eq.s32.totalorder %s33, 1
      %p197 = por %p195, %p196
      %p199 = scmp.ne.s32.totalorder %s182, %s198
      %p200 = scmp.eq.s32.totalorder %s33, 0
      %p201 = por %p199, %p200
      %s202 = ssub.s32 %s27, %s34
      %p203 = scmp.eq.s32.totalorder %s202, 0
      %s205 = sadd.s32 %s204, 1
      %s206 = scalar_select %p203, %s204, %s205
      %p209 = pneg %p203
      %p210 = scmp.eq.s32.totalorder %s27, 1
      %p211 = por %p209, %p210
      %p212 = scmp.ne.s32.totalorder %s204, %s207
      %p213 = scmp.eq.s32.totalorder %s27, 0
      %p214 = por %p212, %p213
      %p215 = scmp.ne.s32.totalorder %s204, %s207
      %p216 = scmp.eq.s32.totalorder %s32, 1
      %p217 = por %p215, %p216
      %p218 = scmp.ne.s32.totalorder %s207, %s208
      %p219 = scmp.eq.s32.totalorder %s32, 0
      %p220 = por %p218, %p219
      %p221 = scmp.ne.s32.totalorder %s207, %s208
      %p222 = scmp.eq.s32.totalorder %s33, 1
      %p223 = por %p221, %p222
      %p225 = scmp.ne.s32.totalorder %s208, %s224
      %p226 = scmp.eq.s32.totalorder %s33, 0
      %p227 = por %p225, %p226
      %s228 = ssub.s32 %s27, %s34
      %p229 = scmp.eq.s32.totalorder %s228, 0
      %s231 = sadd.s32 %s230, 1
      %s232 = scalar_select %p229, %s230, %s231
      %p235 = pneg %p229
      %p236 = scmp.eq.s32.totalorder %s27, 1
      %p237 = por %p235, %p236
      %p238 = scmp.ne.s32.totalorder %s230, %s233
      %p239 = scmp.eq.s32.totalorder %s27, 0
      %p240 = por %p238, %p239
      %p241 = scmp.ne.s32.totalorder %s230, %s233
      %p242 = scmp.eq.s32.totalorder %s32, 1
      %p243 = por %p241, %p242
      %p244 = scmp.ne.s32.totalorder %s233, %s234
      %p245 = scmp.eq.s32.totalorder %s32, 0
      %p246 = por %p244, %p245
      %p247 = scmp.ne.s32.totalorder %s233, %s234
      %p248 = scmp.eq.s32.totalorder %s33, 1
      %p249 = por %p247, %p248
      %p251 = scmp.ne.s32.totalorder %s234, %s250
      %p252 = scmp.eq.s32.totalorder %s33, 0
      %p253 = por %p251, %p252
      %s254 = ssub.s32 %s27, %s34
      %p255 = scmp.eq.s32.totalorder %s254, 0
      %s257 = sadd.s32 %s256, 1
      %s258 = scalar_select %p255, %s256, %s257
      %p261 = pneg %p255
      %p262 = scmp.eq.s32.totalorder %s27, 1
      %p263 = por %p261, %p262
      %p264 = scmp.ne.s32.totalorder %s256, %s259
      %p265 = scmp.eq.s32.totalorder %s27, 0
      %p266 = por %p264, %p265
      %p267 = scmp.ne.s32.totalorder %s256, %s259
      %p268 = scmp.eq.s32.totalorder %s32, 1
      %p269 = por %p267, %p268
      %p270 = scmp.ne.s32.totalorder %s259, %s260
      %p271 = scmp.eq.s32.totalorder %s32, 0
      %p272 = por %p270, %p271
      %p273 = scmp.ne.s32.totalorder %s259, %s260
      %p274 = scmp.eq.s32.totalorder %s33, 1
      %p275 = por %p273, %p274
      %p277 = scmp.ne.s32.totalorder %s260, %s276
      %p278 = scmp.eq.s32.totalorder %s33, 0
      %p279 = por %p277, %p278
      %s280 = ssub.s32 %s27, %s34
      %p281 = scmp.eq.s32.totalorder %s280, 0
      %s283 = sadd.s32 %s282, 1
      %s284 = scalar_select %p281, %s282, %s283
      %p287 = pneg %p281
      %p288 = scmp.eq.s32.totalorder %s27, 1
      %p289 = por %p287, %p288
      %p290 = scmp.ne.s32.totalorder %s282, %s285
      %p291 = scmp.eq.s32.totalorder %s27, 0
      %p292 = por %p290, %p291
      %p293 = scmp.ne.s32.totalorder %s282, %s285
      %p294 = scmp.eq.s32.totalorder %s32, 1
      %p295 = por %p293, %p294
      %p296 = scmp.ne.s32.totalorder %s285, %s286
      %p297 = scmp.eq.s32.totalorder %s32, 0
      %p298 = por %p296, %p297
      %p299 = scmp.ne.s32.totalorder %s285, %s286
      %p300 = scmp.eq.s32.totalorder %s33, 1
      %p301 = por %p299, %p300
      %p303 = scmp.ne.s32.totalorder %s286, %s302
      %p304 = scmp.eq.s32.totalorder %s33, 0
      %p305 = por %p303, %p304
      %s306 = ssub.s32 %s27, %s34
      %p307 = scmp.eq.s32.totalorder %s306, 0
      %s309 = sadd.s32 %s308, 1
      %s310 = scalar_select %p307, %s308, %s309
      %p313 = pneg %p307
      %p314 = scmp.eq.s32.totalorder %s27, 1
      %p315 = por %p313, %p314
      %p316 = scmp.ne.s32.totalorder %s308, %s311
      %p317 = scmp.eq.s32.totalorder %s27, 0
      %p318 = por %p316, %p317
      %p319 = scmp.ne.s32.totalorder %s308, %s311
      %p320 = scmp.eq.s32.totalorder %s32, 1
      %p321 = por %p319, %p320
      %p322 = scmp.ne.s32.totalorder %s311, %s312
      %p323 = scmp.eq.s32.totalorder %s32, 0
      %p324 = por %p322, %p323
      %p325 = scmp.ne.s32.totalorder %s311, %s312
      %p326 = scmp.eq.s32.totalorder %s33, 1
      %p327 = por %p325, %p326
      %p329 = scmp.ne.s32.totalorder %s312, %s328
      %p330 = scmp.eq.s32.totalorder %s33, 0
      %p331 = por %p329, %p330
      %s332 = ssub.s32 %s27, %s34
      %p333 = scmp.eq.s32.totalorder %s332, 0
      %s335 = sadd.s32 %s334, 1
      %s336 = scalar_select %p333, %s334, %s335
      %p339 = pneg %p333
      %p340 = scmp.eq.s32.totalorder %s27, 1
      %p341 = por %p339, %p340
      %p342 = scmp.ne.s32.totalorder %s334, %s337
      %p343 = scmp.eq.s32.totalorder %s27, 0
      %p344 = por %p342, %p343
      %p345 = scmp.ne.s32.totalorder %s334, %s337
      %p346 = scmp.eq.s32.totalorder %s32, 1
      %p347 = por %p345, %p346
      %p348 = scmp.ne.s32.totalorder %s337, %s338
      %p349 = scmp.eq.s32.totalorder %s32, 0
      %p350 = por %p348, %p349
      %p351 = scmp.ne.s32.totalorder %s337, %s338
      %p352 = scmp.eq.s32.totalorder %s33, 1
      %p353 = por %p351, %p352
      %p355 = scmp.ne.s32.totalorder %s338, %s354
      %p356 = scmp.eq.s32.totalorder %s33, 0
      %p357 = por %p355, %p356
      %s358 = ssub.s32 %s27, %s34
      %p359 = scmp.eq.s32.totalorder %s358, 0
      %s361 = sadd.s32 %s360, 1
      %s362 = scalar_select %p359, %s360, %s361
      %p365 = pneg %p359
      %p366 = scmp.eq.s32.totalorder %s27, 1
      %p367 = por %p365, %p366
      %p368 = scmp.ne.s32.totalorder %s360, %s363
      %p369 = scmp.eq.s32.totalorder %s27, 0
      %p370 = por %p368, %p369
      %p371 = scmp.ne.s32.totalorder %s360, %s363
      %p372 = scmp.eq.s32.totalorder %s32, 1
      %p373 = por %p371, %p372
      %p374 = scmp.ne.s32.totalorder %s363, %s364
      %p375 = scmp.eq.s32.totalorder %s32, 0
      %p376 = por %p374, %p375
      %p377 = scmp.ne.s32.totalorder %s363, %s364
      %p378 = scmp.eq.s32.totalorder %s33, 1
      %p379 = por %p377, %p378
      %p381 = scmp.ne.s32.totalorder %s364, %s380
      %p382 = scmp.eq.s32.totalorder %s33, 0
      %p383 = por %p381, %p382
      %s384 = ssub.s32 %s27, %s34
      %p385 = scmp.eq.s32.totalorder %s384, 0
      %s387 = sadd.s32 %s386, 1
      %s388 = scalar_select %p385, %s386, %s387
      %p391 = pneg %p385
      %p392 = scmp.eq.s32.totalorder %s27, 1
      %p393 = por %p391, %p392
      %p394 = scmp.ne.s32.totalorder %s386, %s389
      %p395 = scmp.eq.s32.totalorder %s27, 0
      %p396 = por %p394, %p395
      %p397 = scmp.ne.s32.totalorder %s386, %s389
      %p398 = scmp.eq.s32.totalorder %s32, 1
      %p399 = por %p397, %p398
      %p400 = scmp.ne.s32.totalorder %s389, %s390
      %p401 = scmp.eq.s32.totalorder %s32, 0
      %p402 = por %p400, %p401
      %p403 = scmp.ne.s32.totalorder %s389, %s390
      %p404 = scmp.eq.s32.totalorder %s33, 1
      %p405 = por %p403, %p404
      %p407 = scmp.ne.s32.totalorder %s390, %s406
      %p408 = scmp.eq.s32.totalorder %s33, 0
      %p409 = por %p407, %p408
      %s411 = sadd.s32 %s410, 1
      %p414 = scmp.eq.s32.totalorder %s27, 1
      %p415 = scmp.ne.s32.totalorder %s410, %s412
      %p416 = scmp.eq.s32.totalorder %s27, 0
      %p417 = por %p415, %p416
      %p418 = scmp.ne.s32.totalorder %s410, %s412
      %p419 = scmp.eq.s32.totalorder %s32, 1
      %p420 = por %p418, %p419
      %p421 = scmp.ne.s32.totalorder %s412, %s413
      %p422 = scmp.eq.s32.totalorder %s32, 0
      %p423 = por %p421, %p422
      %p424 = scmp.ne.s32.totalorder %s412, %s413
      %p425 = scmp.eq.s32.totalorder %s33, 1
      %p426 = por %p424, %p425
      %p428 = scmp.ne.s32.totalorder %s413, %s427
      %p429 = scmp.eq.s32.totalorder %s33, 0
      %p430 = por %p428, %p429
      %p431 = scmp.le.s32.totalorder 1, %s27
      %p432 = scmp.lt.s32.totalorder %s27, 3
      %p433 = pnand %p431, %p432
      %p434 = pneg %p433
      // Predicated region
      $region9: #{clip_forward.6} parent=5 // pred_check
        _
      $region10: #{clip_forward.6} parent=5 // pred_check_branch
        %436 = sbr.rel (%p433) target = $region12
      $region11: #{clip_forward.6} parent=5 // pred_region
        %s437 = ssub.s32 %s27, 1
        // Predicated region
        $region13: #{clip_forward.6} parent=11 // pred_check
          %p438 = pneg %p48
        $region14: #{clip_forward.6} parent=11 // pred_check_branch
          %440 = sbr.rel (%p438) target = $region16
        $region15: #{clip_forward.6} parent=11 // pred_region
          _
        $region16: #{clip_forward.6} parent=11 // pred_fallthru
          _
        // Predicated region
        $region17: #{clip_forward.6} parent=11 // pred_check
          %p441 = pneg %p69
        $region18: #{clip_forward.6} parent=11 // pred_check_branch
          %443 = sbr.rel (%p441) target = $region20
        $region19: #{clip_forward.6} parent=11 // pred_region
          _
        $region20: #{clip_forward.6} parent=11 // pred_fallthru
          _
        // Predicated region
        $region21: #{clip_forward.6} parent=11 // pred_check
          %p444 = pneg %p90
        $region22: #{clip_forward.6} parent=11 // pred_check_branch
          %446 = sbr.rel (%p444) target = $region24
        $region23: #{clip_forward.6} parent=11 // pred_region
          _
        $region24: #{clip_forward.6} parent=11 // pred_fallthru
          _
      $region12: #{clip_forward.6} parent=5 // pred_fallthru
        _
      %p447 = scmp.lt.s32.totalorder %s27, 2
      // Predicated region
      $region25: #{clip_forward.6} parent=5 // pred_check
        %p448 = pneg %p447
      $region26: #{clip_forward.6} parent=5 // pred_check_branch
        %450 = sbr.rel (%p448) target = $region28
      $region27: #{clip_forward.6} parent=5 // pred_region
        // Predicated region
        $region29: #{clip_forward.6} parent=27 // pred_check
          %p451 = pneg %p110
        $region30: #{clip_forward.6} parent=27 // pred_check_branch
          %453 = sbr.rel (%p451) target = $region32
        $region31: #{clip_forward.6} parent=27 // pred_region
          %p454 = scmp.lt.s32.totalorder %s27, 1
          %s455 = scalar_select %p454, %s27, 1
          %s456 = scalar_lea.vmem %s3, %s455
        $region32: #{clip_forward.6} parent=27 // pred_fallthru
          _
        // Predicated region
        $region33: #{clip_forward.6} parent=27 // pred_check
          %p457 = pneg %p136
        $region34: #{clip_forward.6} parent=27 // pred_check_branch
          %459 = sbr.rel (%p457) target = $region36
        $region35: #{clip_forward.6} parent=27 // pred_region
          %p460 = scmp.lt.s32.totalorder %s27, 1
          %s461 = scalar_select %p460, %s27, 1
          %s462 = scalar_lea.vmem %s4, %s461
        $region36: #{clip_forward.6} parent=27 // pred_fallthru
          _
        // Predicated region
        $region37: #{clip_forward.6} parent=27 // pred_check
          %p463 = pneg %p162
        $region38: #{clip_forward.6} parent=27 // pred_check_branch
          %465 = sbr.rel (%p463) target = $region40
        $region39: #{clip_forward.6} parent=27 // pred_region
          %s466 = sand.u32 %s152, 1
          %s467 = scalar_lea.sflag [#allocation4], %s466
          %s468 = sand.u32 %s152, 1
          %s469 = smul.addr %s468, 192
          %s470 = scalar_lea.vmem [#allocation3], %s469
          %s472 = ssub.s32 3072, 3072
          %473 = vsyncadd %s467, %s472
          %s474 = smul.addr %s27, 48
          %s475 = smul.addr %s474, 64
          %s476 = scalar_lea.hbm %s5, %s475
          %s477 = sshll.u32 %s470, 4
          %s478 = int_to_ptr.vmem [resolvable:$true] %s477
          %483 = dma.hbm_to_vmem [thread:$0]  %s476, 3072, %s478, %s467, 192, 192, 12
        $region40: #{clip_forward.6} parent=27 // pred_fallthru
          _
        // Predicated region
        $region41: #{clip_forward.6} parent=27 // pred_check
          %p484 = pneg %p188
        $region42: #{clip_forward.6} parent=27 // pred_check_branch
          %486 = sbr.rel (%p484) target = $region44
        $region43: #{clip_forward.6} parent=27 // pred_region
          %p487 = scmp.lt.s32.totalorder %s27, 1
          %s488 = scalar_select %p487, %s27, 1
          %s489 = smul.addr %s488, 3
          %s490 = scalar_lea.vmem %s6, %s489
        $region44: #{clip_forward.6} parent=27 // pred_fallthru
          _
        // Predicated region
        $region45: #{clip_forward.6} parent=27 // pred_check
          %p491 = pneg %p214
        $region46: #{clip_forward.6} parent=27 // pred_check_branch
          %493 = sbr.rel (%p491) target = $region48
        $region47: #{clip_forward.6} parent=27 // pred_region
          %p494 = scmp.lt.s32.totalorder %s27, 1
          %s495 = scalar_select %p494, %s27, 1
          %s496 = smul.addr %s495, 16
          %s497 = smul.addr %s496, 4
          %s498 = scalar_lea.vmem %s7, %s497
        $region48: #{clip_forward.6} parent=27 // pred_fallthru
          _
        // Predicated region
        $region49: #{clip_forward.6} parent=27 // pred_check
          %p499 = pneg %p240
        $region50: #{clip_forward.6} parent=27 // pred_check_branch
          %501 = sbr.rel (%p499) target = $region52
        $region51: #{clip_forward.6} parent=27 // pred_region
          %p502 = scmp.lt.s32.totalorder %s27, 1
          %s503 = scalar_select %p502, %s27, 1
          %s504 = scalar_lea.vmem %s8, %s503
        $region52: #{clip_forward.6} parent=27 // pred_fallthru
          _
        // Predicated region
        $region53: #{clip_forward.6} parent=27 // pred_check
          %p505 = pneg %p266
        $region54: #{clip_forward.6} parent=27 // pred_check_branch
          %507 = sbr.rel (%p505) target = $region56
        $region55: #{clip_forward.6} parent=27 // pred_region
          %p508 = scmp.lt.s32.totalorder %s27, 1
          %s509 = scalar_select %p508, %s27, 1
          %s510 = scalar_lea.vmem %s9, %s509
        $region56: #{clip_forward.6} parent=27 // pred_fallthru
          _
        // Predicated region
        $region57: #{clip_forward.6} parent=27 // pred_check
          %p511 = pneg %p292
        $region58: #{clip_forward.6} parent=27 // pred_check_branch
          %513 = sbr.rel (%p511) target = $region60
        $region59: #{clip_forward.6} parent=27 // pred_region
          %p514 = scmp.lt.s32.totalorder %s27, 1
          %s515 = scalar_select %p514, %s27, 1
          %s516 = scalar_lea.vmem %s10, %s515
        $region60: #{clip_forward.6} parent=27 // pred_fallthru
          _
        // Predicated region
        $region61: #{clip_forward.6} parent=27 // pred_check
          %p517 = pneg %p318
        $region62: #{clip_forward.6} parent=27 // pred_check_branch
          %519 = sbr.rel (%p517) target = $region64
        $region63: #{clip_forward.6} parent=27 // pred_region
          %p520 = scmp.lt.s32.totalorder %s27, 1
          %s521 = scalar_select %p520, %s27, 1
          %s522 = smul.addr %s521, 64
          %s523 = smul.addr %s522, 4
          %s524 = scalar_lea.vmem %s11, %s523
        $region64: #{clip_forward.6} parent=27 // pred_fallthru
          _
        // Predicated region
        $region65: #{clip_forward.6} parent=27 // pred_check
          %p525 = pneg %p344
        $region66: #{clip_forward.6} parent=27 // pred_check_branch
          %527 = sbr.rel (%p525) target = $region68
        $region67: #{clip_forward.6} parent=27 // pred_region
          %p528 = scmp.lt.s32.totalorder %s27, 1
          %s529 = scalar_select %p528, %s27, 1
          %s530 = smul.addr %s529, 4
          %s531 = scalar_lea.vmem %s12, %s530
        $region68: #{clip_forward.6} parent=27 // pred_fallthru
          _
        // Predicated region
        $region69: #{clip_forward.6} parent=27 // pred_check
          %p532 = pneg %p370
        $region70: #{clip_forward.6} parent=27 // pred_check_branch
          %534 = sbr.rel (%p532) target = $region72
        $region71: #{clip_forward.6} parent=27 // pred_region
          %p535 = scmp.lt.s32.totalorder %s27, 1
          %s536 = scalar_select %p535, %s27, 1
          %s537 = smul.addr %s536, 64
          %s538 = smul.addr %s537, 4
          %s539 = scalar_lea.vmem %s13, %s538
        $region72: #{clip_forward.6} parent=27 // pred_fallthru
          _
        // Predicated region
        $region73: #{clip_forward.6} parent=27 // pred_check
          %p540 = pneg %p396
        $region74: #{clip_forward.6} parent=27 // pred_check_branch
          %542 = sbr.rel (%p540) target = $region76
        $region75: #{clip_forward.6} parent=27 // pred_region
          %s543 = sand.u32 %s386, 1
          %s544 = scalar_lea.sflag [#allocation6], %s543
          %s545 = sand.u32 %s386, 1
          %s546 = scalar_lea.vmem [#allocation5], %s545
          %s548 = ssub.s32 16, 16
          %549 = vsyncadd %s544, %s548
          %s550 = smul.addr %s27, 16
          %s551 = scalar_lea.hbm %s14, %s550
          %s553 = sshll.u32 %s546, 4
          %s554 = int_to_ptr.vmem [resolvable:$true] %s553
          %556 = dma.hbm_to_vmem [thread:$0]  %s551, 16, %s554, %s544
        $region76: #{clip_forward.6} parent=27 // pred_fallthru
          _
      $region28: #{clip_forward.6} parent=5 // pred_fallthru
        _
      %p557 = scmp.le.s32.totalorder 1, %s27
      %p558 = scmp.lt.s32.totalorder %s27, 3
      %p559 = pnand %p557, %p558
      %p560 = pneg %p559
      // Predicated region
      $region77: #{clip_forward.6} parent=5 // pred_check
        _
      $region78: #{clip_forward.6} parent=5 // pred_check_branch
        %562 = sbr.rel (%p559) target = $region80
      $region79: #{clip_forward.6} parent=5 // pred_region
        %s563 = ssub.s32 %s27, 1
        %s564 = sand.u32 %s155, 1
        %s565 = scalar_lea.sflag [#allocation4], %s564
        %s566 = sand.u32 %s155, 1
        %s567 = smul.addr %s566, 192
        %s568 = scalar_lea.vmem [#allocation3], %s567
        // Predicated region
        $region81: #{clip_forward.6} parent=79 // pred_check
          %p569 = pneg %p168
        $region82: #{clip_forward.6} parent=79 // pred_check_branch
          %571 = sbr.rel (%p569) target = $region84
        $region83: #{clip_forward.6} parent=79 // pred_region
          %572 = dma.done %s565, 3072
        $region84: #{clip_forward.6} parent=79 // pred_fallthru
          _
        %s573 = sand.u32 %s389, 1
        %s574 = scalar_lea.sflag [#allocation6], %s573
        %s575 = sand.u32 %s389, 1
        %s576 = scalar_lea.vmem [#allocation5], %s575
        // Predicated region
        $region85: #{clip_forward.6} parent=79 // pred_check
          %p577 = pneg %p402
        $region86: #{clip_forward.6} parent=79 // pred_check_branch
          %579 = sbr.rel (%p577) target = $region88
        $region87: #{clip_forward.6} parent=79 // pred_region
          %580 = dma.done %s574, 16
        $region88: #{clip_forward.6} parent=79 // pred_fallthru
          _
        %p581 = pneg %p48
        %p582 = pneg %p45
        %p583 = pneg %p69
        %p584 = pneg %p66
        %p585 = pneg %p90
        %p586 = pneg %p87
        %p587 = scmp.lt.s32.totalorder %s32, 1
        %s588 = scalar_select %p587, %s32, 1
        %s589 = scalar_lea.vmem %s3, %s588
        %p590 = pneg %p116
        %p591 = pneg %p113
        %p592 = scmp.lt.s32.totalorder %s32, 1
        %s593 = scalar_select %p592, %s32, 1
        %s594 = scalar_lea.vmem %s4, %s593
        %p595 = pneg %p142
        %p596 = pneg %p139
        %s597 = sand.u32 %s155, 1
        %s598 = scalar_lea.sflag [#allocation4], %s597
        %s599 = sand.u32 %s155, 1
        %s600 = smul.addr %s599, 192
        %s601 = scalar_lea.vmem [#allocation3], %s600
        %p602 = pneg %p168
        %p603 = pneg %p165
        %p604 = scmp.lt.s32.totalorder %s32, 1
        %s605 = scalar_select %p604, %s32, 1
        %s606 = smul.addr %s605, 3
        %s607 = scalar_lea.vmem %s6, %s606
        %p608 = pneg %p194
        %p609 = pneg %p191
        %p610 = scmp.lt.s32.totalorder %s32, 1
        %s611 = scalar_select %p610, %s32, 1
        %s612 = smul.addr %s611, 16
        %s613 = smul.addr %s612, 4
        %s614 = scalar_lea.vmem %s7, %s613
        %p615 = pneg %p220
        %p616 = pneg %p217
        %p617 = scmp.lt.s32.totalorder %s32, 1
        %s618 = scalar_select %p617, %s32, 1
        %s619 = scalar_lea.vmem %s8, %s618
        %p620 = pneg %p246
        %p621 = pneg %p243
        %p622 = scmp.lt.s32.totalorder %s32, 1
        %s623 = scalar_select %p622, %s32, 1
        %s624 = scalar_lea.vmem %s9, %s623
        %p625 = pneg %p272
        %p626 = pneg %p269
        %p627 = scmp.lt.s32.totalorder %s32, 1
        %s628 = scalar_select %p627, %s32, 1
        %s629 = scalar_lea.vmem %s10, %s628
        %p630 = pneg %p298
        %p631 = pneg %p295
        %p632 = scmp.lt.s32.totalorder %s32, 1
        %s633 = scalar_select %p632, %s32, 1
        %s634 = smul.addr %s633, 64
        %s635 = smul.addr %s634, 4
        %s636 = scalar_lea.vmem %s11, %s635
        %p637 = pneg %p324
        %p638 = pneg %p321
        %p639 = scmp.lt.s32.totalorder %s32, 1
        %s640 = scalar_select %p639, %s32, 1
        %s641 = smul.addr %s640, 4
        %s642 = scalar_lea.vmem %s12, %s641
        %p643 = pneg %p350
        %p644 = pneg %p347
        %p645 = scmp.lt.s32.totalorder %s32, 1
        %s646 = scalar_select %p645, %s32, 1
        %s647 = smul.addr %s646, 64
        %s648 = smul.addr %s647, 4
        %s649 = scalar_lea.vmem %s13, %s648
        %p650 = pneg %p376
        %p651 = pneg %p373
        %s652 = sand.u32 %s389, 1
        %s653 = scalar_lea.sflag [#allocation6], %s652
        %s654 = sand.u32 %s389, 1
        %s655 = scalar_lea.vmem [#allocation5], %s654
        %p656 = pneg %p402
        %p657 = pneg %p399
        %p658 = pneg %p423
        %p659 = pneg %p420
        %p660 = scmp.lt.s32.totalorder %s32, 1
        %s661 = scalar_select %p660, %s32, 1
        %s662 = scalar_lea.vmem %s3, %s661
        %p663 = scmp.lt.s32.totalorder %s32, 1
        %s664 = scalar_select %p663, %s32, 1
        %s665 = scalar_lea.vmem %s4, %s664
        %p666 = scmp.lt.s32.totalorder %s32, 1
        %s667 = scalar_select %p666, %s32, 1
        %s668 = smul.addr %s667, 3
        %s669 = scalar_lea.vmem %s6, %s668
        %p670 = scmp.lt.s32.totalorder %s32, 1
        %s671 = scalar_select %p670, %s32, 1
        %s672 = smul.addr %s671, 16
        %s673 = smul.addr %s672, 4
        %s674 = scalar_lea.vmem %s7, %s673
        %p675 = scmp.lt.s32.totalorder %s32, 1
        %s676 = scalar_select %p675, %s32, 1
        %s677 = scalar_lea.vmem %s8, %s676
        %p678 = scmp.lt.s32.totalorder %s32, 1
        %s679 = scalar_select %p678, %s32, 1
        %s680 = scalar_lea.vmem %s9, %s679
        %p681 = scmp.lt.s32.totalorder %s32, 1
        %s682 = scalar_select %p681, %s32, 1
        %s683 = scalar_lea.vmem %s10, %s682
        %p684 = scmp.lt.s32.totalorder %s32, 1
        %s685 = scalar_select %p684, %s32, 1
        %s686 = smul.addr %s685, 64
        %s687 = smul.addr %s686, 4
        %s688 = scalar_lea.vmem %s11, %s687
        %p689 = scmp.lt.s32.totalorder %s32, 1
        %s690 = scalar_select %p689, %s32, 1
        %s691 = smul.addr %s690, 4
        %s692 = scalar_lea.vmem %s12, %s691
        %p693 = scmp.lt.s32.totalorder %s32, 1
        %s694 = scalar_select %p693, %s32, 1
        %s695 = smul.addr %s694, 64
        %s696 = smul.addr %s695, 4
        %s697 = scalar_lea.vmem %s13, %s696
        %p699 = scmp.eq.s32.totalorder %s32, 0
        // Predicated region
        $region89: #{clip_forward.6} parent=79 // pred_check
          %p700 = pneg %p699
        $region90: #{clip_forward.6} parent=79 // pred_check_branch
          %702 = sbr.rel (%p700) target = $region92
        $region91: #{clip_forward.6} parent=79 // pred_region
          %v703 = vld [vmem:[%s0] sm:$0xff]
          %v704 = vld [vmem:[%s0 + $0x8] sm:$0xff]
          %v705 = vld [vmem:[%s1] sm:$0x1]
          %v706 = vld [vmem:[%s2] sm:$0x1]
          %707 = vadd.xlane.f32.xlu0 %v703
          %v708 = vpop.xlane.xlu0 %707
          %709 = vadd.xlane.f32.xlu0 %v704
          %v710 = vpop.xlane.xlu0 %709
          %v711 = vrcp.pop 128.0
          %v712 = vmul.f32 %v708, %v711
          %v713 = vmul.f32 %v710, %v711
          %v714 = vsub.f32 %v703, %v712
          %v715 = vsub.f32 %v704, %v713
          %v716 = vmul.f32 %v714, %v714
          %v717 = vmul.f32 %v715, %v715
          %718 = vadd.xlane.f32.xlu0 %v716
          %v719 = vpop.xlane.xlu0 %718
          %720 = vadd.xlane.f32.xlu0 %v717
          %v721 = vpop.xlane.xlu0 %720
          %v722 = vmul.f32 %v719, %v711
          %v723 = vmul.f32 %v721, %v711
          %v724 = vadd.f32 %v722, 1e-05
          %v725 = vadd.f32 %v723, 1e-05
          %v726 = vrsqrt.pop %v724
          %v727 = vrsqrt.pop %v725
          %v728 = vmul.f32 %v714, %v726
          %v729 = vmul.f32 %v715, %v727
          %v731 = vlaneseq
          %v732 = vshrl.u32 %v731, 7
          %v733 = vsub.s32 0, %v732
          %v734 = vrot.slane %v705, %v733
          %v736 = vmul.f32 %v728, %v734
          %v737 = vmul.f32 %v729, %v734
          %v739 = vlaneseq
          %v740 = vshrl.u32 %v739, 7
          %v741 = vsub.s32 0, %v740
          %v742 = vrot.slane %v706, %v741
          %v744 = vadd.f32 %v736, %v742
          %v745 = vadd.f32 %v737, %v742
          %746 = vst [vmem:[#allocation2] sm:$0xff] %v744
          %747 = vst [vmem:[#allocation2 + $0x8] sm:$0xff] %v745
        $region92: #{clip_forward.6} parent=79 // pred_fallthru
          _
        %v748 = vld [vmem:[%s662] sm:$0x1]
        %v749 = vld [vmem:[%s665] sm:$0x1]
        %v750 = vld [vmem:[%s680] sm:$0x1]
        %v751 = vld [vmem:[%s683] sm:$0x1]
        %v752 = vld [vmem:[%s568] sm:$0xff]
        %v753 = vld [vmem:[%s568 + $0x8] sm:$0xf]
        %v754 = vld [vmem:[%s568 + $0xc] sm:$0xff]
        %v755 = vld [vmem:[%s568 + $0x14] sm:$0xf]
        %v756 = vld [vmem:[%s568 + $0x18] sm:$0xff]
        %v757 = vld [vmem:[%s568 + $0x20] sm:$0xf]
        %v758 = vld [vmem:[%s568 + $0x24] sm:$0xff]
        %v759 = vld [vmem:[%s568 + $0x2c] sm:$0xf]
        %v760 = vld [vmem:[%s568 + $0x30] sm:$0xff]
        %v761 = vld [vmem:[%s568 + $0x38] sm:$0xf]
        %v762 = vld [vmem:[%s568 + $0x3c] sm:$0xff]
        %v763 = vld [vmem:[%s568 + $0x44] sm:$0xf]
        %v764 = vld [vmem:[%s568 + $0x48] sm:$0xff]
        %v765 = vld [vmem:[%s568 + $0x50] sm:$0xf]
        %v766 = vld [vmem:[%s568 + $0x54] sm:$0xff]
        %v767 = vld [vmem:[%s568 + $0x5c] sm:$0xf]
        %v768 = vld [vmem:[%s568 + $0x60] sm:$0xff]
        %v769 = vld [vmem:[%s568 + $0x68] sm:$0xf]
        %v770 = vld [vmem:[%s568 + $0x6c] sm:$0xff]
        %v771 = vld [vmem:[%s568 + $0x74] sm:$0xf]
        %v772 = vld [vmem:[%s568 + $0x78] sm:$0xff]
        %v773 = vld [vmem:[%s568 + $0x80] sm:$0xf]
        %v774 = vld [vmem:[%s568 + $0x84] sm:$0xff]
        %v775 = vld [vmem:[%s568 + $0x8c] sm:$0xf]
        %v776 = vld [vmem:[%s568 + $0x90] sm:$0xff]
        %v777 = vld [vmem:[%s568 + $0x98] sm:$0xf]
        %v778 = vld [vmem:[%s568 + $0x9c] sm:$0xff]
        %v779 = vld [vmem:[%s568 + $0xa4] sm:$0xf]
        %v780 = vld [vmem:[%s568 + $0xa8] sm:$0xff]
        %v781 = vld [vmem:[%s568 + $0xb0] sm:$0xf]
        %v782 = vld [vmem:[%s568 + $0xb4] sm:$0xff]
        %v783 = vld [vmem:[%s568 + $0xbc] sm:$0xf]
        %v784 = vld [vmem:[%s669] sm:$0x7]
        %v785 = vld [vmem:[%s674] sm:$0xf]
        %v786 = vld [vmem:[%s674 + $0x4] sm:$0xf]
        %v787 = vld [vmem:[%s674 + $0x8] sm:$0xf]
        %v788 = vld [vmem:[%s674 + $0xc] sm:$0xf]
        %v789 = vld [vmem:[%s674 + $0x10] sm:$0xf]
        %v790 = vld [vmem:[%s674 + $0x14] sm:$0xf]
        %v791 = vld [vmem:[%s674 + $0x18] sm:$0xf]
        %v792 = vld [vmem:[%s674 + $0x1c] sm:$0xf]
        %v793 = vld [vmem:[%s674 + $0x20] sm:$0xf]
        %v794 = vld [vmem:[%s674 + $0x24] sm:$0xf]
        %v795 = vld [vmem:[%s674 + $0x28] sm:$0xf]
        %v796 = vld [vmem:[%s674 + $0x2c] sm:$0xf]
        %v797 = vld [vmem:[%s674 + $0x30] sm:$0xf]
        %v798 = vld [vmem:[%s674 + $0x34] sm:$0xf]
        %v799 = vld [vmem:[%s674 + $0x38] sm:$0xf]
        %v800 = vld [vmem:[%s674 + $0x3c] sm:$0xf]
        %v801 = vld [vmem:[%s677] sm:$0x1]
        %v802 = vld [vmem:[%s688] sm:$0xff]
        %v803 = vld [vmem:[%s688 + $0x8] sm:$0xff]
        %v804 = vld [vmem:[%s688 + $0x10] sm:$0xff]
        %v805 = vld [vmem:[%s688 + $0x18] sm:$0xff]
        %v806 = vld [vmem:[%s688 + $0x20] sm:$0xff]
        %v807 = vld [vmem:[%s688 + $0x28] sm:$0xff]
        %v808 = vld [vmem:[%s688 + $0x30] sm:$0xff]
        %v809 = vld [vmem:[%s688 + $0x38] sm:$0xff]
        %v810 = vld [vmem:[%s688 + $0x40] sm:$0xff]
        %v811 = vld [vmem:[%s688 + $0x48] sm:$0xff]
        %v812 = vld [vmem:[%s688 + $0x50] sm:$0xff]
        %v813 = vld [vmem:[%s688 + $0x58] sm:$0xff]
        %v814 = vld [vmem:[%s688 + $0x60] sm:$0xff]
        %v815 = vld [vmem:[%s688 + $0x68] sm:$0xff]
        %v816 = vld [vmem:[%s688 + $0x70] sm:$0xff]
        %v817 = vld [vmem:[%s688 + $0x78] sm:$0xff]
        %v818 = vld [vmem:[%s688 + $0x80] sm:$0xff]
        %v819 = vld [vmem:[%s688 + $0x88] sm:$0xff]
        %v820 = vld [vmem:[%s688 + $0x90] sm:$0xff]
        %v821 = vld [vmem:[%s688 + $0x98] sm:$0xff]
        %v822 = vld [vmem:[%s688 + $0xa0] sm:$0xff]
        %v823 = vld [vmem:[%s688 + $0xa8] sm:$0xff]
        %v824 = vld [vmem:[%s688 + $0xb0] sm:$0xff]
        %v825 = vld [vmem:[%s688 + $0xb8] sm:$0xff]
        %v826 = vld [vmem:[%s688 + $0xc0] sm:$0xff]
        %v827 = vld [vmem:[%s688 + $0xc8] sm:$0xff]
        %v828 = vld [vmem:[%s688 + $0xd0] sm:$0xff]
        %v829 = vld [vmem:[%s688 + $0xd8] sm:$0xff]
        %v830 = vld [vmem:[%s688 + $0xe0] sm:$0xff]
        %v831 = vld [vmem:[%s688 + $0xe8] sm:$0xff]
        %v832 = vld [vmem:[%s688 + $0xf0] sm:$0xff]
        %v833 = vld [vmem:[%s688 + $0xf8] sm:$0xff]
        %v834 = vld [vmem:[%s692] sm:$0xf]
        %v835 = vld [vmem:[%s697] sm:$0xf]
        %v836 = vld [vmem:[%s697 + $0x4] sm:$0xf]
        %v837 = vld [vmem:[%s697 + $0x8] sm:$0xf]
        %v838 = vld [vmem:[%s697 + $0xc] sm:$0xf]
        %v839 = vld [vmem:[%s697 + $0x10] sm:$0xf]
        %v840 = vld [vmem:[%s697 + $0x14] sm:$0xf]
        %v841 = vld [vmem:[%s697 + $0x18] sm:$0xf]
        %v842 = vld [vmem:[%s697 + $0x1c] sm:$0xf]
        %v843 = vld [vmem:[%s697 + $0x20] sm:$0xf]
        %v844 = vld [vmem:[%s697 + $0x24] sm:$0xf]
        %v845 = vld [vmem:[%s697 + $0x28] sm:$0xf]
        %v846 = vld [vmem:[%s697 + $0x2c] sm:$0xf]
        %v847 = vld [vmem:[%s697 + $0x30] sm:$0xf]
        %v848 = vld [vmem:[%s697 + $0x34] sm:$0xf]
        %v849 = vld [vmem:[%s697 + $0x38] sm:$0xf]
        %v850 = vld [vmem:[%s697 + $0x3c] sm:$0xf]
        %v851 = vld [vmem:[%s697 + $0x40] sm:$0xf]
        %v852 = vld [vmem:[%s697 + $0x44] sm:$0xf]
        %v853 = vld [vmem:[%s697 + $0x48] sm:$0xf]
        %v854 = vld [vmem:[%s697 + $0x4c] sm:$0xf]
        %v855 = vld [vmem:[%s697 + $0x50] sm:$0xf]
        %v856 = vld [vmem:[%s697 + $0x54] sm:$0xf]
        %v857 = vld [vmem:[%s697 + $0x58] sm:$0xf]
        %v858 = vld [vmem:[%s697 + $0x5c] sm:$0xf]
        %v859 = vld [vmem:[%s697 + $0x60] sm:$0xf]
        %v860 = vld [vmem:[%s697 + $0x64] sm:$0xf]
        %v861 = vld [vmem:[%s697 + $0x68] sm:$0xf]
        %v862 = vld [vmem:[%s697 + $0x6c] sm:$0xf]
        %v863 = vld [vmem:[%s697 + $0x70] sm:$0xf]
        %v864 = vld [vmem:[%s697 + $0x74] sm:$0xf]
        %v865 = vld [vmem:[%s697 + $0x78] sm:$0xf]
        %v866 = vld [vmem:[%s697 + $0x7c] sm:$0xf]
        %v867 = vld [vmem:[%s697 + $0x80] sm:$0xf]
        %v868 = vld [vmem:[%s697 + $0x84] sm:$0xf]
        %v869 = vld [vmem:[%s697 + $0x88] sm:$0xf]
        %v870 = vld [vmem:[%s697 + $0x8c] sm:$0xf]
        %v871 = vld [vmem:[%s697 + $0x90] sm:$0xf]
        %v872 = vld [vmem:[%s697 + $0x94] sm:$0xf]
        %v873 = vld [vmem:[%s697 + $0x98] sm:$0xf]
        %v874 = vld [vmem:[%s697 + $0x9c] sm:$0xf]
        %v875 = vld [vmem:[%s697 + $0xa0] sm:$0xf]
        %v876 = vld [vmem:[%s697 + $0xa4] sm:$0xf]
        %v877 = vld [vmem:[%s697 + $0xa8] sm:$0xf]
        %v878 = vld [vmem:[%s697 + $0xac] sm:$0xf]
        %v879 = vld [vmem:[%s697 + $0xb0] sm:$0xf]
        %v880 = vld [vmem:[%s697 + $0xb4] sm:$0xf]
        %v881 = vld [vmem:[%s697 + $0xb8] sm:$0xf]
        %v882 = vld [vmem:[%s697 + $0xbc] sm:$0xf]
        %v883 = vld [vmem:[%s697 + $0xc0] sm:$0xf]
        %v884 = vld [vmem:[%s697 + $0xc4] sm:$0xf]
        %v885 = vld [vmem:[%s697 + $0xc8] sm:$0xf]
        %v886 = vld [vmem:[%s697 + $0xcc] sm:$0xf]
        %v887 = vld [vmem:[%s697 + $0xd0] sm:$0xf]
        %v888 = vld [vmem:[%s697 + $0xd4] sm:$0xf]
        %v889 = vld [vmem:[%s697 + $0xd8] sm:$0xf]
        %v890 = vld [vmem:[%s697 + $0xdc] sm:$0xf]
        %v891 = vld [vmem:[%s697 + $0xe0] sm:$0xf]
        %v892 = vld [vmem:[%s697 + $0xe4] sm:$0xf]
        %v893 = vld [vmem:[%s697 + $0xe8] sm:$0xf]
        %v894 = vld [vmem:[%s697 + $0xec] sm:$0xf]
        %v895 = vld [vmem:[%s697 + $0xf0] sm:$0xf]
        %v896 = vld [vmem:[%s697 + $0xf4] sm:$0xf]
        %v897 = vld [vmem:[%s697 + $0xf8] sm:$0xf]
        %v898 = vld [vmem:[%s697 + $0xfc] sm:$0xf]
        %v899 = vld [vmem:[%s576] sm:$0x1]
        %v900 = vlaneseq
        %v901 = vand.u32 %v900, 127
        %vm902 = vcmp.lt.s32.totalorder %v901, 5
        %v903 = vsel %vm902, 0.0, -1e+09
        %v904 = vld [vmem:[#allocation2] sm:$0xff]
        %v905 = vld [vmem:[#allocation2 + $0x8] sm:$0xff]
        %906 = vadd.xlane.f32.xlu0 %v904
        %v907 = vpop.xlane.xlu0 %906
        %908 = vadd.xlane.f32.xlu0 %v905
        %v909 = vpop.xlane.xlu0 %908
        %v910 = vrcp.pop 128.0
        %v911 = vmul.f32 %v907, %v910
        %v912 = vmul.f32 %v909, %v910
        %v913 = vsub.f32 %v904, %v911
        %v914 = vsub.f32 %v905, %v912
        %v915 = vmul.f32 %v913, %v913
        %v916 = vmul.f32 %v914, %v914
        %917 = vadd.xlane.f32.xlu0 %v915
        %v918 = vpop.xlane.xlu0 %917
        %919 = vadd.xlane.f32.xlu0 %v916
        %v920 = vpop.xlane.xlu0 %919
        %v921 = vmul.f32 %v918, %v910
        %v922 = vmul.f32 %v920, %v910
        %v923 = vadd.f32 %v921, 1e-05
        %v924 = vadd.f32 %v922, 1e-05
        %v925 = vrsqrt.pop %v923
        %v926 = vrsqrt.pop %v924
        %v927 = vmul.f32 %v913, %v925
        %v928 = vmul.f32 %v914, %v926
        %v930 = vlaneseq
        %v931 = vshrl.u32 %v930, 7
        %v932 = vsub.s32 0, %v931
        %v933 = vrot.slane %v748, %v932
        %v935 = vmul.f32 %v927, %v933
        %v936 = vmul.f32 %v928, %v933
        %v938 = vlaneseq
        %v939 = vshrl.u32 %v938, 7
        %v940 = vsub.s32 0, %v939
        %v941 = vrot.slane %v749, %v940
        %v943 = vadd.f32 %v935, %v941
        %v944 = vadd.f32 %v936, %v941
        %v945 = vpack.c.bf16 %v944, %v943
        %v947 = vlaneseq
        %v948 = vshrl.u32 %v947, 7
        %v949 = vsub.s32 0, %v948
        %v950 = vrot.slane %v784, %v949
        %v951 = vlaneseq
        %v952 = vshrl.u32 %v951, 7
        %v953 = vsub.s32 1, %v952
        %v954 = vrot.slane %v784, %v953
        %v955 = vlaneseq
        %v956 = vshrl.u32 %v955, 7
        %v957 = vsub.s32 2, %v956
        %v958 = vrot.slane %v784, %v957
        %v994 = vunpack.c.l.b16 %v752
        %v995 = vunpack.c.h.b16 %v752
        %v996 = vunpack.c.l.b16 %v753
        %v997 = vunpack.c.l.b16 %v754
        %v998 = vunpack.c.h.b16 %v754
        %v999 = vunpack.c.l.b16 %v755
        %v1000 = vunpack.c.l.b16 %v756
        %v1001 = vunpack.c.h.b16 %v756
        %v1002 = vunpack.c.l.b16 %v757
        %v1003 = vunpack.c.l.b16 %v758
        %v1004 = vunpack.c.h.b16 %v758
        %v1005 = vunpack.c.l.b16 %v759
        %v1006 = vunpack.c.l.b16 %v760
        %v1007 = vunpack.c.h.b16 %v760
        %v1008 = vunpack.c.l.b16 %v761
        %v1009 = vunpack.c.l.b16 %v762
        %v1010 = vunpack.c.h.b16 %v762
        %v1011 = vunpack.c.l.b16 %v763
        %v1012 = vunpack.c.l.b16 %v764
        %v1013 = vunpack.c.h.b16 %v764
        %v1014 = vunpack.c.l.b16 %v765
        %v1015 = vunpack.c.l.b16 %v766
        %v1016 = vunpack.c.h.b16 %v766
        %v1017 = vunpack.c.l.b16 %v767
        %v1018 = vunpack.c.l.b16 %v768
        %v1019 = vunpack.c.h.b16 %v768
        %v1020 = vunpack.c.l.b16 %v769
        %v1021 = vunpack.c.l.b16 %v770
        %v1022 = vunpack.c.h.b16 %v770
        %v1023 = vunpack.c.l.b16 %v771
        %v1024 = vunpack.c.l.b16 %v772
        %v1025 = vunpack.c.h.b16 %v772
        %v1026 = vunpack.c.l.b16 %v773
        %v1027 = vunpack.c.l.b16 %v774
        %v1028 = vunpack.c.h.b16 %v774
        %v1029 = vunpack.c.l.b16 %v775
        %v1030 = vunpack.c.l.b16 %v776
        %v1031 = vunpack.c.h.b16 %v776
        %v1032 = vunpack.c.l.b16 %v777
        %v1033 = vunpack.c.l.b16 %v778
        %v1034 = vunpack.c.h.b16 %v778
        %v1035 = vunpack.c.l.b16 %v779
        %v1036 = vunpack.c.l.b16 %v780
        %v1037 = vunpack.c.h.b16 %v780
        %v1038 = vunpack.c.l.b16 %v781
        %v1039 = vunpack.c.l.b16 %v782
        %v1040 = vunpack.c.h.b16 %v782
        %v1041 = vunpack.c.l.b16 %v783
        %v1042 = vpack.c.b16 %v997, %v994
        %v1043 = vpack.c.b16 %v998, %v995
        %v1044 = vpack.c.b16 %v999, %v996
        %v1045 = vpack.c.b16 %v1003, %v1000
        %v1046 = vpack.c.b16 %v1004, %v1001
        %v1047 = vpack.c.b16 %v1005, %v1002
        %v1048 = vpack.c.b16 %v1009, %v1006
        %v1049 = vpack.c.b16 %v1010, %v1007
        %v1050 = vpack.c.b16 %v1011, %v1008
        %v1051 = vpack.c.b16 %v1015, %v1012
        %v1052 = vpack.c.b16 %v1016, %v1013
        %v1053 = vpack.c.b16 %v1017, %v1014
        %v1054 = vpack.c.b16 %v1021, %v1018
        %v1055 = vpack.c.b16 %v1022, %v1019
        %v1056 = vpack.c.b16 %v1023, %v1020
        %v1057 = vpack.c.b16 %v1027, %v1024
        %v1058 = vpack.c.b16 %v1028, %v1025
        %v1059 = vpack.c.b16 %v1029, %v1026
        %v1060 = vpack.c.b16 %v1033, %v1030
        %v1061 = vpack.c.b16 %v1034, %v1031
        %v1062 = vpack.c.b16 %v1035, %v1032
        %v1063 = vpack.c.b16 %v1039, %v1036
        %v1064 = vpack.c.b16 %v1040, %v1037
        %v1065 = vpack.c.b16 %v1041, %v1038
        %1090 = vmatprep.subr.bf16.mxu0 %v1064
        %1091 = vmatpush1.bf16.msra.mxu0 %v1063
        %1092 = vmatprep.subr.bf16.mxu0 %v1061
        %1093 = vmatpush1.bf16.msra.mxu0 %v1060
        %1094 = vmatprep.subr.bf16.mxu0 %v1058
        %1095 = vmatpush1.bf16.msra.mxu0 %v1057
        %1096 = vmatprep.subr.bf16.mxu0 %v1055
        %1097 = vmatpush1.bf16.msra.mxu0 %v1054
        %1098 = vmatprep.subr.bf16.mxu0 %v1052
        %1099 = vmatpush1.bf16.msra.mxu0 %v1051
        %1100 = vmatprep.subr.bf16.mxu0 %v1049
        %1101 = vmatpush1.bf16.msra.mxu0 %v1048
        %1102 = vmatprep.subr.bf16.mxu0 %v1046
        %1103 = vmatpush1.bf16.msra.mxu0 %v1045
        %1104 = vmatprep.subr.bf16.mxu0 %v1043
        %1105 = vmatpush1.bf16.msra.mxu0 %v1042
        %1106 = vmatprep.subr.bf16.mxu0 0
        %1107 = vmatpush2.bf16.msra.mxu0 0
        %1108 = vmatprep.subr.bf16.mxu0 0
        %1109 = vmatpush2.bf16.msra.mxu0 0
        %1110 = vmatprep.subr.bf16.mxu0 0
        %1111 = vmatpush2.bf16.msra.mxu0 0
        %1112 = vmatprep.subr.bf16.mxu0 0
        %1113 = vmatpush2.bf16.msra.mxu0 0
        %1114 = vmatprep.subr.bf16.mxu0 0
        %1115 = vmatpush2.bf16.msra.mxu0 0
        %1116 = vmatprep.subr.bf16.mxu0 0
        %1117 = vmatpush2.bf16.msra.mxu0 0
        %1118 = vmatprep.subr.bf16.mxu0 0
        %1119 = vmatpush2.bf16.msra.mxu0 0
        %1120 = vmatprep.subr.bf16.mxu0 0
        %1121 = vmatpush2.bf16.msra.mxu0 0
        %1122 = vmatprep.mubr.bf16.mxu0 0
        %1123 = vmatmul.mubr.bf16.gmra.mxu0 %v945
        %v1124 = vpop.f32.mrf.mxu0
        %v1125 = vadd.f32 %v950, %v1124
        %v1126 = vpop.f32.mrf.mxu0
        %v1127 = vadd.f32 %v954, %v1126
        %v1128 = vpop.f32.mrf.mxu0
        %v1129 = vadd.f32 %v950, %v1128
        %v1130 = vpop.f32.mrf.mxu0
        %v1131 = vadd.f32 %v954, %v1130
        %1132 = vdwg.mxu0
        %1133 = vmatprep.subr.bf16.mxu0 0
        %1134 = vmatpush1.bf16.msra.mxu0 %v1065
        %1135 = vmatprep.subr.bf16.mxu0 0
        %1136 = vmatpush1.bf16.msra.mxu0 %v1062
        %1137 = vmatprep.subr.bf16.mxu0 0
        %1138 = vmatpush1.bf16.msra.mxu0 %v1059
        %1139 = vmatprep.subr.bf16.mxu0 0
        %1140 = vmatpush1.bf16.msra.mxu0 %v1056
        %1141 = vmatprep.subr.bf16.mxu0 0
        %1142 = vmatpush1.bf16.msra.mxu0 %v1053
        %1143 = vmatprep.subr.bf16.mxu0 0
        %1144 = vmatpush1.bf16.msra.mxu0 %v1050
        %1145 = vmatprep.subr.bf16.mxu0 0
        %1146 = vmatpush1.bf16.msra.mxu0 %v1047
        %1147 = vmatprep.subr.bf16.mxu0 0
        %1148 = vmatpush1.bf16.msra.mxu0 %v1044
        %1149 = vmatprep.subr.bf16.mxu0 0
        %1150 = vmatpush2.bf16.msra.mxu0 0
        %1151 = vmatprep.subr.bf16.mxu0 0
        %1152 = vmatpush2.bf16.msra.mxu0 0
        %1153 = vmatprep.subr.bf16.mxu0 0
        %1154 = vmatpush2.bf16.msra.mxu0 0
        %1155 = vmatprep.subr.bf16.mxu0 0
        %1156 = vmatpush2.bf16.msra.mxu0 0
        %1157 = vmatprep.subr.bf16.mxu0 0
        %1158 = vmatpush2.bf16.msra.mxu0 0
        %1159 = vmatprep.subr.bf16.mxu0 0
        %1160 = vmatpush2.bf16.msra.mxu0 0
        %1161 = vmatprep.subr.bf16.mxu0 0
        %1162 = vmatpush2.bf16.msra.mxu0 0
        %1163 = vmatprep.subr.bf16.mxu0 0
        %1164 = vmatpush2.bf16.msra.mxu0 0
        %1165 = vmatprep.mubr.bf16.mxu0 0
        %1166 = vmatmul.mubr.bf16.gmra.mxu0 %v945
        %v1167 = vpop.f32.mrf.mxu0
        %v1168 = vadd.f32 %v958, %v1167
        %v1169 = vpop.f32.mrf.mxu0
        %v1170 = vpop.f32.mrf.mxu0
        %v1171 = vadd.f32 %v958, %v1170
        %v1172 = vpop.f32.mrf.mxu0
        %1173 = vdwg.mxu0
        %v1174 = vmul.f32 %v1125, 0.125
        %v1175 = vmul.f32 %v1129, 0.125
        %v1176 = vpack.c.bf16 %v1174, %v1174
        %v1177 = vpack.c.bf16 %v1175, %v1175
        %v1178 = vpack.c.bf16 %v1127, %v1127
        %v1179 = vpack.c.bf16 %v1131, %v1131
        %v1180 = vpack.c.bf16 %v1168, %v1168
        %v1181 = vpack.c.bf16 %v1171, %v1171
        %vm1182 = vcmask 523264
        %v1184 = vsel %vm1182, %v1176, 0
        %v1187 = vsel %vm1182, %v1178, 0
        %1189 = vmatprep.subr.bf16.mxu0 0
        %1190 = vmatpush1.bf16.xpose.msra.mxu0 0
        %1191 = vmatprep.subr.bf16.mxu0 0
        %1192 = vmatpush1.bf16.xpose.msra.mxu0 0
        %1193 = vmatprep.subr.bf16.mxu0 0
        %1194 = vmatpush1.bf16.xpose.msra.mxu0 0
        %1195 = vmatprep.subr.bf16.mxu0 0
        %1196 = vmatpush1.bf16.xpose.msra.mxu0 0
        %1197 = vmatprep.subr.bf16.mxu0 0
        %1198 = vmatpush1.bf16.xpose.msra.mxu0 0
        %1199 = vmatprep.subr.bf16.mxu0 0
        %1200 = vmatpush1.bf16.xpose.msra.mxu0 0
        %1201 = vmatprep.subr.bf16.mxu0 0
        %1202 = vmatpush1.bf16.xpose.msra.mxu0 0
        %1203 = vmatprep.subr.bf16.mxu0 0
        %1204 = vmatpush1.bf16.xpose.msra.mxu0 %v1187
        %1205 = vmatprep.subr.bf16.mxu0 0
        %1206 = vmatpush2.bf16.xpose.msra.mxu0 0
        %1207 = vmatprep.subr.bf16.mxu0 0
        %1208 = vmatpush2.bf16.xpose.msra.mxu0 0
        %1209 = vmatprep.subr.bf16.mxu0 0
        %1210 = vmatpush2.bf16.xpose.msra.mxu0 0
        %1211 = vmatprep.subr.bf16.mxu0 0
        %1212 = vmatpush2.bf16.xpose.msra.mxu0 0
        %1213 = vmatprep.subr.bf16.mxu0 0
        %1214 = vmatpush2.bf16.xpose.msra.mxu0 0
        %1215 = vmatprep.subr.bf16.mxu0 0
        %1216 = vmatpush2.bf16.xpose.msra.mxu0 0
        %1217 = vmatprep.subr.bf16.mxu0 0
        %1218 = vmatpush2.bf16.xpose.msra.mxu0 0
        %1219 = vmatprep.subr.bf16.mxu0 0
        %1220 = vmatpush2.bf16.xpose.msra.mxu0 0
        %1221 = vmatprep.mubr.bf16.mxu0 0
        %1222 = vmatmul.mubr.bf16.gmra.mxu0 %v1184
        %v1223 = vpop.f32.mrf.mxu0
        %v1224 = vadd.f32 %v903, %v1223
        %v1225 = vpop.f32.mrf.mxu0
        %v1226 = vpop.f32.mrf.mxu0
        %v1227 = vpop.f32.mrf.mxu0
        %1228 = vdwg.mxu0
        %v1230 = vsel %vm1182, %v1177, 0
        %v1233 = vsel %vm1182, %v1179, 0
        %1235 = vmatprep.subr.bf16.mxu0 0
        %1236 = vmatpush1.bf16.xpose.msra.mxu0 0
        %1237 = vmatprep.subr.bf16.mxu0 0
        %1238 = vmatpush1.bf16.xpose.msra.mxu0 0
        %1239 = vmatprep.subr.bf16.mxu0 0
        %1240 = vmatpush1.bf16.xpose.msra.mxu0 0
        %1241 = vmatprep.subr.bf16.mxu0 0
        %1242 = vmatpush1.bf16.xpose.msra.mxu0 0
        %1243 = vmatprep.subr.bf16.mxu0 0
        %1244 = vmatpush1.bf16.xpose.msra.mxu0 0
        %1245 = vmatprep.subr.bf16.mxu0 0
        %1246 = vmatpush1.bf16.xpose.msra.mxu0 0
        %1247 = vmatprep.subr.bf16.mxu0 0
        %1248 = vmatpush1.bf16.xpose.msra.mxu0 0
        %1249 = vmatprep.subr.bf16.mxu0 0
        %1250 = vmatpush1.bf16.xpose.msra.mxu0 %v1233
        %1251 = vmatprep.subr.bf16.mxu0 0
        %1252 = vmatpush2.bf16.xpose.msra.mxu0 0
        %1253 = vmatprep.subr.bf16.mxu0 0
        %1254 = vmatpush2.bf16.xpose.msra.mxu0 0
        %1255 = vmatprep.subr.bf16.mxu0 0
        %1256 = vmatpush2.bf16.xpose.msra.mxu0 0
        %1257 = vmatprep.subr.bf16.mxu0 0
        %1258 = vmatpush2.bf16.xpose.msra.mxu0 0
        %1259 = vmatprep.subr.bf16.mxu0 0
        %1260 = vmatpush2.bf16.xpose.msra.mxu0 0
        %1261 = vmatprep.subr.bf16.mxu0 0
        %1262 = vmatpush2.bf16.xpose.msra.mxu0 0
        %1263 = vmatprep.subr.bf16.mxu0 0
        %1264 = vmatpush2.bf16.xpose.msra.mxu0 0
        %1265 = vmatprep.subr.bf16.mxu0 0
        %1266 = vmatpush2.bf16.xpose.msra.mxu0 0
        %1267 = vmatprep.mubr.bf16.mxu0 0
        %1268 = vmatmul.mubr.bf16.gmra.mxu0 %v1230
        %v1269 = vpop.f32.mrf.mxu0
        %v1270 = vadd.f32 %v903, %v1269
        %v1271 = vpop.f32.mrf.mxu0
        %v1272 = vpop.f32.mrf.mxu0
        %v1273 = vpop.f32.mrf.mxu0
        %1274 = vdwg.mxu0
        %vm1275 = vcmask 64512
        %v1276 = vsel %vm1275, %v1224, -inf
        %1277 = vmax.xlane.f32.xlu0 %v1276
        %v1278 = vpop.xlane.xlu0 %1277
        %v1279 = vsel %vm1275, %v1270, -inf
        %1280 = vmax.xlane.f32.xlu0 %v1279
        %v1281 = vpop.xlane.xlu0 %1280
        %v1282 = vsub.f32 %v1224, %v1278
        %v1283 = vsub.f32 %v1270, %v1281
        %v1284 = vmul.f32 %v1282, 1.442695
        %v1285 = vpow.pop %v1284
        %v1286 = vmul.f32 %v1283, 1.442695
        %v1287 = vpow.pop %v1286
        %v1288 = vsel %vm1275, %v1285, 0.0
        %1289 = vadd.xlane.f32.xlu0 %v1288
        %v1290 = vpop.xlane.xlu0 %1289
        %v1291 = vsel %vm1275, %v1287, 0.0
        %1292 = vadd.xlane.f32.xlu0 %v1291
        %v1293 = vpop.xlane.xlu0 %1292
        %v1294 = vrcp.pop %v1290
        %v1295 = vrcp.pop %v1293
        %v1296 = vmul.f32 %v1285, %v1294
        %v1297 = vmul.f32 %v1287, %v1295
        %v1298 = vpack.c.bf16 %v1296, %v1296
        %v1299 = vpack.c.bf16 %v1297, %v1297
        %v1301 = vsel %vm1275, %v1298, 0
        %vm1303 = vcmask 1043456
        %v1305 = vsel %vm1303, %v1180, 0
        %1307 = vmatprep.subr.bf16.mxu0 0
        %1308 = vmatpush1.bf16.msra.mxu0 0
        %1309 = vmatprep.subr.bf16.mxu0 0
        %1310 = vmatpush1.bf16.msra.mxu0 0
        %1311 = vmatprep.subr.bf16.mxu0 0
        %1312 = vmatpush1.bf16.msra.mxu0 0
        %1313 = vmatprep.subr.bf16.mxu0 0
        %1314 = vmatpush1.bf16.msra.mxu0 0
        %1315 = vmatprep.subr.bf16.mxu0 0
        %1316 = vmatpush1.bf16.msra.mxu0 0
        %1317 = vmatprep.subr.bf16.mxu0 0
        %1318 = vmatpush1.bf16.msra.mxu0 0
        %1319 = vmatprep.subr.bf16.mxu0 0
        %1320 = vmatpush1.bf16.msra.mxu0 0
        %1321 = vmatprep.subr.bf16.mxu0 0
        %1322 = vmatpush1.bf16.msra.mxu0 %v1305
        %1323 = vmatprep.subr.bf16.mxu0 0
        %1324 = vmatpush2.bf16.msra.mxu0 0
        %1325 = vmatprep.subr.bf16.mxu0 0
        %1326 = vmatpush2.bf16.msra.mxu0 0
        %1327 = vmatprep.subr.bf16.mxu0 0
        %1328 = vmatpush2.bf16.msra.mxu0 0
        %1329 = vmatprep.subr.bf16.mxu0 0
        %1330 = vmatpush2.bf16.msra.mxu0 0
        %1331 = vmatprep.subr.bf16.mxu0 0
        %1332 = vmatpush2.bf16.msra.mxu0 0
        %1333 = vmatprep.subr.bf16.mxu0 0
        %1334 = vmatpush2.bf16.msra.mxu0 0
        %1335 = vmatprep.subr.bf16.mxu0 0
        %1336 = vmatpush2.bf16.msra.mxu0 0
        %1337 = vmatprep.subr.bf16.mxu0 0
        %1338 = vmatpush2.bf16.msra.mxu0 0
        %1339 = vmatprep.mubr.bf16.mxu0 0
        %1340 = vmatmul.mubr.bf16.gmra.mxu0 %v1301
        %v1341 = vpop.f32.mrf.mxu0
        %v1342 = vadd.f32 0.0, %v1341
        %v1343 = vpop.f32.mrf.mxu0
        %v1344 = vpop.f32.mrf.mxu0
        %v1345 = vpop.f32.mrf.mxu0
        %1346 = vdwg.mxu0
        %v1348 = vsel %vm1275, %v1299, 0
        %v1351 = vsel %vm1303, %v1181, 0
        %1353 = vmatprep.subr.bf16.mxu0 0
        %1354 = vmatpush1.bf16.msra.mxu0 0
        %1355 = vmatprep.subr.bf16.mxu0 0
        %1356 = vmatpush1.bf16.msra.mxu0 0
        %1357 = vmatprep.subr.bf16.mxu0 0
        %1358 = vmatpush1.bf16.msra.mxu0 0
        %1359 = vmatprep.subr.bf16.mxu0 0
        %1360 = vmatpush1.bf16.msra.mxu0 0
        %1361 = vmatprep.subr.bf16.mxu0 0
        %1362 = vmatpush1.bf16.msra.mxu0 0
        %1363 = vmatprep.subr.bf16.mxu0 0
        %1364 = vmatpush1.bf16.msra.mxu0 0
        %1365 = vmatprep.subr.bf16.mxu0 0
        %1366 = vmatpush1.bf16.msra.mxu0 0
        %1367 = vmatprep.subr.bf16.mxu0 0
        %1368 = vmatpush1.bf16.msra.mxu0 %v1351
        %1369 = vmatprep.subr.bf16.mxu0 0
        %1370 = vmatpush2.bf16.msra.mxu0 0
        %1371 = vmatprep.subr.bf16.mxu0 0
        %1372 = vmatpush2.bf16.msra.mxu0 0
        %1373 = vmatprep.subr.bf16.mxu0 0
        %1374 = vmatpush2.bf16.msra.mxu0 0
        %1375 = vmatprep.subr.bf16.mxu0 0
        %1376 = vmatpush2.bf16.msra.mxu0 0
        %1377 = vmatprep.subr.bf16.mxu0 0
        %1378 = vmatpush2.bf16.msra.mxu0 0
        %1379 = vmatprep.subr.bf16.mxu0 0
        %1380 = vmatpush2.bf16.msra.mxu0 0
        %1381 = vmatprep.subr.bf16.mxu0 0
        %1382 = vmatpush2.bf16.msra.mxu0 0
        %1383 = vmatprep.subr.bf16.mxu0 0
        %1384 = vmatpush2.bf16.msra.mxu0 0
        %1385 = vmatprep.mubr.bf16.mxu0 0
        %1386 = vmatmul.mubr.bf16.gmra.mxu0 %v1348
        %v1387 = vpop.f32.mrf.mxu0
        %v1388 = vadd.f32 0.0, %v1387
        %v1389 = vpop.f32.mrf.mxu0
        %v1390 = vpop.f32.mrf.mxu0
        %v1391 = vpop.f32.mrf.mxu0
        %1392 = vdwg.mxu0
        %v1393 = vpack.c.bf16 %v1388, %v1342
        %1395 = vrot.lane.b32.xlu0 %v1176, 64
        %v1396 = vpop.permute.xlu0 %1395
        %1398 = vrot.lane.b32.xlu0 %v1178, 64
        %v1399 = vpop.permute.xlu0 %1398
        %v1401 = vsel %vm1182, %v1396, 0
        %v1404 = vsel %vm1182, %v1399, 0
        %1406 = vmatprep.subr.bf16.mxu0 0
        %1407 = vmatpush1.bf16.xpose.msra.mxu0 0
        %1408 = vmatprep.subr.bf16.mxu0 0
        %1409 = vmatpush1.bf16.xpose.msra.mxu0 0
        %1410 = vmatprep.subr.bf16.mxu0 0
        %1411 = vmatpush1.bf16.xpose.msra.mxu0 0
        %1412 = vmatprep.subr.bf16.mxu0 0
        %1413 = vmatpush1.bf16.xpose.msra.mxu0 0
        %1414 = vmatprep.subr.bf16.mxu0 0
        %1415 = vmatpush1.bf16.xpose.msra.mxu0 0
        %1416 = vmatprep.subr.bf16.mxu0 0
        %1417 = vmatpush1.bf16.xpose.msra.mxu0 0
        %1418 = vmatprep.subr.bf16.mxu0 0
        %1419 = vmatpush1.bf16.xpose.msra.mxu0 0
        %1420 = vmatprep.subr.bf16.mxu0 0
        %1421 = vmatpush1.bf16.xpose.msra.mxu0 %v1404
        %1422 = vmatprep.subr.bf16.mxu0 0
        %1423 = vmatpush2.bf16.xpose.msra.mxu0 0
        %1424 = vmatprep.subr.bf16.mxu0 0
        %1425 = vmatpush2.bf16.xpose.msra.mxu0 0
        %1426 = vmatprep.subr.bf16.mxu0 0
        %1427 = vmatpush2.bf16.xpose.msra.mxu0 0
        %1428 = vmatprep.subr.bf16.mxu0 0
        %1429 = vmatpush2.bf16.xpose.msra.mxu0 0
        %1430 = vmatprep.subr.bf16.mxu0 0
        %1431 = vmatpush2.bf16.xpose.msra.mxu0 0
        %1432 = vmatprep.subr.bf16.mxu0 0
        %1433 = vmatpush2.bf16.xpose.msra.mxu0 0
        %1434 = vmatprep.subr.bf16.mxu0 0
        %1435 = vmatpush2.bf16.xpose.msra.mxu0 0
        %1436 = vmatprep.subr.bf16.mxu0 0
        %1437 = vmatpush2.bf16.xpose.msra.mxu0 0
        %1438 = vmatprep.mubr.bf16.mxu0 0
        %1439 = vmatmul.mubr.bf16.gmra.mxu0 %v1401
        %v1440 = vpop.f32.mrf.mxu0
        %v1441 = vadd.f32 %v903, %v1440
        %v1442 = vpop.f32.mrf.mxu0
        %v1443 = vpop.f32.mrf.mxu0
        %v1444 = vpop.f32.mrf.mxu0
        %1445 = vdwg.mxu0
        %1447 = vrot.lane.b32.xlu0 %v1177, 64
        %v1448 = vpop.permute.xlu0 %1447
        %1450 = vrot.lane.b32.xlu0 %v1179, 64
        %v1451 = vpop.permute.xlu0 %1450
        %v1453 = vsel %vm1182, %v1448, 0
        %v1456 = vsel %vm1182, %v1451, 0
        %1458 = vmatprep.subr.bf16.mxu0 0
        %1459 = vmatpush1.bf16.xpose.msra.mxu0 0
        %1460 = vmatprep.subr.bf16.mxu0 0
        %1461 = vmatpush1.bf16.xpose.msra.mxu0 0
        %1462 = vmatprep.subr.bf16.mxu0 0
        %1463 = vmatpush1.bf16.xpose.msra.mxu0 0
        %1464 = vmatprep.subr.bf16.mxu0 0
        %1465 = vmatpush1.bf16.xpose.msra.mxu0 0
        %1466 = vmatprep.subr.bf16.mxu0 0
        %1467 = vmatpush1.bf16.xpose.msra.mxu0 0
        %1468 = vmatprep.subr.bf16.mxu0 0
        %1469 = vmatpush1.bf16.xpose.msra.mxu0 0
        %1470 = vmatprep.subr.bf16.mxu0 0
        %1471 = vmatpush1.bf16.xpose.msra.mxu0 0
        %1472 = vmatprep.subr.bf16.mxu0 0
        %1473 = vmatpush1.bf16.xpose.msra.mxu0 %v1456
        %1474 = vmatprep.subr.bf16.mxu0 0
        %1475 = vmatpush2.bf16.xpose.msra.mxu0 0
        %1476 = vmatprep.subr.bf16.mxu0 0
        %1477 = vmatpush2.bf16.xpose.msra.mxu0 0
        %1478 = vmatprep.subr.bf16.mxu0 0
        %1479 = vmatpush2.bf16.xpose.msra.mxu0 0
        %1480 = vmatprep.subr.bf16.mxu0 0
        %1481 = vmatpush2.bf16.xpose.msra.mxu0 0
        %1482 = vmatprep.subr.bf16.mxu0 0
        %1483 = vmatpush2.bf16.xpose.msra.mxu0 0
        %1484 = vmatprep.subr.bf16.mxu0 0
        %1485 = vmatpush2.bf16.xpose.msra.mxu0 0
        %1486 = vmatprep.subr.bf16.mxu0 0
        %1487 = vmatpush2.bf16.xpose.msra.mxu0 0
        %1488 = vmatprep.subr.bf16.mxu0 0
        %1489 = vmatpush2.bf16.xpose.msra.mxu0 0
        %1490 = vmatprep.mubr.bf16.mxu0 0
        %1491 = vmatmul.mubr.bf16.gmra.mxu0 %v1453
        %v1492 = vpop.f32.mrf.mxu0
        %v1493 = vadd.f32 %v903, %v1492
        %v1494 = vpop.f32.mrf.mxu0
        %v1495 = vpop.f32.mrf.mxu0
        %v1496 = vpop.f32.mrf.mxu0
        %1497 = vdwg.mxu0
        %v1498 = vsel %vm1275, %v1441, -inf
        %1499 = vmax.xlane.f32.xlu0 %v1498
        %v1500 = vpop.xlane.xlu0 %1499
        %v1501 = vsel %vm1275, %v1493, -inf
        %1502 = vmax.xlane.f32.xlu0 %v1501
        %v1503 = vpop.xlane.xlu0 %1502
        %v1504 = vsub.f32 %v1441, %v1500
        %v1505 = vsub.f32 %v1493, %v1503
        %v1506 = vmul.f32 %v1504, 1.442695
        %v1507 = vpow.pop %v1506
        %v1508 = vmul.f32 %v1505, 1.442695
        %v1509 = vpow.pop %v1508
        %v1510 = vsel %vm1275, %v1507, 0.0
        %1511 = vadd.xlane.f32.xlu0 %v1510
        %v1512 = vpop.xlane.xlu0 %1511
        %v1513 = vsel %vm1275, %v1509, 0.0
        %1514 = vadd.xlane.f32.xlu0 %v1513
        %v1515 = vpop.xlane.xlu0 %1514
        %v1516 = vrcp.pop %v1512
        %v1517 = vrcp.pop %v1515
        %v1518 = vmul.f32 %v1507, %v1516
        %v1519 = vmul.f32 %v1509, %v1517
        %v1520 = vpack.c.bf16 %v1518, %v1518
        %v1521 = vpack.c.bf16 %v1519, %v1519
        %1523 = vrot.lane.b32.xlu0 %v1180, 64
        %v1524 = vpop.permute.xlu0 %1523
        %v1526 = vsel %vm1275, %v1520, 0
        %v1529 = vsel %vm1303, %v1524, 0
        %1531 = vmatprep.subr.bf16.mxu0 0
        %1532 = vmatpush1.bf16.msra.mxu0 0
        %1533 = vmatprep.subr.bf16.mxu0 0
        %1534 = vmatpush1.bf16.msra.mxu0 0
        %1535 = vmatprep.subr.bf16.mxu0 0
        %1536 = vmatpush1.bf16.msra.mxu0 0
        %1537 = vmatprep.subr.bf16.mxu0 0
        %1538 = vmatpush1.bf16.msra.mxu0 0
        %1539 = vmatprep.subr.bf16.mxu0 0
        %1540 = vmatpush1.bf16.msra.mxu0 0
        %1541 = vmatprep.subr.bf16.mxu0 0
        %1542 = vmatpush1.bf16.msra.mxu0 0
        %1543 = vmatprep.subr.bf16.mxu0 0
        %1544 = vmatpush1.bf16.msra.mxu0 0
        %1545 = vmatprep.subr.bf16.mxu0 0
        %1546 = vmatpush1.bf16.msra.mxu0 %v1529
        %1547 = vmatprep.subr.bf16.mxu0 0
        %1548 = vmatpush2.bf16.msra.mxu0 0
        %1549 = vmatprep.subr.bf16.mxu0 0
        %1550 = vmatpush2.bf16.msra.mxu0 0
        %1551 = vmatprep.subr.bf16.mxu0 0
        %1552 = vmatpush2.bf16.msra.mxu0 0
        %1553 = vmatprep.subr.bf16.mxu0 0
        %1554 = vmatpush2.bf16.msra.mxu0 0
        %1555 = vmatprep.subr.bf16.mxu0 0
        %1556 = vmatpush2.bf16.msra.mxu0 0
        %1557 = vmatprep.subr.bf16.mxu0 0
        %1558 = vmatpush2.bf16.msra.mxu0 0
        %1559 = vmatprep.subr.bf16.mxu0 0
        %1560 = vmatpush2.bf16.msra.mxu0 0
        %1561 = vmatprep.subr.bf16.mxu0 0
        %1562 = vmatpush2.bf16.msra.mxu0 0
        %1563 = vmatprep.mubr.bf16.mxu0 0
        %1564 = vmatmul.mubr.bf16.gmra.mxu0 %v1526
        %v1565 = vpop.f32.mrf.mxu0
        %v1566 = vadd.f32 0.0, %v1565
        %v1567 = vpop.f32.mrf.mxu0
        %v1568 = vpop.f32.mrf.mxu0
        %v1569 = vpop.f32.mrf.mxu0
        %1570 = vdwg.mxu0
        %1572 = vrot.lane.b32.xlu0 %v1181, 64
        %v1573 = vpop.permute.xlu0 %1572
        %v1575 = vsel %vm1275, %v1521, 0
        %v1578 = vsel %vm1303, %v1573, 0
        %1580 = vmatprep.subr.bf16.mxu0 0
        %1581 = vmatpush1.bf16.msra.mxu0 0
        %1582 = vmatprep.subr.bf16.mxu0 0
        %1583 = vmatpush1.bf16.msra.mxu0 0
        %1584 = vmatprep.subr.bf16.mxu0 0
        %1585 = vmatpush1.bf16.msra.mxu0 0
        %1586 = vmatprep.subr.bf16.mxu0 0
        %1587 = vmatpush1.bf16.msra.mxu0 0
        %1588 = vmatprep.subr.bf16.mxu0 0
        %1589 = vmatpush1.bf16.msra.mxu0 0
        %1590 = vmatprep.subr.bf16.mxu0 0
        %1591 = vmatpush1.bf16.msra.mxu0 0
        %1592 = vmatprep.subr.bf16.mxu0 0
        %1593 = vmatpush1.bf16.msra.mxu0 0
        %1594 = vmatprep.subr.bf16.mxu0 0
        %1595 = vmatpush1.bf16.msra.mxu0 %v1578
        %1596 = vmatprep.subr.bf16.mxu0 0
        %1597 = vmatpush2.bf16.msra.mxu0 0
        %1598 = vmatprep.subr.bf16.mxu0 0
        %1599 = vmatpush2.bf16.msra.mxu0 0
        %1600 = vmatprep.subr.bf16.mxu0 0
        %1601 = vmatpush2.bf16.msra.mxu0 0
        %1602 = vmatprep.subr.bf16.mxu0 0
        %1603 = vmatpush2.bf16.msra.mxu0 0
        %1604 = vmatprep.subr.bf16.mxu0 0
        %1605 = vmatpush2.bf16.msra.mxu0 0
        %1606 = vmatprep.subr.bf16.mxu0 0
        %1607 = vmatpush2.bf16.msra.mxu0 0
        %1608 = vmatprep.subr.bf16.mxu0 0
        %1609 = vmatpush2.bf16.msra.mxu0 0
        %1610 = vmatprep.subr.bf16.mxu0 0
        %1611 = vmatpush2.bf16.msra.mxu0 0
        %1612 = vmatprep.mubr.bf16.mxu0 0
        %1613 = vmatmul.mubr.bf16.gmra.mxu0 %v1575
        %v1614 = vpop.f32.mrf.mxu0
        %v1615 = vadd.f32 0.0, %v1614
        %v1616 = vpop.f32.mrf.mxu0
        %v1617 = vpop.f32.mrf.mxu0
        %v1618 = vpop.f32.mrf.mxu0
        %1619 = vdwg.mxu0
        %v1620 = vpack.c.bf16 %v1615, %v1566
        %v1629 = vunpack.c.l.b16 %v793
        %v1630 = vunpack.c.l.b16 %v794
        %v1631 = vunpack.c.l.b16 %v795
        %v1632 = vunpack.c.l.b16 %v796
        %v1633 = vunpack.c.l.b16 %v797
        %v1634 = vunpack.c.l.b16 %v798
        %v1635 = vunpack.c.l.b16 %v799
        %v1636 = vunpack.c.l.b16 %v800
        %v1637 = vpack.c.b16 %v1630, %v1629
        %v1638 = vpack.c.b16 %v1632, %v1631
        %v1639 = vpack.c.b16 %v1634, %v1633
        %v1640 = vpack.c.b16 %v1636, %v1635
        %v1646 = vsel %vm1182, %v1620, 0
        %1648 = vmatprep.subr.bf16.mxu0 0
        %1649 = vmatpush1.bf16.msra.mxu0 0
        %1650 = vmatprep.subr.bf16.mxu0 0
        %1651 = vmatpush1.bf16.msra.mxu0 0
        %1652 = vmatprep.subr.bf16.mxu0 0
        %1653 = vmatpush1.bf16.msra.mxu0 0
        %1654 = vmatprep.subr.bf16.mxu0 0
        %1655 = vmatpush1.bf16.msra.mxu0 0
        %1656 = vmatprep.subr.bf16.mxu0 0
        %1657 = vmatpush1.bf16.msra.mxu0 %v1640
        %1658 = vmatprep.subr.bf16.mxu0 0
        %1659 = vmatpush1.bf16.msra.mxu0 %v1639
        %1660 = vmatprep.subr.bf16.mxu0 0
        %1661 = vmatpush1.bf16.msra.mxu0 %v1638
        %1662 = vmatprep.subr.bf16.mxu0 0
        %1663 = vmatpush1.bf16.msra.mxu0 %v1637
        %1664 = vmatprep.subr.bf16.mxu0 0
        %1665 = vmatpush2.bf16.msra.mxu0 0
        %1666 = vmatprep.subr.bf16.mxu0 0
        %1667 = vmatpush2.bf16.msra.mxu0 0
        %1668 = vmatprep.subr.bf16.mxu0 0
        %1669 = vmatpush2.bf16.msra.mxu0 0
        %1670 = vmatprep.subr.bf16.mxu0 0
        %1671 = vmatpush2.bf16.msra.mxu0 0
        %1672 = vmatprep.subr.bf16.mxu0 0
        %1673 = vmatpush2.bf16.msra.mxu0 0
        %1674 = vmatprep.subr.bf16.mxu0 0
        %1675 = vmatpush2.bf16.msra.mxu0 0
        %1676 = vmatprep.subr.bf16.mxu0 0
        %1677 = vmatpush2.bf16.msra.mxu0 0
        %1678 = vmatprep.subr.bf16.mxu0 0
        %1679 = vmatpush2.bf16.msra.mxu0 0
        %1680 = vmatprep.mubr.bf16.mxu0 0
        %1681 = vmatmul.mubr.bf16.gmra.mxu0 %v1646
        %v1682 = vpop.f32.mrf.mxu0
        %v1683 = vadd.f32 0.0, %v1682
        %v1684 = vpop.f32.mrf.mxu0
        %v1685 = vpop.f32.mrf.mxu0
        %v1686 = vadd.f32 0.0, %v1685
        %v1687 = vpop.f32.mrf.mxu0
        %1688 = vdwg.mxu0
        %v1697 = vunpack.c.l.b16 %v785
        %v1698 = vunpack.c.l.b16 %v786
        %v1699 = vunpack.c.l.b16 %v787
        %v1700 = vunpack.c.l.b16 %v788
        %v1701 = vunpack.c.l.b16 %v789
        %v1702 = vunpack.c.l.b16 %v790
        %v1703 = vunpack.c.l.b16 %v791
        %v1704 = vunpack.c.l.b16 %v792
        %v1705 = vpack.c.b16 %v1698, %v1697
        %v1706 = vpack.c.b16 %v1700, %v1699
        %v1707 = vpack.c.b16 %v1702, %v1701
        %v1708 = vpack.c.b16 %v1704, %v1703
        %v1714 = vsel %vm1182, %v1393, 0
        %1716 = vmatprep.subr.bf16.mxu0 0
        %1717 = vmatpush1.bf16.msra.mxu0 0
        %1718 = vmatprep.subr.bf16.mxu0 0
        %1719 = vmatpush1.bf16.msra.mxu0 0
        %1720 = vmatprep.subr.bf16.mxu0 0
        %1721 = vmatpush1.bf16.msra.mxu0 0
        %1722 = vmatprep.subr.bf16.mxu0 0
        %1723 = vmatpush1.bf16.msra.mxu0 0
        %1724 = vmatprep.subr.bf16.mxu0 0
        %1725 = vmatpush1.bf16.msra.mxu0 %v1708
        %1726 = vmatprep.subr.bf16.mxu0 0
        %1727 = vmatpush1.bf16.msra.mxu0 %v1707
        %1728 = vmatprep.subr.bf16.mxu0 0
        %1729 = vmatpush1.bf16.msra.mxu0 %v1706
        %1730 = vmatprep.subr.bf16.mxu0 0
        %1731 = vmatpush1.bf16.msra.mxu0 %v1705
        %1732 = vmatprep.subr.bf16.mxu0 0
        %1733 = vmatpush2.bf16.msra.mxu0 0
        %1734 = vmatprep.subr.bf16.mxu0 0
        %1735 = vmatpush2.bf16.msra.mxu0 0
        %1736 = vmatprep.subr.bf16.mxu0 0
        %1737 = vmatpush2.bf16.msra.mxu0 0
        %1738 = vmatprep.subr.bf16.mxu0 0
        %1739 = vmatpush2.bf16.msra.mxu0 0
        %1740 = vmatprep.subr.bf16.mxu0 0
        %1741 = vmatpush2.bf16.msra.mxu0 0
        %1742 = vmatprep.subr.bf16.mxu0 0
        %1743 = vmatpush2.bf16.msra.mxu0 0
        %1744 = vmatprep.subr.bf16.mxu0 0
        %1745 = vmatpush2.bf16.msra.mxu0 0
        %1746 = vmatprep.subr.bf16.mxu0 0
        %1747 = vmatpush2.bf16.msra.mxu0 0
        %1748 = vmatprep.mubr.bf16.mxu0 0
        %1749 = vmatmul.mubr.bf16.gmra.mxu0 %v1714
        %v1750 = vpop.f32.mrf.mxu0
        %v1751 = vadd.f32 %v1683, %v1750
        %v1752 = vpop.f32.mrf.mxu0
        %v1753 = vpop.f32.mrf.mxu0
        %v1754 = vadd.f32 %v1686, %v1753
        %v1755 = vpop.f32.mrf.mxu0
        %1756 = vdwg.mxu0
        %v1757 = vadd.f32 %v904, %v1751
        %v1758 = vadd.f32 %v905, %v1754
        %v1760 = vlaneseq
        %v1761 = vshrl.u32 %v1760, 7
        %v1762 = vsub.s32 0, %v1761
        %v1763 = vrot.slane %v801, %v1762
        %v1765 = vadd.f32 %v1757, %v1763
        %v1766 = vadd.f32 %v1758, %v1763
        %1767 = vadd.xlane.f32.xlu0 %v1765
        %v1768 = vpop.xlane.xlu0 %1767
        %1769 = vadd.xlane.f32.xlu0 %v1766
        %v1770 = vpop.xlane.xlu0 %1769
        %v1771 = vmul.f32 %v1768, %v910
        %v1772 = vmul.f32 %v1770, %v910
        %v1773 = vsub.f32 %v1765, %v1771
        %v1774 = vsub.f32 %v1766, %v1772
        %v1775 = vmul.f32 %v1773, %v1773
        %v1776 = vmul.f32 %v1774, %v1774
        %1777 = vadd.xlane.f32.xlu0 %v1775
        %v1778 = vpop.xlane.xlu0 %1777
        %1779 = vadd.xlane.f32.xlu0 %v1776
        %v1780 = vpop.xlane.xlu0 %1779
        %v1781 = vmul.f32 %v1778, %v910
        %v1782 = vmul.f32 %v1780, %v910
        %v1783 = vadd.f32 %v1781, 1e-05
        %v1784 = vadd.f32 %v1782, 1e-05
        %v1785 = vrsqrt.pop %v1783
        %v1786 = vrsqrt.pop %v1784
        %v1787 = vmul.f32 %v1773, %v1785
        %v1788 = vmul.f32 %v1774, %v1786
        %v1790 = vlaneseq
        %v1791 = vshrl.u32 %v1790, 7
        %v1792 = vsub.s32 0, %v1791
        %v1793 = vrot.slane %v750, %v1792
        %v1795 = vmul.f32 %v1787, %v1793
        %v1796 = vmul.f32 %v1788, %v1793
        %v1798 = vlaneseq
        %v1799 = vshrl.u32 %v1798, 7
        %v1800 = vsub.s32 0, %v1799
        %v1801 = vrot.slane %v751, %v1800
        %v1803 = vadd.f32 %v1795, %v1801
        %v1804 = vadd.f32 %v1796, %v1801
        %v1805 = vpack.c.bf16 %v1804, %v1803
        %v1807 = vlaneseq
        %v1808 = vshrl.u32 %v1807, 7
        %v1809 = vsub.s32 0, %v1808
        %v1810 = vrot.slane %v834, %v1809
        %v1811 = vlaneseq
        %v1812 = vshrl.u32 %v1811, 7
        %v1813 = vsub.s32 1, %v1812
        %v1814 = vrot.slane %v834, %v1813
        %v1815 = vlaneseq
        %v1816 = vshrl.u32 %v1815, 7
        %v1817 = vsub.s32 2, %v1816
        %v1818 = vrot.slane %v834, %v1817
        %v1819 = vlaneseq
        %v1820 = vshrl.u32 %v1819, 7
        %v1821 = vsub.s32 3, %v1820
        %v1822 = vrot.slane %v834, %v1821
        %v1859 = vunpack.c.l.b16 %v802
        %v1860 = vunpack.c.h.b16 %v802
        %v1861 = vunpack.c.l.b16 %v803
        %v1862 = vunpack.c.h.b16 %v803
        %v1863 = vunpack.c.l.b16 %v804
        %v1864 = vunpack.c.h.b16 %v804
        %v1865 = vunpack.c.l.b16 %v805
        %v1866 = vunpack.c.h.b16 %v805
        %v1867 = vunpack.c.l.b16 %v806
        %v1868 = vunpack.c.h.b16 %v806
        %v1869 = vunpack.c.l.b16 %v807
        %v1870 = vunpack.c.h.b16 %v807
        %v1871 = vunpack.c.l.b16 %v808
        %v1872 = vunpack.c.h.b16 %v808
        %v1873 = vunpack.c.l.b16 %v809
        %v1874 = vunpack.c.h.b16 %v809
        %v1875 = vunpack.c.l.b16 %v810
        %v1876 = vunpack.c.h.b16 %v810
        %v1877 = vunpack.c.l.b16 %v811
        %v1878 = vunpack.c.h.b16 %v811
        %v1879 = vunpack.c.l.b16 %v812
        %v1880 = vunpack.c.h.b16 %v812
        %v1881 = vunpack.c.l.b16 %v813
        %v1882 = vunpack.c.h.b16 %v813
        %v1883 = vunpack.c.l.b16 %v814
        %v1884 = vunpack.c.h.b16 %v814
        %v1885 = vunpack.c.l.b16 %v815
        %v1886 = vunpack.c.h.b16 %v815
        %v1887 = vunpack.c.l.b16 %v816
        %v1888 = vunpack.c.h.b16 %v816
        %v1889 = vunpack.c.l.b16 %v817
        %v1890 = vunpack.c.h.b16 %v817
        %v1891 = vunpack.c.l.b16 %v818
        %v1892 = vunpack.c.h.b16 %v818
        %v1893 = vunpack.c.l.b16 %v819
        %v1894 = vunpack.c.h.b16 %v819
        %v1895 = vunpack.c.l.b16 %v820
        %v1896 = vunpack.c.h.b16 %v820
        %v1897 = vunpack.c.l.b16 %v821
        %v1898 = vunpack.c.h.b16 %v821
        %v1899 = vunpack.c.l.b16 %v822
        %v1900 = vunpack.c.h.b16 %v822
        %v1901 = vunpack.c.l.b16 %v823
        %v1902 = vunpack.c.h.b16 %v823
        %v1903 = vunpack.c.l.b16 %v824
        %v1904 = vunpack.c.h.b16 %v824
        %v1905 = vunpack.c.l.b16 %v825
        %v1906 = vunpack.c.h.b16 %v825
        %v1907 = vunpack.c.l.b16 %v826
        %v1908 = vunpack.c.h.b16 %v826
        %v1909 = vunpack.c.l.b16 %v827
        %v1910 = vunpack.c.h.b16 %v827
        %v1911 = vunpack.c.l.b16 %v828
        %v1912 = vunpack.c.h.b16 %v828
        %v1913 = vunpack.c.l.b16 %v829
        %v1914 = vunpack.c.h.b16 %v829
        %v1915 = vunpack.c.l.b16 %v830
        %v1916 = vunpack.c.h.b16 %v830
        %v1917 = vunpack.c.l.b16 %v831
        %v1918 = vunpack.c.h.b16 %v831
        %v1919 = vunpack.c.l.b16 %v832
        %v1920 = vunpack.c.h.b16 %v832
        %v1921 = vunpack.c.l.b16 %v833
        %v1922 = vunpack.c.h.b16 %v833
        %v1923 = vpack.c.b16 %v1863, %v1859
        %v1924 = vpack.c.b16 %v1864, %v1860
        %v1925 = vpack.c.b16 %v1865, %v1861
        %v1926 = vpack.c.b16 %v1866, %v1862
        %v1927 = vpack.c.b16 %v1871, %v1867
        %v1928 = vpack.c.b16 %v1872, %v1868
        %v1929 = vpack.c.b16 %v1873, %v1869
        %v1930 = vpack.c.b16 %v1874, %v1870
        %v1931 = vpack.c.b16 %v1879, %v1875
        %v1932 = vpack.c.b16 %v1880, %v1876
        %v1933 = vpack.c.b16 %v1881, %v1877
        %v1934 = vpack.c.b16 %v1882, %v1878
        %v1935 = vpack.c.b16 %v1887, %v1883
        %v1936 = vpack.c.b16 %v1888, %v1884
        %v1937 = vpack.c.b16 %v1889, %v1885
        %v1938 = vpack.c.b16 %v1890, %v1886
        %v1939 = vpack.c.b16 %v1895, %v1891
        %v1940 = vpack.c.b16 %v1896, %v1892
        %v1941 = vpack.c.b16 %v1897, %v1893
        %v1942 = vpack.c.b16 %v1898, %v1894
        %v1943 = vpack.c.b16 %v1903, %v1899
        %v1944 = vpack.c.b16 %v1904, %v1900
        %v1945 = vpack.c.b16 %v1905, %v1901
        %v1946 = vpack.c.b16 %v1906, %v1902
        %v1947 = vpack.c.b16 %v1911, %v1907
        %v1948 = vpack.c.b16 %v1912, %v1908
        %v1949 = vpack.c.b16 %v1913, %v1909
        %v1950 = vpack.c.b16 %v1914, %v1910
        %v1951 = vpack.c.b16 %v1919, %v1915
        %v1952 = vpack.c.b16 %v1920, %v1916
        %v1953 = vpack.c.b16 %v1921, %v1917
        %v1954 = vpack.c.b16 %v1922, %v1918
        %1987 = vmatprep.subr.bf16.mxu0 %v1952
        %1988 = vmatpush1.bf16.msra.mxu0 %v1951
        %1989 = vmatprep.subr.bf16.mxu0 %v1948
        %1990 = vmatpush1.bf16.msra.mxu0 %v1947
        %1991 = vmatprep.subr.bf16.mxu0 %v1944
        %1992 = vmatpush1.bf16.msra.mxu0 %v1943
        %1993 = vmatprep.subr.bf16.mxu0 %v1940
        %1994 = vmatpush1.bf16.msra.mxu0 %v1939
        %1995 = vmatprep.subr.bf16.mxu0 %v1936
        %1996 = vmatpush1.bf16.msra.mxu0 %v1935
        %1997 = vmatprep.subr.bf16.mxu0 %v1932
        %1998 = vmatpush1.bf16.msra.mxu0 %v1931
        %1999 = vmatprep.subr.bf16.mxu0 %v1928
        %2000 = vmatpush1.bf16.msra.mxu0 %v1927
        %2001 = vmatprep.subr.bf16.mxu0 %v1924
        %2002 = vmatpush1.bf16.msra.mxu0 %v1923
        %2003 = vmatprep.subr.bf16.mxu0 0
        %2004 = vmatpush2.bf16.msra.mxu0 0
        %2005 = vmatprep.subr.bf16.mxu0 0
        %2006 = vmatpush2.bf16.msra.mxu0 0
        %2007 = vmatprep.subr.bf16.mxu0 0
        %2008 = vmatpush2.bf16.msra.mxu0 0
        %2009 = vmatprep.subr.bf16.mxu0 0
        %2010 = vmatpush2.bf16.msra.mxu0 0
        %2011 = vmatprep.subr.bf16.mxu0 0
        %2012 = vmatpush2.bf16.msra.mxu0 0
        %2013 = vmatprep.subr.bf16.mxu0 0
        %2014 = vmatpush2.bf16.msra.mxu0 0
        %2015 = vmatprep.subr.bf16.mxu0 0
        %2016 = vmatpush2.bf16.msra.mxu0 0
        %2017 = vmatprep.subr.bf16.mxu0 0
        %2018 = vmatpush2.bf16.msra.mxu0 0
        %2019 = vmatprep.mubr.bf16.mxu0 0
        %2020 = vmatmul.mubr.bf16.gmra.mxu0 %v1805
        %v2021 = vpop.f32.mrf.mxu0
        %v2022 = vadd.f32 %v1810, %v2021
        %v2023 = vpop.f32.mrf.mxu0
        %v2024 = vadd.f32 %v1814, %v2023
        %v2025 = vpop.f32.mrf.mxu0
        %v2026 = vadd.f32 %v1810, %v2025
        %v2027 = vpop.f32.mrf.mxu0
        %v2028 = vadd.f32 %v1814, %v2027
        %2029 = vdwg.mxu0
        %2030 = vmatprep.subr.bf16.mxu0 %v1954
        %2031 = vmatpush1.bf16.msra.mxu0 %v1953
        %2032 = vmatprep.subr.bf16.mxu0 %v1950
        %2033 = vmatpush1.bf16.msra.mxu0 %v1949
        %2034 = vmatprep.subr.bf16.mxu0 %v1946
        %2035 = vmatpush1.bf16.msra.mxu0 %v1945
        %2036 = vmatprep.subr.bf16.mxu0 %v1942
        %2037 = vmatpush1.bf16.msra.mxu0 %v1941
        %2038 = vmatprep.subr.bf16.mxu0 %v1938
        %2039 = vmatpush1.bf16.msra.mxu0 %v1937
        %2040 = vmatprep.subr.bf16.mxu0 %v1934
        %2041 = vmatpush1.bf16.msra.mxu0 %v1933
        %2042 = vmatprep.subr.bf16.mxu0 %v1930
        %2043 = vmatpush1.bf16.msra.mxu0 %v1929
        %2044 = vmatprep.subr.bf16.mxu0 %v1926
        %2045 = vmatpush1.bf16.msra.mxu0 %v1925
        %2046 = vmatprep.subr.bf16.mxu0 0
        %2047 = vmatpush2.bf16.msra.mxu0 0
        %2048 = vmatprep.subr.bf16.mxu0 0
        %2049 = vmatpush2.bf16.msra.mxu0 0
        %2050 = vmatprep.subr.bf16.mxu0 0
        %2051 = vmatpush2.bf16.msra.mxu0 0
        %2052 = vmatprep.subr.bf16.mxu0 0
        %2053 = vmatpush2.bf16.msra.mxu0 0
        %2054 = vmatprep.subr.bf16.mxu0 0
        %2055 = vmatpush2.bf16.msra.mxu0 0
        %2056 = vmatprep.subr.bf16.mxu0 0
        %2057 = vmatpush2.bf16.msra.mxu0 0
        %2058 = vmatprep.subr.bf16.mxu0 0
        %2059 = vmatpush2.bf16.msra.mxu0 0
        %2060 = vmatprep.subr.bf16.mxu0 0
        %2061 = vmatpush2.bf16.msra.mxu0 0
        %2062 = vmatprep.mubr.bf16.mxu0 0
        %2063 = vmatmul.mubr.bf16.gmra.mxu0 %v1805
        %v2064 = vpop.f32.mrf.mxu0
        %v2065 = vadd.f32 %v1818, %v2064
        %v2066 = vpop.f32.mrf.mxu0
        %v2067 = vadd.f32 %v1822, %v2066
        %v2068 = vpop.f32.mrf.mxu0
        %v2069 = vadd.f32 %v1818, %v2068
        %v2070 = vpop.f32.mrf.mxu0
        %v2071 = vadd.f32 %v1822, %v2070
        %2072 = vdwg.mxu0
        %v2073 = vmul.f32 %v2022, -1.702
        %v2074 = vmul.f32 %v2024, -1.702
        %v2075 = vmul.f32 %v2065, -1.702
        %v2076 = vmul.f32 %v2067, -1.702
        %v2077 = vmul.f32 %v2026, -1.702
        %v2078 = vmul.f32 %v2028, -1.702
        %v2079 = vmul.f32 %v2069, -1.702
        %v2080 = vmul.f32 %v2071, -1.702
        %v2081 = vmul.f32 %v2073, 1.442695
        %v2082 = vpow.pop %v2081
        %v2083 = vmul.f32 %v2074, 1.442695
        %v2084 = vpow.pop %v2083
        %v2085 = vmul.f32 %v2075, 1.442695
        %v2086 = vpow.pop %v2085
        %v2087 = vmul.f32 %v2076, 1.442695
        %v2088 = vpow.pop %v2087
        %v2089 = vmul.f32 %v2077, 1.442695
        %v2090 = vpow.pop %v2089
        %v2091 = vmul.f32 %v2078, 1.442695
        %v2092 = vpow.pop %v2091
        %v2093 = vmul.f32 %v2079, 1.442695
        %v2094 = vpow.pop %v2093
        %v2095 = vmul.f32 %v2080, 1.442695
        %v2096 = vpow.pop %v2095
        %v2097 = vadd.f32 %v2082, 1.0
        %v2098 = vadd.f32 %v2084, 1.0
        %v2099 = vadd.f32 %v2086, 1.0
        %v2100 = vadd.f32 %v2088, 1.0
        %v2101 = vadd.f32 %v2090, 1.0
        %v2102 = vadd.f32 %v2092, 1.0
        %v2103 = vadd.f32 %v2094, 1.0
        %v2104 = vadd.f32 %v2096, 1.0
        %v2105 = vrcp.pop %v2097
        %v2106 = vrcp.pop %v2098
        %v2107 = vrcp.pop %v2099
        %v2108 = vrcp.pop %v2100
        %v2109 = vrcp.pop %v2101
        %v2110 = vrcp.pop %v2102
        %v2111 = vrcp.pop %v2103
        %v2112 = vrcp.pop %v2104
        %v2113 = vmul.f32 %v2022, %v2105
        %v2114 = vmul.f32 %v2024, %v2106
        %v2115 = vmul.f32 %v2065, %v2107
        %v2116 = vmul.f32 %v2067, %v2108
        %v2117 = vmul.f32 %v2026, %v2109
        %v2118 = vmul.f32 %v2028, %v2110
        %v2119 = vmul.f32 %v2069, %v2111
        %v2120 = vmul.f32 %v2071, %v2112
        %v2121 = vpack.c.bf16 %v2117, %v2113
        %v2122 = vpack.c.bf16 %v2118, %v2114
        %v2123 = vpack.c.bf16 %v2119, %v2115
        %v2124 = vpack.c.bf16 %v2120, %v2116
        %v2126 = vlaneseq
        %v2127 = vshrl.u32 %v2126, 7
        %v2128 = vsub.s32 0, %v2127
        %v2129 = vrot.slane %v899, %v2128
        %v2195 = vunpack.c.l.b16 %v835
        %v2196 = vunpack.c.l.b16 %v836
        %v2197 = vunpack.c.l.b16 %v837
        %v2198 = vunpack.c.l.b16 %v838
        %v2199 = vunpack.c.l.b16 %v839
        %v2200 = vunpack.c.l.b16 %v840
        %v2201 = vunpack.c.l.b16 %v841
        %v2202 = vunpack.c.l.b16 %v842
        %v2203 = vunpack.c.l.b16 %v843
        %v2204 = vunpack.c.l.b16 %v844
        %v2205 = vunpack.c.l.b16 %v845
        %v2206 = vunpack.c.l.b16 %v846
        %v2207 = vunpack.c.l.b16 %v847
        %v2208 = vunpack.c.l.b16 %v848
        %v2209 = vunpack.c.l.b16 %v849
        %v2210 = vunpack.c.l.b16 %v850
        %v2211 = vunpack.c.l.b16 %v851
        %v2212 = vunpack.c.l.b16 %v852
        %v2213 = vunpack.c.l.b16 %v853
        %v2214 = vunpack.c.l.b16 %v854
        %v2215 = vunpack.c.l.b16 %v855
        %v2216 = vunpack.c.l.b16 %v856
        %v2217 = vunpack.c.l.b16 %v857
        %v2218 = vunpack.c.l.b16 %v858
        %v2219 = vunpack.c.l.b16 %v859
        %v2220 = vunpack.c.l.b16 %v860
        %v2221 = vunpack.c.l.b16 %v861
        %v2222 = vunpack.c.l.b16 %v862
        %v2223 = vunpack.c.l.b16 %v863
        %v2224 = vunpack.c.l.b16 %v864
        %v2225 = vunpack.c.l.b16 %v865
        %v2226 = vunpack.c.l.b16 %v866
        %v2227 = vunpack.c.l.b16 %v867
        %v2228 = vunpack.c.l.b16 %v868
        %v2229 = vunpack.c.l.b16 %v869
        %v2230 = vunpack.c.l.b16 %v870
        %v2231 = vunpack.c.l.b16 %v871
        %v2232 = vunpack.c.l.b16 %v872
        %v2233 = vunpack.c.l.b16 %v873
        %v2234 = vunpack.c.l.b16 %v874
        %v2235 = vunpack.c.l.b16 %v875
        %v2236 = vunpack.c.l.b16 %v876
        %v2237 = vunpack.c.l.b16 %v877
        %v2238 = vunpack.c.l.b16 %v878
        %v2239 = vunpack.c.l.b16 %v879
        %v2240 = vunpack.c.l.b16 %v880
        %v2241 = vunpack.c.l.b16 %v881
        %v2242 = vunpack.c.l.b16 %v882
        %v2243 = vunpack.c.l.b16 %v883
        %v2244 = vunpack.c.l.b16 %v884
        %v2245 = vunpack.c.l.b16 %v885
        %v2246 = vunpack.c.l.b16 %v886
        %v2247 = vunpack.c.l.b16 %v887
        %v2248 = vunpack.c.l.b16 %v888
        %v2249 = vunpack.c.l.b16 %v889
        %v2250 = vunpack.c.l.b16 %v890
        %v2251 = vunpack.c.l.b16 %v891
        %v2252 = vunpack.c.l.b16 %v892
        %v2253 = vunpack.c.l.b16 %v893
        %v2254 = vunpack.c.l.b16 %v894
        %v2255 = vunpack.c.l.b16 %v895
        %v2256 = vunpack.c.l.b16 %v896
        %v2257 = vunpack.c.l.b16 %v897
        %v2258 = vunpack.c.l.b16 %v898
        %v2259 = vpack.c.b16 %v2196, %v2195
        %v2260 = vpack.c.b16 %v2198, %v2197
        %v2261 = vpack.c.b16 %v2200, %v2199
        %v2262 = vpack.c.b16 %v2202, %v2201
        %v2263 = vpack.c.b16 %v2204, %v2203
        %v2264 = vpack.c.b16 %v2206, %v2205
        %v2265 = vpack.c.b16 %v2208, %v2207
        %v2266 = vpack.c.b16 %v2210, %v2209
        %v2267 = vpack.c.b16 %v2212, %v2211
        %v2268 = vpack.c.b16 %v2214, %v2213
        %v2269 = vpack.c.b16 %v2216, %v2215
        %v2270 = vpack.c.b16 %v2218, %v2217
        %v2271 = vpack.c.b16 %v2220, %v2219
        %v2272 = vpack.c.b16 %v2222, %v2221
        %v2273 = vpack.c.b16 %v2224, %v2223
        %v2274 = vpack.c.b16 %v2226, %v2225
        %v2275 = vpack.c.b16 %v2228, %v2227
        %v2276 = vpack.c.b16 %v2230, %v2229
        %v2277 = vpack.c.b16 %v2232, %v2231
        %v2278 = vpack.c.b16 %v2234, %v2233
        %v2279 = vpack.c.b16 %v2236, %v2235
        %v2280 = vpack.c.b16 %v2238, %v2237
        %v2281 = vpack.c.b16 %v2240, %v2239
        %v2282 = vpack.c.b16 %v2242, %v2241
        %v2283 = vpack.c.b16 %v2244, %v2243
        %v2284 = vpack.c.b16 %v2246, %v2245
        %v2285 = vpack.c.b16 %v2248, %v2247
        %v2286 = vpack.c.b16 %v2250, %v2249
        %v2287 = vpack.c.b16 %v2252, %v2251
        %v2288 = vpack.c.b16 %v2254, %v2253
        %v2289 = vpack.c.b16 %v2256, %v2255
        %v2290 = vpack.c.b16 %v2258, %v2257
        %2323 = vmatprep.subr.bf16.mxu0 0
        %2324 = vmatpush1.bf16.msra.mxu0 %v2266
        %2325 = vmatprep.subr.bf16.mxu0 0
        %2326 = vmatpush1.bf16.msra.mxu0 %v2265
        %2327 = vmatprep.subr.bf16.mxu0 0
        %2328 = vmatpush1.bf16.msra.mxu0 %v2264
        %2329 = vmatprep.subr.bf16.mxu0 0
        %2330 = vmatpush1.bf16.msra.mxu0 %v2263
        %2331 = vmatprep.subr.bf16.mxu0 0
        %2332 = vmatpush1.bf16.msra.mxu0 %v2262
        %2333 = vmatprep.subr.bf16.mxu0 0
        %2334 = vmatpush1.bf16.msra.mxu0 %v2261
        %2335 = vmatprep.subr.bf16.mxu0 0
        %2336 = vmatpush1.bf16.msra.mxu0 %v2260
        %2337 = vmatprep.subr.bf16.mxu0 0
        %2338 = vmatpush1.bf16.msra.mxu0 %v2259
        %2339 = vmatprep.subr.bf16.mxu0 0
        %2340 = vmatpush2.bf16.msra.mxu0 %v2274
        %2341 = vmatprep.subr.bf16.mxu0 0
        %2342 = vmatpush2.bf16.msra.mxu0 %v2273
        %2343 = vmatprep.subr.bf16.mxu0 0
        %2344 = vmatpush2.bf16.msra.mxu0 %v2272
        %2345 = vmatprep.subr.bf16.mxu0 0
        %2346 = vmatpush2.bf16.msra.mxu0 %v2271
        %2347 = vmatprep.subr.bf16.mxu0 0
        %2348 = vmatpush2.bf16.msra.mxu0 %v2270
        %2349 = vmatprep.subr.bf16.mxu0 0
        %2350 = vmatpush2.bf16.msra.mxu0 %v2269
        %2351 = vmatprep.subr.bf16.mxu0 0
        %2352 = vmatpush2.bf16.msra.mxu0 %v2268
        %2353 = vmatprep.subr.bf16.mxu0 0
        %2354 = vmatpush2.bf16.msra.mxu0 %v2267
        %2355 = vmatprep.mubr.bf16.mxu0 %v2122
        %2356 = vmatmul.mubr.bf16.gmra.mxu0 %v2121
        %v2357 = vpop.f32.mrf.mxu0
        %v2358 = vadd.f32 %v2129, %v2357
        %v2359 = vpop.f32.mrf.mxu0
        %v2360 = vpop.f32.mrf.mxu0
        %v2361 = vadd.f32 %v2129, %v2360
        %v2362 = vpop.f32.mrf.mxu0
        %2363 = vdwg.mxu0
        %2364 = vmatprep.subr.bf16.mxu0 0
        %2365 = vmatpush1.bf16.msra.mxu0 %v2282
        %2366 = vmatprep.subr.bf16.mxu0 0
        %2367 = vmatpush1.bf16.msra.mxu0 %v2281
        %2368 = vmatprep.subr.bf16.mxu0 0
        %2369 = vmatpush1.bf16.msra.mxu0 %v2280
        %2370 = vmatprep.subr.bf16.mxu0 0
        %2371 = vmatpush1.bf16.msra.mxu0 %v2279
        %2372 = vmatprep.subr.bf16.mxu0 0
        %2373 = vmatpush1.bf16.msra.mxu0 %v2278
        %2374 = vmatprep.subr.bf16.mxu0 0
        %2375 = vmatpush1.bf16.msra.mxu0 %v2277
        %2376 = vmatprep.subr.bf16.mxu0 0
        %2377 = vmatpush1.bf16.msra.mxu0 %v2276
        %2378 = vmatprep.subr.bf16.mxu0 0
        %2379 = vmatpush1.bf16.msra.mxu0 %v2275
        %2380 = vmatprep.subr.bf16.mxu0 0
        %2381 = vmatpush2.bf16.msra.mxu0 %v2290
        %2382 = vmatprep.subr.bf16.mxu0 0
        %2383 = vmatpush2.bf16.msra.mxu0 %v2289
        %2384 = vmatprep.subr.bf16.mxu0 0
        %2385 = vmatpush2.bf16.msra.mxu0 %v2288
        %2386 = vmatprep.subr.bf16.mxu0 0
        %2387 = vmatpush2.bf16.msra.mxu0 %v2287
        %2388 = vmatprep.subr.bf16.mxu0 0
        %2389 = vmatpush2.bf16.msra.mxu0 %v2286
        %2390 = vmatprep.subr.bf16.mxu0 0
        %2391 = vmatpush2.bf16.msra.mxu0 %v2285
        %2392 = vmatprep.subr.bf16.mxu0 0
        %2393 = vmatpush2.bf16.msra.mxu0 %v2284
        %2394 = vmatprep.subr.bf16.mxu0 0
        %2395 = vmatpush2.bf16.msra.mxu0 %v2283
        %2396 = vmatprep.mubr.bf16.mxu0 %v2124
        %2397 = vmatmul.mubr.bf16.gmra.mxu0 %v2123
        %v2398 = vpop.f32.mrf.mxu0
        %v2399 = vadd.f32 %v2358, %v2398
        %v2400 = vpop.f32.mrf.mxu0
        %v2401 = vpop.f32.mrf.mxu0
        %v2402 = vadd.f32 %v2361, %v2401
        %v2403 = vpop.f32.mrf.mxu0
        %2404 = vdwg.mxu0
        %v2405 = vadd.f32 %v1765, %v2399
        %v2406 = vadd.f32 %v1766, %v2402
        %2407 = vst [vmem:[#allocation2] sm:$0xff] %v2405
        %2408 = vst [vmem:[#allocation2 + $0x8] sm:$0xff] %v2406
        %p2409 = scmp.eq.s32.totalorder %s32, 1
        // Predicated region
        $region93: #{clip_forward.6} parent=79 // pred_check
          %p2410 = pneg %p2409
        $region94: #{clip_forward.6} parent=79 // pred_check_branch
          %2412 = sbr.rel (%p2410) target = $region96
        $region95: #{clip_forward.6} parent=79 // pred_region
          %v2413 = vld [vmem:[#allocation2] sm:$0xff]
          %v2414 = vld [vmem:[#allocation2 + $0x8] sm:$0xff]
          %2415 = vst [vmem:[%s15] sm:$0xff] %v2413
          %2416 = vst [vmem:[%s15 + $0x8] sm:$0xff] %v2414
        $region96: #{clip_forward.6} parent=79 // pred_fallthru
          _
        // Predicated region
        $region97: #{clip_forward.6} parent=79 // pred_check
          %p2417 = pneg %p420
        $region98: #{clip_forward.6} parent=79 // pred_check_branch
          %2419 = sbr.rel (%p2417) target = $region100
        $region99: #{clip_forward.6} parent=79 // pred_region
          _
        $region100: #{clip_forward.6} parent=79 // pred_fallthru
          _
        // Predicated region
        $region101: #{clip_forward.6} parent=79 // pred_check
          %p2420 = pneg %p420
        $region102: #{clip_forward.6} parent=79 // pred_check_branch
          %2422 = sbr.rel (%p2420) target = $region104
        $region103: #{clip_forward.6} parent=79 // pred_region
          _
        $region104: #{clip_forward.6} parent=79 // pred_fallthru
          _
      $region80: #{clip_forward.6} parent=5 // pred_fallthru
        _
      %p2423 = scmp.le.s32.totalorder 2, %s27
      // Predicated region
      $region105: #{clip_forward.6} parent=5 // pred_check
        %p2424 = pneg %p2423
      $region106: #{clip_forward.6} parent=5 // pred_check_branch
        %2426 = sbr.rel (%p2424) target = $region108
      $region107: #{clip_forward.6} parent=5 // pred_region
        %s2427 = ssub.s32 %s27, 2
      $region108: #{clip_forward.6} parent=5 // pred_fallthru
        _
    $region6: #{clip_forward.6} parent=1 // loop_footer
      %s31 = sadd.s32 1, %s27
    $region7: #{clip_forward.6} parent=1 // loop_footer_branch
      %26 = sbr.rel target = $region3
    $region8: #{clip_forward.6} parent=1 // loop_exit
      _
    %2428 = vsyncpa [#allocation4], 1
    %s2429 = scalar_lea.sflag [#allocation4], 1
    %2430 = vsyncpa %s2429, 1
    %2431 = vsyncpa [#allocation6], 1
    %s2432 = scalar_lea.sflag [#allocation6], 1
    %2433 = vsyncpa %s2432, 1

// kernel: clip_forward.8
$region0: #{clip_forward.8}
  #allocation0 [shape = 'u32[]', space=smem, size = 0x4, offset = 0x4, fixed_abs, tag = 'smem constant byte address 0x4 - core index']
  #allocation1 [shape = 'u32[144,128]{1,0:T(1,128)}', space=vmem, size = 0x12000, scoped, tag = 'internal scratch']
  #allocation2 [shape = 'f32[2,8,128]{2,1,0:T(8,128)}', space=vmem, size = 0x2000, scoped, tag = 'scratch operand']
  %s0 = inlined_call_operand.vmem [shape: f32[2,8,128], index: 0, kind: input, shape index: {}]
  %s1 = inlined_call_operand.vmem [shape: f32[1,128], index: 1, kind: input, shape index: {}]
  %s2 = inlined_call_operand.vmem [shape: f32[1,128], index: 2, kind: input, shape index: {}]
  %s3 = inlined_call_operand.vmem [shape: f32[2,1,128], index: 3, kind: input, shape index: {}]
  %s4 = inlined_call_operand.vmem [shape: f32[2,1,128], index: 4, kind: input, shape index: {}]
  %s5 = inlined_call_operand.vmem [shape: bf16[2,128,384], index: 5, kind: input, shape index: {}]
  %s6 = inlined_call_operand.vmem [shape: f32[2,1,384], index: 6, kind: input, shape index: {}]
  %s7 = inlined_call_operand.vmem [shape: bf16[2,128,128], index: 7, kind: input, shape index: {}]
  %s8 = inlined_call_operand.vmem [shape: f32[2,1,128], index: 8, kind: input, shape index: {}]
  %s9 = inlined_call_operand.vmem [shape: f32[2,1,128], index: 9, kind: input, shape index: {}]
  %s10 = inlined_call_operand.vmem [shape: f32[2,1,128], index: 10, kind: input, shape index: {}]
  %s11 = inlined_call_operand.vmem [shape: bf16[2,128,512], index: 11, kind: input, shape index: {}]
  %s12 = inlined_call_operand.vmem [shape: f32[2,1,512], index: 12, kind: input, shape index: {}]
  %s13 = inlined_call_operand.vmem [shape: bf16[2,512,128], index: 13, kind: input, shape index: {}]
  %s14 = inlined_call_operand.vmem [shape: f32[2,1,128], index: 14, kind: input, shape index: {}]
  %s15 = inlined_call_operand.vmem [shape: f32[2,8,128], index: 15, kind: output, shape index: {}]
  %s16 = sld [smem:[#allocation0]]
  $region101: #{clip_forward.8} parent=0
    _
  %s18 = ssub.s32 1, %s16
  %s19 = scalar_select 0, %s18, %s16
  loop: start=0, step=1, limit=4
  $region2: #{clip_forward.8} parent=0 // loop_pre_header
    _
  $region3: #{clip_forward.8} parent=0 // loop_header
    %s21 = sphi 0, %s25
    %p22 = scmp.ge.s32.totalorder %s21, 4
    %s29 = sphi 0, %s29
    %s31 = sphi 0, %s29
    %s32 = sphi 0, %s31
    %s46 = sphi 0, %s32
    %s50 = sphi 0, %s50
    %s52 = sphi 0, %s50
    %s53 = sphi 0, %s52
    %s67 = sphi 0, %s53
    %s71 = sphi 0, %s71
    %s73 = sphi 0, %s71
    %s74 = sphi 0, %s73
    %s88 = sphi 0, %s74
    %s94 = sphi 0, %s96
    %s97 = sphi 0, %s94
    %s98 = sphi 0, %s97
    %s114 = sphi 0, %s98
    %s120 = sphi 0, %s122
    %s123 = sphi 0, %s120
    %s124 = sphi 0, %s123
    %s140 = sphi 0, %s124
    %s146 = sphi 0, %s148
    %s149 = sphi 0, %s146
    %s150 = sphi 0, %s149
    %s166 = sphi 0, %s150
    %s172 = sphi 0, %s174
    %s175 = sphi 0, %s172
    %s176 = sphi 0, %s175
    %s192 = sphi 0, %s176
    %s198 = sphi 0, %s200
    %s201 = sphi 0, %s198
    %s202 = sphi 0, %s201
    %s218 = sphi 0, %s202
    %s224 = sphi 0, %s226
    %s227 = sphi 0, %s224
    %s228 = sphi 0, %s227
    %s244 = sphi 0, %s228
    %s250 = sphi 0, %s252
    %s253 = sphi 0, %s250
    %s254 = sphi 0, %s253
    %s270 = sphi 0, %s254
    %s276 = sphi 0, %s278
    %s279 = sphi 0, %s276
    %s280 = sphi 0, %s279
    %s296 = sphi 0, %s280
    %s302 = sphi 0, %s304
    %s305 = sphi 0, %s302
    %s306 = sphi 0, %s305
    %s322 = sphi 0, %s306
    %s328 = sphi 0, %s330
    %s331 = sphi 0, %s328
    %s332 = sphi 0, %s331
    %s348 = sphi 0, %s332
    %s354 = sphi 0, %s356
    %s357 = sphi 0, %s354
    %s358 = sphi 0, %s357
    %s374 = sphi 0, %s358
    %s380 = sphi 0, %s382
    %s383 = sphi 0, %s380
    %s384 = sphi 0, %s383
    %s400 = sphi 0, %s384
    %s404 = sphi 0, %s404
    %s406 = sphi 0, %s404
    %s407 = sphi 0, %s406
    %s421 = sphi 0, %s407
  $region4: #{clip_forward.8} parent=0 // loop_header_branch
    %24 = sbr.rel (%p22) target = $region8
  $region5: #{clip_forward.8} parent=0 // loop_body
    %s26 = ssub.s32 %s21, 1
    %s27 = ssub.s32 %s21, 2
    %s28 = sadd.s32 %s21, 1
    %s30 = sadd.s32 %s29, 1
    %p33 = scmp.eq.s32.totalorder %s21, 1
    %p34 = scmp.ne.s32.totalorder %s29, %s31
    %p35 = scmp.eq.s32.totalorder %s21, 0
    %p36 = por %p34, %p35
    %p37 = scmp.ne.s32.totalorder %s29, %s31
    %p38 = scmp.eq.s32.totalorder %s26, 1
    %p39 = por %p37, %p38
    %p40 = scmp.ne.s32.totalorder %s31, %s32
    %p41 = scmp.eq.s32.totalorder %s26, 0
    %p42 = por %p40, %p41
    %p43 = scmp.ne.s32.totalorder %s31, %s32
    %p44 = scmp.eq.s32.totalorder %s27, 1
    %p45 = por %p43, %p44
    %p47 = scmp.ne.s32.totalorder %s32, %s46
    %p48 = scmp.eq.s32.totalorder %s27, 0
    %p49 = por %p47, %p48
    %s51 = sadd.s32 %s50, 1
    %p54 = scmp.eq.s32.totalorder %s21, 1
    %p55 = scmp.ne.s32.totalorder %s50, %s52
    %p56 = scmp.eq.s32.totalorder %s21, 0
    %p57 = por %p55, %p56
    %p58 = scmp.ne.s32.totalorder %s50, %s52
    %p59 = scmp.eq.s32.totalorder %s26, 1
    %p60 = por %p58, %p59
    %p61 = scmp.ne.s32.totalorder %s52, %s53
    %p62 = scmp.eq.s32.totalorder %s26, 0
    %p63 = por %p61, %p62
    %p64 = scmp.ne.s32.totalorder %s52, %s53
    %p65 = scmp.eq.s32.totalorder %s27, 1
    %p66 = por %p64, %p65
    %p68 = scmp.ne.s32.totalorder %s53, %s67
    %p69 = scmp.eq.s32.totalorder %s27, 0
    %p70 = por %p68, %p69
    %s72 = sadd.s32 %s71, 1
    %p75 = scmp.eq.s32.totalorder %s21, 1
    %p76 = scmp.ne.s32.totalorder %s71, %s73
    %p77 = scmp.eq.s32.totalorder %s21, 0
    %p78 = por %p76, %p77
    %p79 = scmp.ne.s32.totalorder %s71, %s73
    %p80 = scmp.eq.s32.totalorder %s26, 1
    %p81 = por %p79, %p80
    %p82 = scmp.ne.s32.totalorder %s73, %s74
    %p83 = scmp.eq.s32.totalorder %s26, 0
    %p84 = por %p82, %p83
    %p85 = scmp.ne.s32.totalorder %s73, %s74
    %p86 = scmp.eq.s32.totalorder %s27, 1
    %p87 = por %p85, %p86
    %p89 = scmp.ne.s32.totalorder %s74, %s88
    %p90 = scmp.eq.s32.totalorder %s27, 0
    %p91 = por %p89, %p90
    %s92 = ssub.s32 %s21, %s28
    %p93 = scmp.eq.s32.totalorder %s92, 0
    %s95 = sadd.s32 %s94, 1
    %s96 = scalar_select %p93, %s94, %s95
    %p99 = pneg %p93
    %p100 = scmp.eq.s32.totalorder %s21, 1
    %p101 = por %p99, %p100
    %p102 = scmp.ne.s32.totalorder %s94, %s97
    %p103 = scmp.eq.s32.totalorder %s21, 0
    %p104 = por %p102, %p103
    %p105 = scmp.ne.s32.totalorder %s94, %s97
    %p106 = scmp.eq.s32.totalorder %s26, 1
    %p107 = por %p105, %p106
    %p108 = scmp.ne.s32.totalorder %s97, %s98
    %p109 = scmp.eq.s32.totalorder %s26, 0
    %p110 = por %p108, %p109
    %p111 = scmp.ne.s32.totalorder %s97, %s98
    %p112 = scmp.eq.s32.totalorder %s27, 1
    %p113 = por %p111, %p112
    %p115 = scmp.ne.s32.totalorder %s98, %s114
    %p116 = scmp.eq.s32.totalorder %s27, 0
    %p117 = por %p115, %p116
    %s118 = ssub.s32 %s21, %s28
    %p119 = scmp.eq.s32.totalorder %s118, 0
    %s121 = sadd.s32 %s120, 1
    %s122 = scalar_select %p119, %s120, %s121
    %p125 = pneg %p119
    %p126 = scmp.eq.s32.totalorder %s21, 1
    %p127 = por %p125, %p126
    %p128 = scmp.ne.s32.totalorder %s120, %s123
    %p129 = scmp.eq.s32.totalorder %s21, 0
    %p130 = por %p128, %p129
    %p131 = scmp.ne.s32.totalorder %s120, %s123
    %p132 = scmp.eq.s32.totalorder %s26, 1
    %p133 = por %p131, %p132
    %p134 = scmp.ne.s32.totalorder %s123, %s124
    %p135 = scmp.eq.s32.totalorder %s26, 0
    %p136 = por %p134, %p135
    %p137 = scmp.ne.s32.totalorder %s123, %s124
    %p138 = scmp.eq.s32.totalorder %s27, 1
    %p139 = por %p137, %p138
    %p141 = scmp.ne.s32.totalorder %s124, %s140
    %p142 = scmp.eq.s32.totalorder %s27, 0
    %p143 = por %p141, %p142
    %s144 = ssub.s32 %s21, %s28
    %p145 = scmp.eq.s32.totalorder %s144, 0
    %s147 = sadd.s32 %s146, 1
    %s148 = scalar_select %p145, %s146, %s147
    %p151 = pneg %p145
    %p152 = scmp.eq.s32.totalorder %s21, 1
    %p153 = por %p151, %p152
    %p154 = scmp.ne.s32.totalorder %s146, %s149
    %p155 = scmp.eq.s32.totalorder %s21, 0
    %p156 = por %p154, %p155
    %p157 = scmp.ne.s32.totalorder %s146, %s149
    %p158 = scmp.eq.s32.totalorder %s26, 1
    %p159 = por %p157, %p158
    %p160 = scmp.ne.s32.totalorder %s149, %s150
    %p161 = scmp.eq.s32.totalorder %s26, 0
    %p162 = por %p160, %p161
    %p163 = scmp.ne.s32.totalorder %s149, %s150
    %p164 = scmp.eq.s32.totalorder %s27, 1
    %p165 = por %p163, %p164
    %p167 = scmp.ne.s32.totalorder %s150, %s166
    %p168 = scmp.eq.s32.totalorder %s27, 0
    %p169 = por %p167, %p168
    %s170 = ssub.s32 %s21, %s28
    %p171 = scmp.eq.s32.totalorder %s170, 0
    %s173 = sadd.s32 %s172, 1
    %s174 = scalar_select %p171, %s172, %s173
    %p177 = pneg %p171
    %p178 = scmp.eq.s32.totalorder %s21, 1
    %p179 = por %p177, %p178
    %p180 = scmp.ne.s32.totalorder %s172, %s175
    %p181 = scmp.eq.s32.totalorder %s21, 0
    %p182 = por %p180, %p181
    %p183 = scmp.ne.s32.totalorder %s172, %s175
    %p184 = scmp.eq.s32.totalorder %s26, 1
    %p185 = por %p183, %p184
    %p186 = scmp.ne.s32.totalorder %s175, %s176
    %p187 = scmp.eq.s32.totalorder %s26, 0
    %p188 = por %p186, %p187
    %p189 = scmp.ne.s32.totalorder %s175, %s176
    %p190 = scmp.eq.s32.totalorder %s27, 1
    %p191 = por %p189, %p190
    %p193 = scmp.ne.s32.totalorder %s176, %s192
    %p194 = scmp.eq.s32.totalorder %s27, 0
    %p195 = por %p193, %p194
    %s196 = ssub.s32 %s21, %s28
    %p197 = scmp.eq.s32.totalorder %s196, 0
    %s199 = sadd.s32 %s198, 1
    %s200 = scalar_select %p197, %s198, %s199
    %p203 = pneg %p197
    %p204 = scmp.eq.s32.totalorder %s21, 1
    %p205 = por %p203, %p204
    %p206 = scmp.ne.s32.totalorder %s198, %s201
    %p207 = scmp.eq.s32.totalorder %s21, 0
    %p208 = por %p206, %p207
    %p209 = scmp.ne.s32.totalorder %s198, %s201
    %p210 = scmp.eq.s32.totalorder %s26, 1
    %p211 = por %p209, %p210
    %p212 = scmp.ne.s32.totalorder %s201, %s202
    %p213 = scmp.eq.s32.totalorder %s26, 0
    %p214 = por %p212, %p213
    %p215 = scmp.ne.s32.totalorder %s201, %s202
    %p216 = scmp.eq.s32.totalorder %s27, 1
    %p217 = por %p215, %p216
    %p219 = scmp.ne.s32.totalorder %s202, %s218
    %p220 = scmp.eq.s32.totalorder %s27, 0
    %p221 = por %p219, %p220
    %s222 = ssub.s32 %s21, %s28
    %p223 = scmp.eq.s32.totalorder %s222, 0
    %s225 = sadd.s32 %s224, 1
    %s226 = scalar_select %p223, %s224, %s225
    %p229 = pneg %p223
    %p230 = scmp.eq.s32.totalorder %s21, 1
    %p231 = por %p229, %p230
    %p232 = scmp.ne.s32.totalorder %s224, %s227
    %p233 = scmp.eq.s32.totalorder %s21, 0
    %p234 = por %p232, %p233
    %p235 = scmp.ne.s32.totalorder %s224, %s227
    %p236 = scmp.eq.s32.totalorder %s26, 1
    %p237 = por %p235, %p236
    %p238 = scmp.ne.s32.totalorder %s227, %s228
    %p239 = scmp.eq.s32.totalorder %s26, 0
    %p240 = por %p238, %p239
    %p241 = scmp.ne.s32.totalorder %s227, %s228
    %p242 = scmp.eq.s32.totalorder %s27, 1
    %p243 = por %p241, %p242
    %p245 = scmp.ne.s32.totalorder %s228, %s244
    %p246 = scmp.eq.s32.totalorder %s27, 0
    %p247 = por %p245, %p246
    %s248 = ssub.s32 %s21, %s28
    %p249 = scmp.eq.s32.totalorder %s248, 0
    %s251 = sadd.s32 %s250, 1
    %s252 = scalar_select %p249, %s250, %s251
    %p255 = pneg %p249
    %p256 = scmp.eq.s32.totalorder %s21, 1
    %p257 = por %p255, %p256
    %p258 = scmp.ne.s32.totalorder %s250, %s253
    %p259 = scmp.eq.s32.totalorder %s21, 0
    %p260 = por %p258, %p259
    %p261 = scmp.ne.s32.totalorder %s250, %s253
    %p262 = scmp.eq.s32.totalorder %s26, 1
    %p263 = por %p261, %p262
    %p264 = scmp.ne.s32.totalorder %s253, %s254
    %p265 = scmp.eq.s32.totalorder %s26, 0
    %p266 = por %p264, %p265
    %p267 = scmp.ne.s32.totalorder %s253, %s254
    %p268 = scmp.eq.s32.totalorder %s27, 1
    %p269 = por %p267, %p268
    %p271 = scmp.ne.s32.totalorder %s254, %s270
    %p272 = scmp.eq.s32.totalorder %s27, 0
    %p273 = por %p271, %p272
    %s274 = ssub.s32 %s21, %s28
    %p275 = scmp.eq.s32.totalorder %s274, 0
    %s277 = sadd.s32 %s276, 1
    %s278 = scalar_select %p275, %s276, %s277
    %p281 = pneg %p275
    %p282 = scmp.eq.s32.totalorder %s21, 1
    %p283 = por %p281, %p282
    %p284 = scmp.ne.s32.totalorder %s276, %s279
    %p285 = scmp.eq.s32.totalorder %s21, 0
    %p286 = por %p284, %p285
    %p287 = scmp.ne.s32.totalorder %s276, %s279
    %p288 = scmp.eq.s32.totalorder %s26, 1
    %p289 = por %p287, %p288
    %p290 = scmp.ne.s32.totalorder %s279, %s280
    %p291 = scmp.eq.s32.totalorder %s26, 0
    %p292 = por %p290, %p291
    %p293 = scmp.ne.s32.totalorder %s279, %s280
    %p294 = scmp.eq.s32.totalorder %s27, 1
    %p295 = por %p293, %p294
    %p297 = scmp.ne.s32.totalorder %s280, %s296
    %p298 = scmp.eq.s32.totalorder %s27, 0
    %p299 = por %p297, %p298
    %s300 = ssub.s32 %s21, %s28
    %p301 = scmp.eq.s32.totalorder %s300, 0
    %s303 = sadd.s32 %s302, 1
    %s304 = scalar_select %p301, %s302, %s303
    %p307 = pneg %p301
    %p308 = scmp.eq.s32.totalorder %s21, 1
    %p309 = por %p307, %p308
    %p310 = scmp.ne.s32.totalorder %s302, %s305
    %p311 = scmp.eq.s32.totalorder %s21, 0
    %p312 = por %p310, %p311
    %p313 = scmp.ne.s32.totalorder %s302, %s305
    %p314 = scmp.eq.s32.totalorder %s26, 1
    %p315 = por %p313, %p314
    %p316 = scmp.ne.s32.totalorder %s305, %s306
    %p317 = scmp.eq.s32.totalorder %s26, 0
    %p318 = por %p316, %p317
    %p319 = scmp.ne.s32.totalorder %s305, %s306
    %p320 = scmp.eq.s32.totalorder %s27, 1
    %p321 = por %p319, %p320
    %p323 = scmp.ne.s32.totalorder %s306, %s322
    %p324 = scmp.eq.s32.totalorder %s27, 0
    %p325 = por %p323, %p324
    %s326 = ssub.s32 %s21, %s28
    %p327 = scmp.eq.s32.totalorder %s326, 0
    %s329 = sadd.s32 %s328, 1
    %s330 = scalar_select %p327, %s328, %s329
    %p333 = pneg %p327
    %p334 = scmp.eq.s32.totalorder %s21, 1
    %p335 = por %p333, %p334
    %p336 = scmp.ne.s32.totalorder %s328, %s331
    %p337 = scmp.eq.s32.totalorder %s21, 0
    %p338 = por %p336, %p337
    %p339 = scmp.ne.s32.totalorder %s328, %s331
    %p340 = scmp.eq.s32.totalorder %s26, 1
    %p341 = por %p339, %p340
    %p342 = scmp.ne.s32.totalorder %s331, %s332
    %p343 = scmp.eq.s32.totalorder %s26, 0
    %p344 = por %p342, %p343
    %p345 = scmp.ne.s32.totalorder %s331, %s332
    %p346 = scmp.eq.s32.totalorder %s27, 1
    %p347 = por %p345, %p346
    %p349 = scmp.ne.s32.totalorder %s332, %s348
    %p350 = scmp.eq.s32.totalorder %s27, 0
    %p351 = por %p349, %p350
    %s352 = ssub.s32 %s21, %s28
    %p353 = scmp.eq.s32.totalorder %s352, 0
    %s355 = sadd.s32 %s354, 1
    %s356 = scalar_select %p353, %s354, %s355
    %p359 = pneg %p353
    %p360 = scmp.eq.s32.totalorder %s21, 1
    %p361 = por %p359, %p360
    %p362 = scmp.ne.s32.totalorder %s354, %s357
    %p363 = scmp.eq.s32.totalorder %s21, 0
    %p364 = por %p362, %p363
    %p365 = scmp.ne.s32.totalorder %s354, %s357
    %p366 = scmp.eq.s32.totalorder %s26, 1
    %p367 = por %p365, %p366
    %p368 = scmp.ne.s32.totalorder %s357, %s358
    %p369 = scmp.eq.s32.totalorder %s26, 0
    %p370 = por %p368, %p369
    %p371 = scmp.ne.s32.totalorder %s357, %s358
    %p372 = scmp.eq.s32.totalorder %s27, 1
    %p373 = por %p371, %p372
    %p375 = scmp.ne.s32.totalorder %s358, %s374
    %p376 = scmp.eq.s32.totalorder %s27, 0
    %p377 = por %p375, %p376
    %s378 = ssub.s32 %s21, %s28
    %p379 = scmp.eq.s32.totalorder %s378, 0
    %s381 = sadd.s32 %s380, 1
    %s382 = scalar_select %p379, %s380, %s381
    %p385 = pneg %p379
    %p386 = scmp.eq.s32.totalorder %s21, 1
    %p387 = por %p385, %p386
    %p388 = scmp.ne.s32.totalorder %s380, %s383
    %p389 = scmp.eq.s32.totalorder %s21, 0
    %p390 = por %p388, %p389
    %p391 = scmp.ne.s32.totalorder %s380, %s383
    %p392 = scmp.eq.s32.totalorder %s26, 1
    %p393 = por %p391, %p392
    %p394 = scmp.ne.s32.totalorder %s383, %s384
    %p395 = scmp.eq.s32.totalorder %s26, 0
    %p396 = por %p394, %p395
    %p397 = scmp.ne.s32.totalorder %s383, %s384
    %p398 = scmp.eq.s32.totalorder %s27, 1
    %p399 = por %p397, %p398
    %p401 = scmp.ne.s32.totalorder %s384, %s400
    %p402 = scmp.eq.s32.totalorder %s27, 0
    %p403 = por %p401, %p402
    %s405 = sadd.s32 %s404, 1
    %p408 = scmp.eq.s32.totalorder %s21, 1
    %p409 = scmp.ne.s32.totalorder %s404, %s406
    %p410 = scmp.eq.s32.totalorder %s21, 0
    %p411 = por %p409, %p410
    %p412 = scmp.ne.s32.totalorder %s404, %s406
    %p413 = scmp.eq.s32.totalorder %s26, 1
    %p414 = por %p412, %p413
    %p415 = scmp.ne.s32.totalorder %s406, %s407
    %p416 = scmp.eq.s32.totalorder %s26, 0
    %p417 = por %p415, %p416
    %p418 = scmp.ne.s32.totalorder %s406, %s407
    %p419 = scmp.eq.s32.totalorder %s27, 1
    %p420 = por %p418, %p419
    %p422 = scmp.ne.s32.totalorder %s407, %s421
    %p423 = scmp.eq.s32.totalorder %s27, 0
    %p424 = por %p422, %p423
    %p425 = scmp.le.s32.totalorder 1, %s21
    %p426 = scmp.lt.s32.totalorder %s21, 3
    %p427 = pnand %p425, %p426
    %p428 = pneg %p427
    // Predicated region
    $region9: #{clip_forward.8} parent=5 // pred_check
      _
    $region10: #{clip_forward.8} parent=5 // pred_check_branch
      %430 = sbr.rel (%p427) target = $region12
    $region11: #{clip_forward.8} parent=5 // pred_region
      %s431 = ssub.s32 %s21, 1
      // Predicated region
      $region13: #{clip_forward.8} parent=11 // pred_check
        %p432 = pneg %p42
      $region14: #{clip_forward.8} parent=11 // pred_check_branch
        %434 = sbr.rel (%p432) target = $region16
      $region15: #{clip_forward.8} parent=11 // pred_region
        _
      $region16: #{clip_forward.8} parent=11 // pred_fallthru
        _
      // Predicated region
      $region17: #{clip_forward.8} parent=11 // pred_check
        %p435 = pneg %p63
      $region18: #{clip_forward.8} parent=11 // pred_check_branch
        %437 = sbr.rel (%p435) target = $region20
      $region19: #{clip_forward.8} parent=11 // pred_region
        _
      $region20: #{clip_forward.8} parent=11 // pred_fallthru
        _
      // Predicated region
      $region21: #{clip_forward.8} parent=11 // pred_check
        %p438 = pneg %p84
      $region22: #{clip_forward.8} parent=11 // pred_check_branch
        %440 = sbr.rel (%p438) target = $region24
      $region23: #{clip_forward.8} parent=11 // pred_region
        _
      $region24: #{clip_forward.8} parent=11 // pred_fallthru
        _
    $region12: #{clip_forward.8} parent=5 // pred_fallthru
      _
    %p441 = scmp.lt.s32.totalorder %s21, 2
    // Predicated region
    $region25: #{clip_forward.8} parent=5 // pred_check
      %p442 = pneg %p441
    $region26: #{clip_forward.8} parent=5 // pred_check_branch
      %444 = sbr.rel (%p442) target = $region28
    $region27: #{clip_forward.8} parent=5 // pred_region
      // Predicated region
      $region29: #{clip_forward.8} parent=27 // pred_check
        %p445 = pneg %p104
      $region30: #{clip_forward.8} parent=27 // pred_check_branch
        %447 = sbr.rel (%p445) target = $region32
      $region31: #{clip_forward.8} parent=27 // pred_region
        %p448 = scmp.lt.s32.totalorder %s21, 1
        %s449 = scalar_select %p448, %s21, 1
        %s450 = scalar_lea.vmem %s3, %s449
      $region32: #{clip_forward.8} parent=27 // pred_fallthru
        _
      // Predicated region
      $region33: #{clip_forward.8} parent=27 // pred_check
        %p451 = pneg %p130
      $region34: #{clip_forward.8} parent=27 // pred_check_branch
        %453 = sbr.rel (%p451) target = $region36
      $region35: #{clip_forward.8} parent=27 // pred_region
        %p454 = scmp.lt.s32.totalorder %s21, 1
        %s455 = scalar_select %p454, %s21, 1
        %s456 = scalar_lea.vmem %s4, %s455
      $region36: #{clip_forward.8} parent=27 // pred_fallthru
        _
      // Predicated region
      $region37: #{clip_forward.8} parent=27 // pred_check
        %p457 = pneg %p156
      $region38: #{clip_forward.8} parent=27 // pred_check_branch
        %459 = sbr.rel (%p457) target = $region40
      $region39: #{clip_forward.8} parent=27 // pred_region
        %p460 = scmp.lt.s32.totalorder %s21, 1
        %s461 = scalar_select %p460, %s21, 1
        %s462 = smul.addr %s461, 48
        %s463 = smul.addr %s462, 4
        %s464 = scalar_lea.vmem %s5, %s463
      $region40: #{clip_forward.8} parent=27 // pred_fallthru
        _
      // Predicated region
      $region41: #{clip_forward.8} parent=27 // pred_check
        %p465 = pneg %p182
      $region42: #{clip_forward.8} parent=27 // pred_check_branch
        %467 = sbr.rel (%p465) target = $region44
      $region43: #{clip_forward.8} parent=27 // pred_region
        %p468 = scmp.lt.s32.totalorder %s21, 1
        %s469 = scalar_select %p468, %s21, 1
        %s470 = smul.addr %s469, 3
        %s471 = scalar_lea.vmem %s6, %s470
      $region44: #{clip_forward.8} parent=27 // pred_fallthru
        _
      // Predicated region
      $region45: #{clip_forward.8} parent=27 // pred_check
        %p472 = pneg %p208
      $region46: #{clip_forward.8} parent=27 // pred_check_branch
        %474 = sbr.rel (%p472) target = $region48
      $region47: #{clip_forward.8} parent=27 // pred_region
        %p475 = scmp.lt.s32.totalorder %s21, 1
        %s476 = scalar_select %p475, %s21, 1
        %s477 = smul.addr %s476, 16
        %s478 = smul.addr %s477, 4
        %s479 = scalar_lea.vmem %s7, %s478
      $region48: #{clip_forward.8} parent=27 // pred_fallthru
        _
      // Predicated region
      $region49: #{clip_forward.8} parent=27 // pred_check
        %p480 = pneg %p234
      $region50: #{clip_forward.8} parent=27 // pred_check_branch
        %482 = sbr.rel (%p480) target = $region52
      $region51: #{clip_forward.8} parent=27 // pred_region
        %p483 = scmp.lt.s32.totalorder %s21, 1
        %s484 = scalar_select %p483, %s21, 1
        %s485 = scalar_lea.vmem %s8, %s484
      $region52: #{clip_forward.8} parent=27 // pred_fallthru
        _
      // Predicated region
      $region53: #{clip_forward.8} parent=27 // pred_check
        %p486 = pneg %p260
      $region54: #{clip_forward.8} parent=27 // pred_check_branch
        %488 = sbr.rel (%p486) target = $region56
      $region55: #{clip_forward.8} parent=27 // pred_region
        %p489 = scmp.lt.s32.totalorder %s21, 1
        %s490 = scalar_select %p489, %s21, 1
        %s491 = scalar_lea.vmem %s9, %s490
      $region56: #{clip_forward.8} parent=27 // pred_fallthru
        _
      // Predicated region
      $region57: #{clip_forward.8} parent=27 // pred_check
        %p492 = pneg %p286
      $region58: #{clip_forward.8} parent=27 // pred_check_branch
        %494 = sbr.rel (%p492) target = $region60
      $region59: #{clip_forward.8} parent=27 // pred_region
        %p495 = scmp.lt.s32.totalorder %s21, 1
        %s496 = scalar_select %p495, %s21, 1
        %s497 = scalar_lea.vmem %s10, %s496
      $region60: #{clip_forward.8} parent=27 // pred_fallthru
        _
      // Predicated region
      $region61: #{clip_forward.8} parent=27 // pred_check
        %p498 = pneg %p312
      $region62: #{clip_forward.8} parent=27 // pred_check_branch
        %500 = sbr.rel (%p498) target = $region64
      $region63: #{clip_forward.8} parent=27 // pred_region
        %p501 = scmp.lt.s32.totalorder %s21, 1
        %s502 = scalar_select %p501, %s21, 1
        %s503 = smul.addr %s502, 64
        %s504 = smul.addr %s503, 4
        %s505 = scalar_lea.vmem %s11, %s504
      $region64: #{clip_forward.8} parent=27 // pred_fallthru
        _
      // Predicated region
      $region65: #{clip_forward.8} parent=27 // pred_check
        %p506 = pneg %p338
      $region66: #{clip_forward.8} parent=27 // pred_check_branch
        %508 = sbr.rel (%p506) target = $region68
      $region67: #{clip_forward.8} parent=27 // pred_region
        %p509 = scmp.lt.s32.totalorder %s21, 1
        %s510 = scalar_select %p509, %s21, 1
        %s511 = smul.addr %s510, 4
        %s512 = scalar_lea.vmem %s12, %s511
      $region68: #{clip_forward.8} parent=27 // pred_fallthru
        _
      // Predicated region
      $region69: #{clip_forward.8} parent=27 // pred_check
        %p513 = pneg %p364
      $region70: #{clip_forward.8} parent=27 // pred_check_branch
        %515 = sbr.rel (%p513) target = $region72
      $region71: #{clip_forward.8} parent=27 // pred_region
        %p516 = scmp.lt.s32.totalorder %s21, 1
        %s517 = scalar_select %p516, %s21, 1
        %s518 = smul.addr %s517, 64
        %s519 = smul.addr %s518, 4
        %s520 = scalar_lea.vmem %s13, %s519
      $region72: #{clip_forward.8} parent=27 // pred_fallthru
        _
      // Predicated region
      $region73: #{clip_forward.8} parent=27 // pred_check
        %p521 = pneg %p390
      $region74: #{clip_forward.8} parent=27 // pred_check_branch
        %523 = sbr.rel (%p521) target = $region76
      $region75: #{clip_forward.8} parent=27 // pred_region
        %p524 = scmp.lt.s32.totalorder %s21, 1
        %s525 = scalar_select %p524, %s21, 1
        %s526 = scalar_lea.vmem %s14, %s525
      $region76: #{clip_forward.8} parent=27 // pred_fallthru
        _
    $region28: #{clip_forward.8} parent=5 // pred_fallthru
      _
    %p527 = scmp.le.s32.totalorder 1, %s21
    %p528 = scmp.lt.s32.totalorder %s21, 3
    %p529 = pnand %p527, %p528
    %p530 = pneg %p529
    // Predicated region
    $region77: #{clip_forward.8} parent=5 // pred_check
      _
    $region78: #{clip_forward.8} parent=5 // pred_check_branch
      %532 = sbr.rel (%p529) target = $region80
    $region79: #{clip_forward.8} parent=5 // pred_region
      %s533 = ssub.s32 %s21, 1
      %p534 = pneg %p42
      %p535 = pneg %p39
      %p536 = pneg %p63
      %p537 = pneg %p60
      %p538 = pneg %p84
      %p539 = pneg %p81
      %p540 = scmp.lt.s32.totalorder %s26, 1
      %s541 = scalar_select %p540, %s26, 1
      %s542 = scalar_lea.vmem %s3, %s541
      %p543 = pneg %p110
      %p544 = pneg %p107
      %p545 = scmp.lt.s32.totalorder %s26, 1
      %s546 = scalar_select %p545, %s26, 1
      %s547 = scalar_lea.vmem %s4, %s546
      %p548 = pneg %p136
      %p549 = pneg %p133
      %p550 = scmp.lt.s32.totalorder %s26, 1
      %s551 = scalar_select %p550, %s26, 1
      %s552 = smul.addr %s551, 48
      %s553 = smul.addr %s552, 4
      %s554 = scalar_lea.vmem %s5, %s553
      %p555 = pneg %p162
      %p556 = pneg %p159
      %p557 = scmp.lt.s32.totalorder %s26, 1
      %s558 = scalar_select %p557, %s26, 1
      %s559 = smul.addr %s558, 3
      %s560 = scalar_lea.vmem %s6, %s559
      %p561 = pneg %p188
      %p562 = pneg %p185
      %p563 = scmp.lt.s32.totalorder %s26, 1
      %s564 = scalar_select %p563, %s26, 1
      %s565 = smul.addr %s564, 16
      %s566 = smul.addr %s565, 4
      %s567 = scalar_lea.vmem %s7, %s566
      %p568 = pneg %p214
      %p569 = pneg %p211
      %p570 = scmp.lt.s32.totalorder %s26, 1
      %s571 = scalar_select %p570, %s26, 1
      %s572 = scalar_lea.vmem %s8, %s571
      %p573 = pneg %p240
      %p574 = pneg %p237
      %p575 = scmp.lt.s32.totalorder %s26, 1
      %s576 = scalar_select %p575, %s26, 1
      %s577 = scalar_lea.vmem %s9, %s576
      %p578 = pneg %p266
      %p579 = pneg %p263
      %p580 = scmp.lt.s32.totalorder %s26, 1
      %s581 = scalar_select %p580, %s26, 1
      %s582 = scalar_lea.vmem %s10, %s581
      %p583 = pneg %p292
      %p584 = pneg %p289
      %p585 = scmp.lt.s32.totalorder %s26, 1
      %s586 = scalar_select %p585, %s26, 1
      %s587 = smul.addr %s586, 64
      %s588 = smul.addr %s587, 4
      %s589 = scalar_lea.vmem %s11, %s588
      %p590 = pneg %p318
      %p591 = pneg %p315
      %p592 = scmp.lt.s32.totalorder %s26, 1
      %s593 = scalar_select %p592, %s26, 1
      %s594 = smul.addr %s593, 4
      %s595 = scalar_lea.vmem %s12, %s594
      %p596 = pneg %p344
      %p597 = pneg %p341
      %p598 = scmp.lt.s32.totalorder %s26, 1
      %s599 = scalar_select %p598, %s26, 1
      %s600 = smul.addr %s599, 64
      %s601 = smul.addr %s600, 4
      %s602 = scalar_lea.vmem %s13, %s601
      %p603 = pneg %p370
      %p604 = pneg %p367
      %p605 = scmp.lt.s32.totalorder %s26, 1
      %s606 = scalar_select %p605, %s26, 1
      %s607 = scalar_lea.vmem %s14, %s606
      %p608 = pneg %p396
      %p609 = pneg %p393
      %p610 = pneg %p417
      %p611 = pneg %p414
      %p612 = scmp.lt.s32.totalorder %s26, 1
      %s613 = scalar_select %p612, %s26, 1
      %s614 = scalar_lea.vmem %s3, %s613
      %p615 = scmp.lt.s32.totalorder %s26, 1
      %s616 = scalar_select %p615, %s26, 1
      %s617 = scalar_lea.vmem %s4, %s616
      %p618 = scmp.lt.s32.totalorder %s26, 1
      %s619 = scalar_select %p618, %s26, 1
      %s620 = smul.addr %s619, 48
      %s621 = smul.addr %s620, 4
      %s622 = scalar_lea.vmem %s5, %s621
      %p623 = scmp.lt.s32.totalorder %s26, 1
      %s624 = scalar_select %p623, %s26, 1
      %s625 = smul.addr %s624, 3
      %s626 = scalar_lea.vmem %s6, %s625
      %p627 = scmp.lt.s32.totalorder %s26, 1
      %s628 = scalar_select %p627, %s26, 1
      %s629 = smul.addr %s628, 16
      %s630 = smul.addr %s629, 4
      %s631 = scalar_lea.vmem %s7, %s630
      %p632 = scmp.lt.s32.totalorder %s26, 1
      %s633 = scalar_select %p632, %s26, 1
      %s634 = scalar_lea.vmem %s8, %s633
      %p635 = scmp.lt.s32.totalorder %s26, 1
      %s636 = scalar_select %p635, %s26, 1
      %s637 = scalar_lea.vmem %s9, %s636
      %p638 = scmp.lt.s32.totalorder %s26, 1
      %s639 = scalar_select %p638, %s26, 1
      %s640 = scalar_lea.vmem %s10, %s639
      %p641 = scmp.lt.s32.totalorder %s26, 1
      %s642 = scalar_select %p641, %s26, 1
      %s643 = smul.addr %s642, 64
      %s644 = smul.addr %s643, 4
      %s645 = scalar_lea.vmem %s11, %s644
      %p646 = scmp.lt.s32.totalorder %s26, 1
      %s647 = scalar_select %p646, %s26, 1
      %s648 = smul.addr %s647, 4
      %s649 = scalar_lea.vmem %s12, %s648
      %p650 = scmp.lt.s32.totalorder %s26, 1
      %s651 = scalar_select %p650, %s26, 1
      %s652 = smul.addr %s651, 64
      %s653 = smul.addr %s652, 4
      %s654 = scalar_lea.vmem %s13, %s653
      %p655 = scmp.lt.s32.totalorder %s26, 1
      %s656 = scalar_select %p655, %s26, 1
      %s657 = scalar_lea.vmem %s14, %s656
      %p659 = scmp.eq.s32.totalorder %s26, 0
      // Predicated region
      $region81: #{clip_forward.8} parent=79 // pred_check
        %p660 = pneg %p659
      $region82: #{clip_forward.8} parent=79 // pred_check_branch
        %662 = sbr.rel (%p660) target = $region84
      $region83: #{clip_forward.8} parent=79 // pred_region
        %v663 = vld [vmem:[%s0] sm:$0xff]
        %v664 = vld [vmem:[%s0 + $0x8] sm:$0xff]
        %665 = vst [vmem:[#allocation2] sm:$0xff] %v663
        %666 = vst [vmem:[#allocation2 + $0x8] sm:$0xff] %v664
      $region84: #{clip_forward.8} parent=79 // pred_fallthru
        _
      %v667 = vld [vmem:[%s614] sm:$0x1]
      %v668 = vld [vmem:[%s617] sm:$0x1]
      %v669 = vld [vmem:[%s637] sm:$0x1]
      %v670 = vld [vmem:[%s640] sm:$0x1]
      %v671 = vld [vmem:[%s622] sm:$0xff]
      %v672 = vld [vmem:[%s622 + $0x8] sm:$0xf]
      %v673 = vld [vmem:[%s622 + $0xc] sm:$0xff]
      %v674 = vld [vmem:[%s622 + $0x14] sm:$0xf]
      %v675 = vld [vmem:[%s622 + $0x18] sm:$0xff]
      %v676 = vld [vmem:[%s622 + $0x20] sm:$0xf]
      %v677 = vld [vmem:[%s622 + $0x24] sm:$0xff]
      %v678 = vld [vmem:[%s622 + $0x2c] sm:$0xf]
      %v679 = vld [vmem:[%s622 + $0x30] sm:$0xff]
      %v680 = vld [vmem:[%s622 + $0x38] sm:$0xf]
      %v681 = vld [vmem:[%s622 + $0x3c] sm:$0xff]
      %v682 = vld [vmem:[%s622 + $0x44] sm:$0xf]
      %v683 = vld [vmem:[%s622 + $0x48] sm:$0xff]
      %v684 = vld [vmem:[%s622 + $0x50] sm:$0xf]
      %v685 = vld [vmem:[%s622 + $0x54] sm:$0xff]
      %v686 = vld [vmem:[%s622 + $0x5c] sm:$0xf]
      %v687 = vld [vmem:[%s622 + $0x60] sm:$0xff]
      %v688 = vld [vmem:[%s622 + $0x68] sm:$0xf]
      %v689 = vld [vmem:[%s622 + $0x6c] sm:$0xff]
      %v690 = vld [vmem:[%s622 + $0x74] sm:$0xf]
      %v691 = vld [vmem:[%s622 + $0x78] sm:$0xff]
      %v692 = vld [vmem:[%s622 + $0x80] sm:$0xf]
      %v693 = vld [vmem:[%s622 + $0x84] sm:$0xff]
      %v694 = vld [vmem:[%s622 + $0x8c] sm:$0xf]
      %v695 = vld [vmem:[%s622 + $0x90] sm:$0xff]
      %v696 = vld [vmem:[%s622 + $0x98] sm:$0xf]
      %v697 = vld [vmem:[%s622 + $0x9c] sm:$0xff]
      %v698 = vld [vmem:[%s622 + $0xa4] sm:$0xf]
      %v699 = vld [vmem:[%s622 + $0xa8] sm:$0xff]
      %v700 = vld [vmem:[%s622 + $0xb0] sm:$0xf]
      %v701 = vld [vmem:[%s622 + $0xb4] sm:$0xff]
      %v702 = vld [vmem:[%s622 + $0xbc] sm:$0xf]
      %v703 = vld [vmem:[%s626] sm:$0x7]
      %v704 = vld [vmem:[%s631] sm:$0xf]
      %v705 = vld [vmem:[%s631 + $0x4] sm:$0xf]
      %v706 = vld [vmem:[%s631 + $0x8] sm:$0xf]
      %v707 = vld [vmem:[%s631 + $0xc] sm:$0xf]
      %v708 = vld [vmem:[%s631 + $0x10] sm:$0xf]
      %v709 = vld [vmem:[%s631 + $0x14] sm:$0xf]
      %v710 = vld [vmem:[%s631 + $0x18] sm:$0xf]
      %v711 = vld [vmem:[%s631 + $0x1c] sm:$0xf]
      %v712 = vld [vmem:[%s631 + $0x20] sm:$0xf]
      %v713 = vld [vmem:[%s631 + $0x24] sm:$0xf]
      %v714 = vld [vmem:[%s631 + $0x28] sm:$0xf]
      %v715 = vld [vmem:[%s631 + $0x2c] sm:$0xf]
      %v716 = vld [vmem:[%s631 + $0x30] sm:$0xf]
      %v717 = vld [vmem:[%s631 + $0x34] sm:$0xf]
      %v718 = vld [vmem:[%s631 + $0x38] sm:$0xf]
      %v719 = vld [vmem:[%s631 + $0x3c] sm:$0xf]
      %v720 = vld [vmem:[%s634] sm:$0x1]
      %v721 = vld [vmem:[%s645] sm:$0xff]
      %v722 = vld [vmem:[%s645 + $0x8] sm:$0xff]
      %v723 = vld [vmem:[%s645 + $0x10] sm:$0xff]
      %v724 = vld [vmem:[%s645 + $0x18] sm:$0xff]
      %v725 = vld [vmem:[%s645 + $0x20] sm:$0xff]
      %v726 = vld [vmem:[%s645 + $0x28] sm:$0xff]
      %v727 = vld [vmem:[%s645 + $0x30] sm:$0xff]
      %v728 = vld [vmem:[%s645 + $0x38] sm:$0xff]
      %v729 = vld [vmem:[%s645 + $0x40] sm:$0xff]
      %v730 = vld [vmem:[%s645 + $0x48] sm:$0xff]
      %v731 = vld [vmem:[%s645 + $0x50] sm:$0xff]
      %v732 = vld [vmem:[%s645 + $0x58] sm:$0xff]
      %v733 = vld [vmem:[%s645 + $0x60] sm:$0xff]
      %v734 = vld [vmem:[%s645 + $0x68] sm:$0xff]
      %v735 = vld [vmem:[%s645 + $0x70] sm:$0xff]
      %v736 = vld [vmem:[%s645 + $0x78] sm:$0xff]
      %v737 = vld [vmem:[%s645 + $0x80] sm:$0xff]
      %v738 = vld [vmem:[%s645 + $0x88] sm:$0xff]
      %v739 = vld [vmem:[%s645 + $0x90] sm:$0xff]
      %v740 = vld [vmem:[%s645 + $0x98] sm:$0xff]
      %v741 = vld [vmem:[%s645 + $0xa0] sm:$0xff]
      %v742 = vld [vmem:[%s645 + $0xa8] sm:$0xff]
      %v743 = vld [vmem:[%s645 + $0xb0] sm:$0xff]
      %v744 = vld [vmem:[%s645 + $0xb8] sm:$0xff]
      %v745 = vld [vmem:[%s645 + $0xc0] sm:$0xff]
      %v746 = vld [vmem:[%s645 + $0xc8] sm:$0xff]
      %v747 = vld [vmem:[%s645 + $0xd0] sm:$0xff]
      %v748 = vld [vmem:[%s645 + $0xd8] sm:$0xff]
      %v749 = vld [vmem:[%s645 + $0xe0] sm:$0xff]
      %v750 = vld [vmem:[%s645 + $0xe8] sm:$0xff]
      %v751 = vld [vmem:[%s645 + $0xf0] sm:$0xff]
      %v752 = vld [vmem:[%s645 + $0xf8] sm:$0xff]
      %v753 = vld [vmem:[%s649] sm:$0xf]
      %v754 = vld [vmem:[%s654] sm:$0xf]
      %v755 = vld [vmem:[%s654 + $0x4] sm:$0xf]
      %v756 = vld [vmem:[%s654 + $0x8] sm:$0xf]
      %v757 = vld [vmem:[%s654 + $0xc] sm:$0xf]
      %v758 = vld [vmem:[%s654 + $0x10] sm:$0xf]
      %v759 = vld [vmem:[%s654 + $0x14] sm:$0xf]
      %v760 = vld [vmem:[%s654 + $0x18] sm:$0xf]
      %v761 = vld [vmem:[%s654 + $0x1c] sm:$0xf]
      %v762 = vld [vmem:[%s654 + $0x20] sm:$0xf]
      %v763 = vld [vmem:[%s654 + $0x24] sm:$0xf]
      %v764 = vld [vmem:[%s654 + $0x28] sm:$0xf]
      %v765 = vld [vmem:[%s654 + $0x2c] sm:$0xf]
      %v766 = vld [vmem:[%s654 + $0x30] sm:$0xf]
      %v767 = vld [vmem:[%s654 + $0x34] sm:$0xf]
      %v768 = vld [vmem:[%s654 + $0x38] sm:$0xf]
      %v769 = vld [vmem:[%s654 + $0x3c] sm:$0xf]
      %v770 = vld [vmem:[%s654 + $0x40] sm:$0xf]
      %v771 = vld [vmem:[%s654 + $0x44] sm:$0xf]
      %v772 = vld [vmem:[%s654 + $0x48] sm:$0xf]
      %v773 = vld [vmem:[%s654 + $0x4c] sm:$0xf]
      %v774 = vld [vmem:[%s654 + $0x50] sm:$0xf]
      %v775 = vld [vmem:[%s654 + $0x54] sm:$0xf]
      %v776 = vld [vmem:[%s654 + $0x58] sm:$0xf]
      %v777 = vld [vmem:[%s654 + $0x5c] sm:$0xf]
      %v778 = vld [vmem:[%s654 + $0x60] sm:$0xf]
      %v779 = vld [vmem:[%s654 + $0x64] sm:$0xf]
      %v780 = vld [vmem:[%s654 + $0x68] sm:$0xf]
      %v781 = vld [vmem:[%s654 + $0x6c] sm:$0xf]
      %v782 = vld [vmem:[%s654 + $0x70] sm:$0xf]
      %v783 = vld [vmem:[%s654 + $0x74] sm:$0xf]
      %v784 = vld [vmem:[%s654 + $0x78] sm:$0xf]
      %v785 = vld [vmem:[%s654 + $0x7c] sm:$0xf]
      %v786 = vld [vmem:[%s654 + $0x80] sm:$0xf]
      %v787 = vld [vmem:[%s654 + $0x84] sm:$0xf]
      %v788 = vld [vmem:[%s654 + $0x88] sm:$0xf]
      %v789 = vld [vmem:[%s654 + $0x8c] sm:$0xf]
      %v790 = vld [vmem:[%s654 + $0x90] sm:$0xf]
      %v791 = vld [vmem:[%s654 + $0x94] sm:$0xf]
      %v792 = vld [vmem:[%s654 + $0x98] sm:$0xf]
      %v793 = vld [vmem:[%s654 + $0x9c] sm:$0xf]
      %v794 = vld [vmem:[%s654 + $0xa0] sm:$0xf]
      %v795 = vld [vmem:[%s654 + $0xa4] sm:$0xf]
      %v796 = vld [vmem:[%s654 + $0xa8] sm:$0xf]
      %v797 = vld [vmem:[%s654 + $0xac] sm:$0xf]
      %v798 = vld [vmem:[%s654 + $0xb0] sm:$0xf]
      %v799 = vld [vmem:[%s654 + $0xb4] sm:$0xf]
      %v800 = vld [vmem:[%s654 + $0xb8] sm:$0xf]
      %v801 = vld [vmem:[%s654 + $0xbc] sm:$0xf]
      %v802 = vld [vmem:[%s654 + $0xc0] sm:$0xf]
      %v803 = vld [vmem:[%s654 + $0xc4] sm:$0xf]
      %v804 = vld [vmem:[%s654 + $0xc8] sm:$0xf]
      %v805 = vld [vmem:[%s654 + $0xcc] sm:$0xf]
      %v806 = vld [vmem:[%s654 + $0xd0] sm:$0xf]
      %v807 = vld [vmem:[%s654 + $0xd4] sm:$0xf]
      %v808 = vld [vmem:[%s654 + $0xd8] sm:$0xf]
      %v809 = vld [vmem:[%s654 + $0xdc] sm:$0xf]
      %v810 = vld [vmem:[%s654 + $0xe0] sm:$0xf]
      %v811 = vld [vmem:[%s654 + $0xe4] sm:$0xf]
      %v812 = vld [vmem:[%s654 + $0xe8] sm:$0xf]
      %v813 = vld [vmem:[%s654 + $0xec] sm:$0xf]
      %v814 = vld [vmem:[%s654 + $0xf0] sm:$0xf]
      %v815 = vld [vmem:[%s654 + $0xf4] sm:$0xf]
      %v816 = vld [vmem:[%s654 + $0xf8] sm:$0xf]
      %v817 = vld [vmem:[%s654 + $0xfc] sm:$0xf]
      %v818 = vld [vmem:[%s657] sm:$0x1]
      %v819 = vlaneseq
      %v820 = vand.u32 %v819, 127
      %v821 = vlaneseq
      %v822 = vshrl.u32 %v821, 7
      %vm823 = vcmp.le.s32.totalorder %v820, %v822
      %v824 = vsel %vm823, 0.0, -1e+09
      %v825 = vld [vmem:[#allocation2] sm:$0xff]
      %v826 = vld [vmem:[#allocation2 + $0x8] sm:$0xff]
      %827 = vadd.xlane.f32.xlu0 %v825
      %v828 = vpop.xlane.xlu0 %827
      %829 = vadd.xlane.f32.xlu0 %v826
      %v830 = vpop.xlane.xlu0 %829
      %v831 = vrcp.pop 128.0
      %v832 = vmul.f32 %v828, %v831
      %v833 = vmul.f32 %v830, %v831
      %v834 = vsub.f32 %v825, %v832
      %v835 = vsub.f32 %v826, %v833
      %v836 = vmul.f32 %v834, %v834
      %v837 = vmul.f32 %v835, %v835
      %838 = vadd.xlane.f32.xlu0 %v836
      %v839 = vpop.xlane.xlu0 %838
      %840 = vadd.xlane.f32.xlu0 %v837
      %v841 = vpop.xlane.xlu0 %840
      %v842 = vmul.f32 %v839, %v831
      %v843 = vmul.f32 %v841, %v831
      %v844 = vadd.f32 %v842, 1e-05
      %v845 = vadd.f32 %v843, 1e-05
      %v846 = vrsqrt.pop %v844
      %v847 = vrsqrt.pop %v845
      %v848 = vmul.f32 %v834, %v846
      %v849 = vmul.f32 %v835, %v847
      %v851 = vlaneseq
      %v852 = vshrl.u32 %v851, 7
      %v853 = vsub.s32 0, %v852
      %v854 = vrot.slane %v667, %v853
      %v856 = vmul.f32 %v848, %v854
      %v857 = vmul.f32 %v849, %v854
      %v859 = vlaneseq
      %v860 = vshrl.u32 %v859, 7
      %v861 = vsub.s32 0, %v860
      %v862 = vrot.slane %v668, %v861
      %v864 = vadd.f32 %v856, %v862
      %v865 = vadd.f32 %v857, %v862
      %v866 = vpack.c.bf16 %v865, %v864
      %v868 = vlaneseq
      %v869 = vshrl.u32 %v868, 7
      %v870 = vsub.s32 0, %v869
      %v871 = vrot.slane %v703, %v870
      %v872 = vlaneseq
      %v873 = vshrl.u32 %v872, 7
      %v874 = vsub.s32 1, %v873
      %v875 = vrot.slane %v703, %v874
      %v876 = vlaneseq
      %v877 = vshrl.u32 %v876, 7
      %v878 = vsub.s32 2, %v877
      %v879 = vrot.slane %v703, %v878
      %v915 = vunpack.c.l.b16 %v671
      %v916 = vunpack.c.h.b16 %v671
      %v917 = vunpack.c.l.b16 %v672
      %v918 = vunpack.c.l.b16 %v673
      %v919 = vunpack.c.h.b16 %v673
      %v920 = vunpack.c.l.b16 %v674
      %v921 = vunpack.c.l.b16 %v675
      %v922 = vunpack.c.h.b16 %v675
      %v923 = vunpack.c.l.b16 %v676
      %v924 = vunpack.c.l.b16 %v677
      %v925 = vunpack.c.h.b16 %v677
      %v926 = vunpack.c.l.b16 %v678
      %v927 = vunpack.c.l.b16 %v679
      %v928 = vunpack.c.h.b16 %v679
      %v929 = vunpack.c.l.b16 %v680
      %v930 = vunpack.c.l.b16 %v681
      %v931 = vunpack.c.h.b16 %v681
      %v932 = vunpack.c.l.b16 %v682
      %v933 = vunpack.c.l.b16 %v683
      %v934 = vunpack.c.h.b16 %v683
      %v935 = vunpack.c.l.b16 %v684
      %v936 = vunpack.c.l.b16 %v685
      %v937 = vunpack.c.h.b16 %v685
      %v938 = vunpack.c.l.b16 %v686
      %v939 = vunpack.c.l.b16 %v687
      %v940 = vunpack.c.h.b16 %v687
      %v941 = vunpack.c.l.b16 %v688
      %v942 = vunpack.c.l.b16 %v689
      %v943 = vunpack.c.h.b16 %v689
      %v944 = vunpack.c.l.b16 %v690
      %v945 = vunpack.c.l.b16 %v691
      %v946 = vunpack.c.h.b16 %v691
      %v947 = vunpack.c.l.b16 %v692
      %v948 = vunpack.c.l.b16 %v693
      %v949 = vunpack.c.h.b16 %v693
      %v950 = vunpack.c.l.b16 %v694
      %v951 = vunpack.c.l.b16 %v695
      %v952 = vunpack.c.h.b16 %v695
      %v953 = vunpack.c.l.b16 %v696
      %v954 = vunpack.c.l.b16 %v697
      %v955 = vunpack.c.h.b16 %v697
      %v956 = vunpack.c.l.b16 %v698
      %v957 = vunpack.c.l.b16 %v699
      %v958 = vunpack.c.h.b16 %v699
      %v959 = vunpack.c.l.b16 %v700
      %v960 = vunpack.c.l.b16 %v701
      %v961 = vunpack.c.h.b16 %v701
      %v962 = vunpack.c.l.b16 %v702
      %v963 = vpack.c.b16 %v918, %v915
      %v964 = vpack.c.b16 %v919, %v916
      %v965 = vpack.c.b16 %v920, %v917
      %v966 = vpack.c.b16 %v924, %v921
      %v967 = vpack.c.b16 %v925, %v922
      %v968 = vpack.c.b16 %v926, %v923
      %v969 = vpack.c.b16 %v930, %v927
      %v970 = vpack.c.b16 %v931, %v928
      %v971 = vpack.c.b16 %v932, %v929
      %v972 = vpack.c.b16 %v936, %v933
      %v973 = vpack.c.b16 %v937, %v934
      %v974 = vpack.c.b16 %v938, %v935
      %v975 = vpack.c.b16 %v942, %v939
      %v976 = vpack.c.b16 %v943, %v940
      %v977 = vpack.c.b16 %v944, %v941
      %v978 = vpack.c.b16 %v948, %v945
      %v979 = vpack.c.b16 %v949, %v946
      %v980 = vpack.c.b16 %v950, %v947
      %v981 = vpack.c.b16 %v954, %v951
      %v982 = vpack.c.b16 %v955, %v952
      %v983 = vpack.c.b16 %v956, %v953
      %v984 = vpack.c.b16 %v960, %v957
      %v985 = vpack.c.b16 %v961, %v958
      %v986 = vpack.c.b16 %v962, %v959
      %1011 = vmatprep.subr.bf16.mxu0 %v985
      %1012 = vmatpush1.bf16.msra.mxu0 %v984
      %1013 = vmatprep.subr.bf16.mxu0 %v982
      %1014 = vmatpush1.bf16.msra.mxu0 %v981
      %1015 = vmatprep.subr.bf16.mxu0 %v979
      %1016 = vmatpush1.bf16.msra.mxu0 %v978
      %1017 = vmatprep.subr.bf16.mxu0 %v976
      %1018 = vmatpush1.bf16.msra.mxu0 %v975
      %1019 = vmatprep.subr.bf16.mxu0 %v973
      %1020 = vmatpush1.bf16.msra.mxu0 %v972
      %1021 = vmatprep.subr.bf16.mxu0 %v970
      %1022 = vmatpush1.bf16.msra.mxu0 %v969
      %1023 = vmatprep.subr.bf16.mxu0 %v967
      %1024 = vmatpush1.bf16.msra.mxu0 %v966
      %1025 = vmatprep.subr.bf16.mxu0 %v964
      %1026 = vmatpush1.bf16.msra.mxu0 %v963
      %1027 = vmatprep.subr.bf16.mxu0 0
      %1028 = vmatpush2.bf16.msra.mxu0 0
      %1029 = vmatprep.subr.bf16.mxu0 0
      %1030 = vmatpush2.bf16.msra.mxu0 0
      %1031 = vmatprep.subr.bf16.mxu0 0
      %1032 = vmatpush2.bf16.msra.mxu0 0
      %1033 = vmatprep.subr.bf16.mxu0 0
      %1034 = vmatpush2.bf16.msra.mxu0 0
      %1035 = vmatprep.subr.bf16.mxu0 0
      %1036 = vmatpush2.bf16.msra.mxu0 0
      %1037 = vmatprep.subr.bf16.mxu0 0
      %1038 = vmatpush2.bf16.msra.mxu0 0
      %1039 = vmatprep.subr.bf16.mxu0 0
      %1040 = vmatpush2.bf16.msra.mxu0 0
      %1041 = vmatprep.subr.bf16.mxu0 0
      %1042 = vmatpush2.bf16.msra.mxu0 0
      %1043 = vmatprep.mubr.bf16.mxu0 0
      %1044 = vmatmul.mubr.bf16.gmra.mxu0 %v866
      %v1045 = vpop.f32.mrf.mxu0
      %v1046 = vadd.f32 %v871, %v1045
      %v1047 = vpop.f32.mrf.mxu0
      %v1048 = vadd.f32 %v875, %v1047
      %v1049 = vpop.f32.mrf.mxu0
      %v1050 = vadd.f32 %v871, %v1049
      %v1051 = vpop.f32.mrf.mxu0
      %v1052 = vadd.f32 %v875, %v1051
      %1053 = vdwg.mxu0
      %1054 = vmatprep.subr.bf16.mxu0 0
      %1055 = vmatpush1.bf16.msra.mxu0 %v986
      %1056 = vmatprep.subr.bf16.mxu0 0
      %1057 = vmatpush1.bf16.msra.mxu0 %v983
      %1058 = vmatprep.subr.bf16.mxu0 0
      %1059 = vmatpush1.bf16.msra.mxu0 %v980
      %1060 = vmatprep.subr.bf16.mxu0 0
      %1061 = vmatpush1.bf16.msra.mxu0 %v977
      %1062 = vmatprep.subr.bf16.mxu0 0
      %1063 = vmatpush1.bf16.msra.mxu0 %v974
      %1064 = vmatprep.subr.bf16.mxu0 0
      %1065 = vmatpush1.bf16.msra.mxu0 %v971
      %1066 = vmatprep.subr.bf16.mxu0 0
      %1067 = vmatpush1.bf16.msra.mxu0 %v968
      %1068 = vmatprep.subr.bf16.mxu0 0
      %1069 = vmatpush1.bf16.msra.mxu0 %v965
      %1070 = vmatprep.subr.bf16.mxu0 0
      %1071 = vmatpush2.bf16.msra.mxu0 0
      %1072 = vmatprep.subr.bf16.mxu0 0
      %1073 = vmatpush2.bf16.msra.mxu0 0
      %1074 = vmatprep.subr.bf16.mxu0 0
      %1075 = vmatpush2.bf16.msra.mxu0 0
      %1076 = vmatprep.subr.bf16.mxu0 0
      %1077 = vmatpush2.bf16.msra.mxu0 0
      %1078 = vmatprep.subr.bf16.mxu0 0
      %1079 = vmatpush2.bf16.msra.mxu0 0
      %1080 = vmatprep.subr.bf16.mxu0 0
      %1081 = vmatpush2.bf16.msra.mxu0 0
      %1082 = vmatprep.subr.bf16.mxu0 0
      %1083 = vmatpush2.bf16.msra.mxu0 0
      %1084 = vmatprep.subr.bf16.mxu0 0
      %1085 = vmatpush2.bf16.msra.mxu0 0
      %1086 = vmatprep.mubr.bf16.mxu0 0
      %1087 = vmatmul.mubr.bf16.gmra.mxu0 %v866
      %v1088 = vpop.f32.mrf.mxu0
      %v1089 = vadd.f32 %v879, %v1088
      %v1090 = vpop.f32.mrf.mxu0
      %v1091 = vpop.f32.mrf.mxu0
      %v1092 = vadd.f32 %v879, %v1091
      %v1093 = vpop.f32.mrf.mxu0
      %1094 = vdwg.mxu0
      %v1095 = vmul.f32 %v1046, 0.125
      %v1096 = vmul.f32 %v1050, 0.125
      %v1097 = vpack.c.bf16 %v1095, %v1095
      %v1098 = vpack.c.bf16 %v1096, %v1096
      %v1099 = vpack.c.bf16 %v1048, %v1048
      %v1100 = vpack.c.bf16 %v1052, %v1052
      %v1101 = vpack.c.bf16 %v1089, %v1089
      %v1102 = vpack.c.bf16 %v1092, %v1092
      %vm1103 = vcmask 523264
      %v1105 = vsel %vm1103, %v1097, 0
      %v1108 = vsel %vm1103, %v1099, 0
      %1110 = vmatprep.subr.bf16.mxu0 0
      %1111 = vmatpush1.bf16.xpose.msra.mxu0 0
      %1112 = vmatprep.subr.bf16.mxu0 0
      %1113 = vmatpush1.bf16.xpose.msra.mxu0 0
      %1114 = vmatprep.subr.bf16.mxu0 0
      %1115 = vmatpush1.bf16.xpose.msra.mxu0 0
      %1116 = vmatprep.subr.bf16.mxu0 0
      %1117 = vmatpush1.bf16.xpose.msra.mxu0 0
      %1118 = vmatprep.subr.bf16.mxu0 0
      %1119 = vmatpush1.bf16.xpose.msra.mxu0 0
      %1120 = vmatprep.subr.bf16.mxu0 0
      %1121 = vmatpush1.bf16.xpose.msra.mxu0 0
      %1122 = vmatprep.subr.bf16.mxu0 0
      %1123 = vmatpush1.bf16.xpose.msra.mxu0 0
      %1124 = vmatprep.subr.bf16.mxu0 0
      %1125 = vmatpush1.bf16.xpose.msra.mxu0 %v1108
      %1126 = vmatprep.subr.bf16.mxu0 0
      %1127 = vmatpush2.bf16.xpose.msra.mxu0 0
      %1128 = vmatprep.subr.bf16.mxu0 0
      %1129 = vmatpush2.bf16.xpose.msra.mxu0 0
      %1130 = vmatprep.subr.bf16.mxu0 0
      %1131 = vmatpush2.bf16.xpose.msra.mxu0 0
      %1132 = vmatprep.subr.bf16.mxu0 0
      %1133 = vmatpush2.bf16.xpose.msra.mxu0 0
      %1134 = vmatprep.subr.bf16.mxu0 0
      %1135 = vmatpush2.bf16.xpose.msra.mxu0 0
      %1136 = vmatprep.subr.bf16.mxu0 0
      %1137 = vmatpush2.bf16.xpose.msra.mxu0 0
      %1138 = vmatprep.subr.bf16.mxu0 0
      %1139 = vmatpush2.bf16.xpose.msra.mxu0 0
      %1140 = vmatprep.subr.bf16.mxu0 0
      %1141 = vmatpush2.bf16.xpose.msra.mxu0 0
      %1142 = vmatprep.mubr.bf16.mxu0 0
      %1143 = vmatmul.mubr.bf16.gmra.mxu0 %v1105
      %v1144 = vpop.f32.mrf.mxu0
      %v1145 = vadd.f32 %v824, %v1144
      %v1146 = vpop.f32.mrf.mxu0
      %v1147 = vpop.f32.mrf.mxu0
      %v1148 = vpop.f32.mrf.mxu0
      %1149 = vdwg.mxu0
      %v1151 = vsel %vm1103, %v1098, 0
      %v1154 = vsel %vm1103, %v1100, 0
      %1156 = vmatprep.subr.bf16.mxu0 0
      %1157 = vmatpush1.bf16.xpose.msra.mxu0 0
      %1158 = vmatprep.subr.bf16.mxu0 0
      %1159 = vmatpush1.bf16.xpose.msra.mxu0 0
      %1160 = vmatprep.subr.bf16.mxu0 0
      %1161 = vmatpush1.bf16.xpose.msra.mxu0 0
      %1162 = vmatprep.subr.bf16.mxu0 0
      %1163 = vmatpush1.bf16.xpose.msra.mxu0 0
      %1164 = vmatprep.subr.bf16.mxu0 0
      %1165 = vmatpush1.bf16.xpose.msra.mxu0 0
      %1166 = vmatprep.subr.bf16.mxu0 0
      %1167 = vmatpush1.bf16.xpose.msra.mxu0 0
      %1168 = vmatprep.subr.bf16.mxu0 0
      %1169 = vmatpush1.bf16.xpose.msra.mxu0 0
      %1170 = vmatprep.subr.bf16.mxu0 0
      %1171 = vmatpush1.bf16.xpose.msra.mxu0 %v1154
      %1172 = vmatprep.subr.bf16.mxu0 0
      %1173 = vmatpush2.bf16.xpose.msra.mxu0 0
      %1174 = vmatprep.subr.bf16.mxu0 0
      %1175 = vmatpush2.bf16.xpose.msra.mxu0 0
      %1176 = vmatprep.subr.bf16.mxu0 0
      %1177 = vmatpush2.bf16.xpose.msra.mxu0 0
      %1178 = vmatprep.subr.bf16.mxu0 0
      %1179 = vmatpush2.bf16.xpose.msra.mxu0 0
      %1180 = vmatprep.subr.bf16.mxu0 0
      %1181 = vmatpush2.bf16.xpose.msra.mxu0 0
      %1182 = vmatprep.subr.bf16.mxu0 0
      %1183 = vmatpush2.bf16.xpose.msra.mxu0 0
      %1184 = vmatprep.subr.bf16.mxu0 0
      %1185 = vmatpush2.bf16.xpose.msra.mxu0 0
      %1186 = vmatprep.subr.bf16.mxu0 0
      %1187 = vmatpush2.bf16.xpose.msra.mxu0 0
      %1188 = vmatprep.mubr.bf16.mxu0 0
      %1189 = vmatmul.mubr.bf16.gmra.mxu0 %v1151
      %v1190 = vpop.f32.mrf.mxu0
      %v1191 = vadd.f32 %v824, %v1190
      %v1192 = vpop.f32.mrf.mxu0
      %v1193 = vpop.f32.mrf.mxu0
      %v1194 = vpop.f32.mrf.mxu0
      %1195 = vdwg.mxu0
      %vm1196 = vcmask 64512
      %v1197 = vsel %vm1196, %v1145, -inf
      %1198 = vmax.xlane.f32.xlu0 %v1197
      %v1199 = vpop.xlane.xlu0 %1198
      %v1200 = vsel %vm1196, %v1191, -inf
      %1201 = vmax.xlane.f32.xlu0 %v1200
      %v1202 = vpop.xlane.xlu0 %1201
      %v1203 = vsub.f32 %v1145, %v1199
      %v1204 = vsub.f32 %v1191, %v1202
      %v1205 = vmul.f32 %v1203, 1.442695
      %v1206 = vpow.pop %v1205
      %v1207 = vmul.f32 %v1204, 1.442695
      %v1208 = vpow.pop %v1207
      %v1209 = vsel %vm1196, %v1206, 0.0
      %1210 = vadd.xlane.f32.xlu0 %v1209
      %v1211 = vpop.xlane.xlu0 %1210
      %v1212 = vsel %vm1196, %v1208, 0.0
      %1213 = vadd.xlane.f32.xlu0 %v1212
      %v1214 = vpop.xlane.xlu0 %1213
      %v1215 = vrcp.pop %v1211
      %v1216 = vrcp.pop %v1214
      %v1217 = vmul.f32 %v1206, %v1215
      %v1218 = vmul.f32 %v1208, %v1216
      %v1219 = vpack.c.bf16 %v1217, %v1217
      %v1220 = vpack.c.bf16 %v1218, %v1218
      %v1222 = vsel %vm1196, %v1219, 0
      %vm1224 = vcmask 1043456
      %v1226 = vsel %vm1224, %v1101, 0
      %1228 = vmatprep.subr.bf16.mxu0 0
      %1229 = vmatpush1.bf16.msra.mxu0 0
      %1230 = vmatprep.subr.bf16.mxu0 0
      %1231 = vmatpush1.bf16.msra.mxu0 0
      %1232 = vmatprep.subr.bf16.mxu0 0
      %1233 = vmatpush1.bf16.msra.mxu0 0
      %1234 = vmatprep.subr.bf16.mxu0 0
      %1235 = vmatpush1.bf16.msra.mxu0 0
      %1236 = vmatprep.subr.bf16.mxu0 0
      %1237 = vmatpush1.bf16.msra.mxu0 0
      %1238 = vmatprep.subr.bf16.mxu0 0
      %1239 = vmatpush1.bf16.msra.mxu0 0
      %1240 = vmatprep.subr.bf16.mxu0 0
      %1241 = vmatpush1.bf16.msra.mxu0 0
      %1242 = vmatprep.subr.bf16.mxu0 0
      %1243 = vmatpush1.bf16.msra.mxu0 %v1226
      %1244 = vmatprep.subr.bf16.mxu0 0
      %1245 = vmatpush2.bf16.msra.mxu0 0
      %1246 = vmatprep.subr.bf16.mxu0 0
      %1247 = vmatpush2.bf16.msra.mxu0 0
      %1248 = vmatprep.subr.bf16.mxu0 0
      %1249 = vmatpush2.bf16.msra.mxu0 0
      %1250 = vmatprep.subr.bf16.mxu0 0
      %1251 = vmatpush2.bf16.msra.mxu0 0
      %1252 = vmatprep.subr.bf16.mxu0 0
      %1253 = vmatpush2.bf16.msra.mxu0 0
      %1254 = vmatprep.subr.bf16.mxu0 0
      %1255 = vmatpush2.bf16.msra.mxu0 0
      %1256 = vmatprep.subr.bf16.mxu0 0
      %1257 = vmatpush2.bf16.msra.mxu0 0
      %1258 = vmatprep.subr.bf16.mxu0 0
      %1259 = vmatpush2.bf16.msra.mxu0 0
      %1260 = vmatprep.mubr.bf16.mxu0 0
      %1261 = vmatmul.mubr.bf16.gmra.mxu0 %v1222
      %v1262 = vpop.f32.mrf.mxu0
      %v1263 = vadd.f32 0.0, %v1262
      %v1264 = vpop.f32.mrf.mxu0
      %v1265 = vpop.f32.mrf.mxu0
      %v1266 = vpop.f32.mrf.mxu0
      %1267 = vdwg.mxu0
      %v1269 = vsel %vm1196, %v1220, 0
      %v1272 = vsel %vm1224, %v1102, 0
      %1274 = vmatprep.subr.bf16.mxu0 0
      %1275 = vmatpush1.bf16.msra.mxu0 0
      %1276 = vmatprep.subr.bf16.mxu0 0
      %1277 = vmatpush1.bf16.msra.mxu0 0
      %1278 = vmatprep.subr.bf16.mxu0 0
      %1279 = vmatpush1.bf16.msra.mxu0 0
      %1280 = vmatprep.subr.bf16.mxu0 0
      %1281 = vmatpush1.bf16.msra.mxu0 0
      %1282 = vmatprep.subr.bf16.mxu0 0
      %1283 = vmatpush1.bf16.msra.mxu0 0
      %1284 = vmatprep.subr.bf16.mxu0 0
      %1285 = vmatpush1.bf16.msra.mxu0 0
      %1286 = vmatprep.subr.bf16.mxu0 0
      %1287 = vmatpush1.bf16.msra.mxu0 0
      %1288 = vmatprep.subr.bf16.mxu0 0
      %1289 = vmatpush1.bf16.msra.mxu0 %v1272
      %1290 = vmatprep.subr.bf16.mxu0 0
      %1291 = vmatpush2.bf16.msra.mxu0 0
      %1292 = vmatprep.subr.bf16.mxu0 0
      %1293 = vmatpush2.bf16.msra.mxu0 0
      %1294 = vmatprep.subr.bf16.mxu0 0
      %1295 = vmatpush2.bf16.msra.mxu0 0
      %1296 = vmatprep.subr.bf16.mxu0 0
      %1297 = vmatpush2.bf16.msra.mxu0 0
      %1298 = vmatprep.subr.bf16.mxu0 0
      %1299 = vmatpush2.bf16.msra.mxu0 0
      %1300 = vmatprep.subr.bf16.mxu0 0
      %1301 = vmatpush2.bf16.msra.mxu0 0
      %1302 = vmatprep.subr.bf16.mxu0 0
      %1303 = vmatpush2.bf16.msra.mxu0 0
      %1304 = vmatprep.subr.bf16.mxu0 0
      %1305 = vmatpush2.bf16.msra.mxu0 0
      %1306 = vmatprep.mubr.bf16.mxu0 0
      %1307 = vmatmul.mubr.bf16.gmra.mxu0 %v1269
      %v1308 = vpop.f32.mrf.mxu0
      %v1309 = vadd.f32 0.0, %v1308
      %v1310 = vpop.f32.mrf.mxu0
      %v1311 = vpop.f32.mrf.mxu0
      %v1312 = vpop.f32.mrf.mxu0
      %1313 = vdwg.mxu0
      %v1314 = vpack.c.bf16 %v1309, %v1263
      %1316 = vrot.lane.b32.xlu0 %v1097, 64
      %v1317 = vpop.permute.xlu0 %1316
      %1319 = vrot.lane.b32.xlu0 %v1099, 64
      %v1320 = vpop.permute.xlu0 %1319
      %v1322 = vsel %vm1103, %v1317, 0
      %v1325 = vsel %vm1103, %v1320, 0
      %1327 = vmatprep.subr.bf16.mxu0 0
      %1328 = vmatpush1.bf16.xpose.msra.mxu0 0
      %1329 = vmatprep.subr.bf16.mxu0 0
      %1330 = vmatpush1.bf16.xpose.msra.mxu0 0
      %1331 = vmatprep.subr.bf16.mxu0 0
      %1332 = vmatpush1.bf16.xpose.msra.mxu0 0
      %1333 = vmatprep.subr.bf16.mxu0 0
      %1334 = vmatpush1.bf16.xpose.msra.mxu0 0
      %1335 = vmatprep.subr.bf16.mxu0 0
      %1336 = vmatpush1.bf16.xpose.msra.mxu0 0
      %1337 = vmatprep.subr.bf16.mxu0 0
      %1338 = vmatpush1.bf16.xpose.msra.mxu0 0
      %1339 = vmatprep.subr.bf16.mxu0 0
      %1340 = vmatpush1.bf16.xpose.msra.mxu0 0
      %1341 = vmatprep.subr.bf16.mxu0 0
      %1342 = vmatpush1.bf16.xpose.msra.mxu0 %v1325
      %1343 = vmatprep.subr.bf16.mxu0 0
      %1344 = vmatpush2.bf16.xpose.msra.mxu0 0
      %1345 = vmatprep.subr.bf16.mxu0 0
      %1346 = vmatpush2.bf16.xpose.msra.mxu0 0
      %1347 = vmatprep.subr.bf16.mxu0 0
      %1348 = vmatpush2.bf16.xpose.msra.mxu0 0
      %1349 = vmatprep.subr.bf16.mxu0 0
      %1350 = vmatpush2.bf16.xpose.msra.mxu0 0
      %1351 = vmatprep.subr.bf16.mxu0 0
      %1352 = vmatpush2.bf16.xpose.msra.mxu0 0
      %1353 = vmatprep.subr.bf16.mxu0 0
      %1354 = vmatpush2.bf16.xpose.msra.mxu0 0
      %1355 = vmatprep.subr.bf16.mxu0 0
      %1356 = vmatpush2.bf16.xpose.msra.mxu0 0
      %1357 = vmatprep.subr.bf16.mxu0 0
      %1358 = vmatpush2.bf16.xpose.msra.mxu0 0
      %1359 = vmatprep.mubr.bf16.mxu0 0
      %1360 = vmatmul.mubr.bf16.gmra.mxu0 %v1322
      %v1361 = vpop.f32.mrf.mxu0
      %v1362 = vadd.f32 %v824, %v1361
      %v1363 = vpop.f32.mrf.mxu0
      %v1364 = vpop.f32.mrf.mxu0
      %v1365 = vpop.f32.mrf.mxu0
      %1366 = vdwg.mxu0
      %1368 = vrot.lane.b32.xlu0 %v1098, 64
      %v1369 = vpop.permute.xlu0 %1368
      %1371 = vrot.lane.b32.xlu0 %v1100, 64
      %v1372 = vpop.permute.xlu0 %1371
      %v1374 = vsel %vm1103, %v1369, 0
      %v1377 = vsel %vm1103, %v1372, 0
      %1379 = vmatprep.subr.bf16.mxu0 0
      %1380 = vmatpush1.bf16.xpose.msra.mxu0 0
      %1381 = vmatprep.subr.bf16.mxu0 0
      %1382 = vmatpush1.bf16.xpose.msra.mxu0 0
      %1383 = vmatprep.subr.bf16.mxu0 0
      %1384 = vmatpush1.bf16.xpose.msra.mxu0 0
      %1385 = vmatprep.subr.bf16.mxu0 0
      %1386 = vmatpush1.bf16.xpose.msra.mxu0 0
      %1387 = vmatprep.subr.bf16.mxu0 0
      %1388 = vmatpush1.bf16.xpose.msra.mxu0 0
      %1389 = vmatprep.subr.bf16.mxu0 0
      %1390 = vmatpush1.bf16.xpose.msra.mxu0 0
      %1391 = vmatprep.subr.bf16.mxu0 0
      %1392 = vmatpush1.bf16.xpose.msra.mxu0 0
      %1393 = vmatprep.subr.bf16.mxu0 0
      %1394 = vmatpush1.bf16.xpose.msra.mxu0 %v1377
      %1395 = vmatprep.subr.bf16.mxu0 0
      %1396 = vmatpush2.bf16.xpose.msra.mxu0 0
      %1397 = vmatprep.subr.bf16.mxu0 0
      %1398 = vmatpush2.bf16.xpose.msra.mxu0 0
      %1399 = vmatprep.subr.bf16.mxu0 0
      %1400 = vmatpush2.bf16.xpose.msra.mxu0 0
      %1401 = vmatprep.subr.bf16.mxu0 0
      %1402 = vmatpush2.bf16.xpose.msra.mxu0 0
      %1403 = vmatprep.subr.bf16.mxu0 0
      %1404 = vmatpush2.bf16.xpose.msra.mxu0 0
      %1405 = vmatprep.subr.bf16.mxu0 0
      %1406 = vmatpush2.bf16.xpose.msra.mxu0 0
      %1407 = vmatprep.subr.bf16.mxu0 0
      %1408 = vmatpush2.bf16.xpose.msra.mxu0 0
      %1409 = vmatprep.subr.bf16.mxu0 0
      %1410 = vmatpush2.bf16.xpose.msra.mxu0 0
      %1411 = vmatprep.mubr.bf16.mxu0 0
      %1412 = vmatmul.mubr.bf16.gmra.mxu0 %v1374
      %v1413 = vpop.f32.mrf.mxu0
      %v1414 = vadd.f32 %v824, %v1413
      %v1415 = vpop.f32.mrf.mxu0
      %v1416 = vpop.f32.mrf.mxu0
      %v1417 = vpop.f32.mrf.mxu0
      %1418 = vdwg.mxu0
      %v1419 = vsel %vm1196, %v1362, -inf
      %1420 = vmax.xlane.f32.xlu0 %v1419
      %v1421 = vpop.xlane.xlu0 %1420
      %v1422 = vsel %vm1196, %v1414, -inf
      %1423 = vmax.xlane.f32.xlu0 %v1422
      %v1424 = vpop.xlane.xlu0 %1423
      %v1425 = vsub.f32 %v1362, %v1421
      %v1426 = vsub.f32 %v1414, %v1424
      %v1427 = vmul.f32 %v1425, 1.442695
      %v1428 = vpow.pop %v1427
      %v1429 = vmul.f32 %v1426, 1.442695
      %v1430 = vpow.pop %v1429
      %v1431 = vsel %vm1196, %v1428, 0.0
      %1432 = vadd.xlane.f32.xlu0 %v1431
      %v1433 = vpop.xlane.xlu0 %1432
      %v1434 = vsel %vm1196, %v1430, 0.0
      %1435 = vadd.xlane.f32.xlu0 %v1434
      %v1436 = vpop.xlane.xlu0 %1435
      %v1437 = vrcp.pop %v1433
      %v1438 = vrcp.pop %v1436
      %v1439 = vmul.f32 %v1428, %v1437
      %v1440 = vmul.f32 %v1430, %v1438
      %v1441 = vpack.c.bf16 %v1439, %v1439
      %v1442 = vpack.c.bf16 %v1440, %v1440
      %1444 = vrot.lane.b32.xlu0 %v1101, 64
      %v1445 = vpop.permute.xlu0 %1444
      %v1447 = vsel %vm1196, %v1441, 0
      %v1450 = vsel %vm1224, %v1445, 0
      %1452 = vmatprep.subr.bf16.mxu0 0
      %1453 = vmatpush1.bf16.msra.mxu0 0
      %1454 = vmatprep.subr.bf16.mxu0 0
      %1455 = vmatpush1.bf16.msra.mxu0 0
      %1456 = vmatprep.subr.bf16.mxu0 0
      %1457 = vmatpush1.bf16.msra.mxu0 0
      %1458 = vmatprep.subr.bf16.mxu0 0
      %1459 = vmatpush1.bf16.msra.mxu0 0
      %1460 = vmatprep.subr.bf16.mxu0 0
      %1461 = vmatpush1.bf16.msra.mxu0 0
      %1462 = vmatprep.subr.bf16.mxu0 0
      %1463 = vmatpush1.bf16.msra.mxu0 0
      %1464 = vmatprep.subr.bf16.mxu0 0
      %1465 = vmatpush1.bf16.msra.mxu0 0
      %1466 = vmatprep.subr.bf16.mxu0 0
      %1467 = vmatpush1.bf16.msra.mxu0 %v1450
      %1468 = vmatprep.subr.bf16.mxu0 0
      %1469 = vmatpush2.bf16.msra.mxu0 0
      %1470 = vmatprep.subr.bf16.mxu0 0
      %1471 = vmatpush2.bf16.msra.mxu0 0
      %1472 = vmatprep.subr.bf16.mxu0 0
      %1473 = vmatpush2.bf16.msra.mxu0 0
      %1474 = vmatprep.subr.bf16.mxu0 0
      %1475 = vmatpush2.bf16.msra.mxu0 0
      %1476 = vmatprep.subr.bf16.mxu0 0
      %1477 = vmatpush2.bf16.msra.mxu0 0
      %1478 = vmatprep.subr.bf16.mxu0 0
      %1479 = vmatpush2.bf16.msra.mxu0 0
      %1480 = vmatprep.subr.bf16.mxu0 0
      %1481 = vmatpush2.bf16.msra.mxu0 0
      %1482 = vmatprep.subr.bf16.mxu0 0
      %1483 = vmatpush2.bf16.msra.mxu0 0
      %1484 = vmatprep.mubr.bf16.mxu0 0
      %1485 = vmatmul.mubr.bf16.gmra.mxu0 %v1447
      %v1486 = vpop.f32.mrf.mxu0
      %v1487 = vadd.f32 0.0, %v1486
      %v1488 = vpop.f32.mrf.mxu0
      %v1489 = vpop.f32.mrf.mxu0
      %v1490 = vpop.f32.mrf.mxu0
      %1491 = vdwg.mxu0
      %1493 = vrot.lane.b32.xlu0 %v1102, 64
      %v1494 = vpop.permute.xlu0 %1493
      %v1496 = vsel %vm1196, %v1442, 0
      %v1499 = vsel %vm1224, %v1494, 0
      %1501 = vmatprep.subr.bf16.mxu0 0
      %1502 = vmatpush1.bf16.msra.mxu0 0
      %1503 = vmatprep.subr.bf16.mxu0 0
      %1504 = vmatpush1.bf16.msra.mxu0 0
      %1505 = vmatprep.subr.bf16.mxu0 0
      %1506 = vmatpush1.bf16.msra.mxu0 0
      %1507 = vmatprep.subr.bf16.mxu0 0
      %1508 = vmatpush1.bf16.msra.mxu0 0
      %1509 = vmatprep.subr.bf16.mxu0 0
      %1510 = vmatpush1.bf16.msra.mxu0 0
      %1511 = vmatprep.subr.bf16.mxu0 0
      %1512 = vmatpush1.bf16.msra.mxu0 0
      %1513 = vmatprep.subr.bf16.mxu0 0
      %1514 = vmatpush1.bf16.msra.mxu0 0
      %1515 = vmatprep.subr.bf16.mxu0 0
      %1516 = vmatpush1.bf16.msra.mxu0 %v1499
      %1517 = vmatprep.subr.bf16.mxu0 0
      %1518 = vmatpush2.bf16.msra.mxu0 0
      %1519 = vmatprep.subr.bf16.mxu0 0
      %1520 = vmatpush2.bf16.msra.mxu0 0
      %1521 = vmatprep.subr.bf16.mxu0 0
      %1522 = vmatpush2.bf16.msra.mxu0 0
      %1523 = vmatprep.subr.bf16.mxu0 0
      %1524 = vmatpush2.bf16.msra.mxu0 0
      %1525 = vmatprep.subr.bf16.mxu0 0
      %1526 = vmatpush2.bf16.msra.mxu0 0
      %1527 = vmatprep.subr.bf16.mxu0 0
      %1528 = vmatpush2.bf16.msra.mxu0 0
      %1529 = vmatprep.subr.bf16.mxu0 0
      %1530 = vmatpush2.bf16.msra.mxu0 0
      %1531 = vmatprep.subr.bf16.mxu0 0
      %1532 = vmatpush2.bf16.msra.mxu0 0
      %1533 = vmatprep.mubr.bf16.mxu0 0
      %1534 = vmatmul.mubr.bf16.gmra.mxu0 %v1496
      %v1535 = vpop.f32.mrf.mxu0
      %v1536 = vadd.f32 0.0, %v1535
      %v1537 = vpop.f32.mrf.mxu0
      %v1538 = vpop.f32.mrf.mxu0
      %v1539 = vpop.f32.mrf.mxu0
      %1540 = vdwg.mxu0
      %v1541 = vpack.c.bf16 %v1536, %v1487
      %v1550 = vunpack.c.l.b16 %v712
      %v1551 = vunpack.c.l.b16 %v713
      %v1552 = vunpack.c.l.b16 %v714
      %v1553 = vunpack.c.l.b16 %v715
      %v1554 = vunpack.c.l.b16 %v716
      %v1555 = vunpack.c.l.b16 %v717
      %v1556 = vunpack.c.l.b16 %v718
      %v1557 = vunpack.c.l.b16 %v719
      %v1558 = vpack.c.b16 %v1551, %v1550
      %v1559 = vpack.c.b16 %v1553, %v1552
      %v1560 = vpack.c.b16 %v1555, %v1554
      %v1561 = vpack.c.b16 %v1557, %v1556
      %v1567 = vsel %vm1103, %v1541, 0
      %1569 = vmatprep.subr.bf16.mxu0 0
      %1570 = vmatpush1.bf16.msra.mxu0 0
      %1571 = vmatprep.subr.bf16.mxu0 0
      %1572 = vmatpush1.bf16.msra.mxu0 0
      %1573 = vmatprep.subr.bf16.mxu0 0
      %1574 = vmatpush1.bf16.msra.mxu0 0
      %1575 = vmatprep.subr.bf16.mxu0 0
      %1576 = vmatpush1.bf16.msra.mxu0 0
      %1577 = vmatprep.subr.bf16.mxu0 0
      %1578 = vmatpush1.bf16.msra.mxu0 %v1561
      %1579 = vmatprep.subr.bf16.mxu0 0
      %1580 = vmatpush1.bf16.msra.mxu0 %v1560
      %1581 = vmatprep.subr.bf16.mxu0 0
      %1582 = vmatpush1.bf16.msra.mxu0 %v1559
      %1583 = vmatprep.subr.bf16.mxu0 0
      %1584 = vmatpush1.bf16.msra.mxu0 %v1558
      %1585 = vmatprep.subr.bf16.mxu0 0
      %1586 = vmatpush2.bf16.msra.mxu0 0
      %1587 = vmatprep.subr.bf16.mxu0 0
      %1588 = vmatpush2.bf16.msra.mxu0 0
      %1589 = vmatprep.subr.bf16.mxu0 0
      %1590 = vmatpush2.bf16.msra.mxu0 0
      %1591 = vmatprep.subr.bf16.mxu0 0
      %1592 = vmatpush2.bf16.msra.mxu0 0
      %1593 = vmatprep.subr.bf16.mxu0 0
      %1594 = vmatpush2.bf16.msra.mxu0 0
      %1595 = vmatprep.subr.bf16.mxu0 0
      %1596 = vmatpush2.bf16.msra.mxu0 0
      %1597 = vmatprep.subr.bf16.mxu0 0
      %1598 = vmatpush2.bf16.msra.mxu0 0
      %1599 = vmatprep.subr.bf16.mxu0 0
      %1600 = vmatpush2.bf16.msra.mxu0 0
      %1601 = vmatprep.mubr.bf16.mxu0 0
      %1602 = vmatmul.mubr.bf16.gmra.mxu0 %v1567
      %v1603 = vpop.f32.mrf.mxu0
      %v1604 = vadd.f32 0.0, %v1603
      %v1605 = vpop.f32.mrf.mxu0
      %v1606 = vpop.f32.mrf.mxu0
      %v1607 = vadd.f32 0.0, %v1606
      %v1608 = vpop.f32.mrf.mxu0
      %1609 = vdwg.mxu0
      %v1618 = vunpack.c.l.b16 %v704
      %v1619 = vunpack.c.l.b16 %v705
      %v1620 = vunpack.c.l.b16 %v706
      %v1621 = vunpack.c.l.b16 %v707
      %v1622 = vunpack.c.l.b16 %v708
      %v1623 = vunpack.c.l.b16 %v709
      %v1624 = vunpack.c.l.b16 %v710
      %v1625 = vunpack.c.l.b16 %v711
      %v1626 = vpack.c.b16 %v1619, %v1618
      %v1627 = vpack.c.b16 %v1621, %v1620
      %v1628 = vpack.c.b16 %v1623, %v1622
      %v1629 = vpack.c.b16 %v1625, %v1624
      %v1635 = vsel %vm1103, %v1314, 0
      %1637 = vmatprep.subr.bf16.mxu0 0
      %1638 = vmatpush1.bf16.msra.mxu0 0
      %1639 = vmatprep.subr.bf16.mxu0 0
      %1640 = vmatpush1.bf16.msra.mxu0 0
      %1641 = vmatprep.subr.bf16.mxu0 0
      %1642 = vmatpush1.bf16.msra.mxu0 0
      %1643 = vmatprep.subr.bf16.mxu0 0
      %1644 = vmatpush1.bf16.msra.mxu0 0
      %1645 = vmatprep.subr.bf16.mxu0 0
      %1646 = vmatpush1.bf16.msra.mxu0 %v1629
      %1647 = vmatprep.subr.bf16.mxu0 0
      %1648 = vmatpush1.bf16.msra.mxu0 %v1628
      %1649 = vmatprep.subr.bf16.mxu0 0
      %1650 = vmatpush1.bf16.msra.mxu0 %v1627
      %1651 = vmatprep.subr.bf16.mxu0 0
      %1652 = vmatpush1.bf16.msra.mxu0 %v1626
      %1653 = vmatprep.subr.bf16.mxu0 0
      %1654 = vmatpush2.bf16.msra.mxu0 0
      %1655 = vmatprep.subr.bf16.mxu0 0
      %1656 = vmatpush2.bf16.msra.mxu0 0
      %1657 = vmatprep.subr.bf16.mxu0 0
      %1658 = vmatpush2.bf16.msra.mxu0 0
      %1659 = vmatprep.subr.bf16.mxu0 0
      %1660 = vmatpush2.bf16.msra.mxu0 0
      %1661 = vmatprep.subr.bf16.mxu0 0
      %1662 = vmatpush2.bf16.msra.mxu0 0
      %1663 = vmatprep.subr.bf16.mxu0 0
      %1664 = vmatpush2.bf16.msra.mxu0 0
      %1665 = vmatprep.subr.bf16.mxu0 0
      %1666 = vmatpush2.bf16.msra.mxu0 0
      %1667 = vmatprep.subr.bf16.mxu0 0
      %1668 = vmatpush2.bf16.msra.mxu0 0
      %1669 = vmatprep.mubr.bf16.mxu0 0
      %1670 = vmatmul.mubr.bf16.gmra.mxu0 %v1635
      %v1671 = vpop.f32.mrf.mxu0
      %v1672 = vadd.f32 %v1604, %v1671
      %v1673 = vpop.f32.mrf.mxu0
      %v1674 = vpop.f32.mrf.mxu0
      %v1675 = vadd.f32 %v1607, %v1674
      %v1676 = vpop.f32.mrf.mxu0
      %1677 = vdwg.mxu0
      %v1678 = vadd.f32 %v825, %v1672
      %v1679 = vadd.f32 %v826, %v1675
      %v1681 = vlaneseq
      %v1682 = vshrl.u32 %v1681, 7
      %v1683 = vsub.s32 0, %v1682
      %v1684 = vrot.slane %v720, %v1683
      %v1686 = vadd.f32 %v1678, %v1684
      %v1687 = vadd.f32 %v1679, %v1684
      %1688 = vadd.xlane.f32.xlu0 %v1686
      %v1689 = vpop.xlane.xlu0 %1688
      %1690 = vadd.xlane.f32.xlu0 %v1687
      %v1691 = vpop.xlane.xlu0 %1690
      %v1692 = vmul.f32 %v1689, %v831
      %v1693 = vmul.f32 %v1691, %v831
      %v1694 = vsub.f32 %v1686, %v1692
      %v1695 = vsub.f32 %v1687, %v1693
      %v1696 = vmul.f32 %v1694, %v1694
      %v1697 = vmul.f32 %v1695, %v1695
      %1698 = vadd.xlane.f32.xlu0 %v1696
      %v1699 = vpop.xlane.xlu0 %1698
      %1700 = vadd.xlane.f32.xlu0 %v1697
      %v1701 = vpop.xlane.xlu0 %1700
      %v1702 = vmul.f32 %v1699, %v831
      %v1703 = vmul.f32 %v1701, %v831
      %v1704 = vadd.f32 %v1702, 1e-05
      %v1705 = vadd.f32 %v1703, 1e-05
      %v1706 = vrsqrt.pop %v1704
      %v1707 = vrsqrt.pop %v1705
      %v1708 = vmul.f32 %v1694, %v1706
      %v1709 = vmul.f32 %v1695, %v1707
      %v1711 = vlaneseq
      %v1712 = vshrl.u32 %v1711, 7
      %v1713 = vsub.s32 0, %v1712
      %v1714 = vrot.slane %v669, %v1713
      %v1716 = vmul.f32 %v1708, %v1714
      %v1717 = vmul.f32 %v1709, %v1714
      %v1719 = vlaneseq
      %v1720 = vshrl.u32 %v1719, 7
      %v1721 = vsub.s32 0, %v1720
      %v1722 = vrot.slane %v670, %v1721
      %v1724 = vadd.f32 %v1716, %v1722
      %v1725 = vadd.f32 %v1717, %v1722
      %v1726 = vpack.c.bf16 %v1725, %v1724
      %v1728 = vlaneseq
      %v1729 = vshrl.u32 %v1728, 7
      %v1730 = vsub.s32 0, %v1729
      %v1731 = vrot.slane %v753, %v1730
      %v1732 = vlaneseq
      %v1733 = vshrl.u32 %v1732, 7
      %v1734 = vsub.s32 1, %v1733
      %v1735 = vrot.slane %v753, %v1734
      %v1736 = vlaneseq
      %v1737 = vshrl.u32 %v1736, 7
      %v1738 = vsub.s32 2, %v1737
      %v1739 = vrot.slane %v753, %v1738
      %v1740 = vlaneseq
      %v1741 = vshrl.u32 %v1740, 7
      %v1742 = vsub.s32 3, %v1741
      %v1743 = vrot.slane %v753, %v1742
      %v1780 = vunpack.c.l.b16 %v721
      %v1781 = vunpack.c.h.b16 %v721
      %v1782 = vunpack.c.l.b16 %v722
      %v1783 = vunpack.c.h.b16 %v722
      %v1784 = vunpack.c.l.b16 %v723
      %v1785 = vunpack.c.h.b16 %v723
      %v1786 = vunpack.c.l.b16 %v724
      %v1787 = vunpack.c.h.b16 %v724
      %v1788 = vunpack.c.l.b16 %v725
      %v1789 = vunpack.c.h.b16 %v725
      %v1790 = vunpack.c.l.b16 %v726
      %v1791 = vunpack.c.h.b16 %v726
      %v1792 = vunpack.c.l.b16 %v727
      %v1793 = vunpack.c.h.b16 %v727
      %v1794 = vunpack.c.l.b16 %v728
      %v1795 = vunpack.c.h.b16 %v728
      %v1796 = vunpack.c.l.b16 %v729
      %v1797 = vunpack.c.h.b16 %v729
      %v1798 = vunpack.c.l.b16 %v730
      %v1799 = vunpack.c.h.b16 %v730
      %v1800 = vunpack.c.l.b16 %v731
      %v1801 = vunpack.c.h.b16 %v731
      %v1802 = vunpack.c.l.b16 %v732
      %v1803 = vunpack.c.h.b16 %v732
      %v1804 = vunpack.c.l.b16 %v733
      %v1805 = vunpack.c.h.b16 %v733
      %v1806 = vunpack.c.l.b16 %v734
      %v1807 = vunpack.c.h.b16 %v734
      %v1808 = vunpack.c.l.b16 %v735
      %v1809 = vunpack.c.h.b16 %v735
      %v1810 = vunpack.c.l.b16 %v736
      %v1811 = vunpack.c.h.b16 %v736
      %v1812 = vunpack.c.l.b16 %v737
      %v1813 = vunpack.c.h.b16 %v737
      %v1814 = vunpack.c.l.b16 %v738
      %v1815 = vunpack.c.h.b16 %v738
      %v1816 = vunpack.c.l.b16 %v739
      %v1817 = vunpack.c.h.b16 %v739
      %v1818 = vunpack.c.l.b16 %v740
      %v1819 = vunpack.c.h.b16 %v740
      %v1820 = vunpack.c.l.b16 %v741
      %v1821 = vunpack.c.h.b16 %v741
      %v1822 = vunpack.c.l.b16 %v742
      %v1823 = vunpack.c.h.b16 %v742
      %v1824 = vunpack.c.l.b16 %v743
      %v1825 = vunpack.c.h.b16 %v743
      %v1826 = vunpack.c.l.b16 %v744
      %v1827 = vunpack.c.h.b16 %v744
      %v1828 = vunpack.c.l.b16 %v745
      %v1829 = vunpack.c.h.b16 %v745
      %v1830 = vunpack.c.l.b16 %v746
      %v1831 = vunpack.c.h.b16 %v746
      %v1832 = vunpack.c.l.b16 %v747
      %v1833 = vunpack.c.h.b16 %v747
      %v1834 = vunpack.c.l.b16 %v748
      %v1835 = vunpack.c.h.b16 %v748
      %v1836 = vunpack.c.l.b16 %v749
      %v1837 = vunpack.c.h.b16 %v749
      %v1838 = vunpack.c.l.b16 %v750
      %v1839 = vunpack.c.h.b16 %v750
      %v1840 = vunpack.c.l.b16 %v751
      %v1841 = vunpack.c.h.b16 %v751
      %v1842 = vunpack.c.l.b16 %v752
      %v1843 = vunpack.c.h.b16 %v752
      %v1844 = vpack.c.b16 %v1784, %v1780
      %v1845 = vpack.c.b16 %v1785, %v1781
      %v1846 = vpack.c.b16 %v1786, %v1782
      %v1847 = vpack.c.b16 %v1787, %v1783
      %v1848 = vpack.c.b16 %v1792, %v1788
      %v1849 = vpack.c.b16 %v1793, %v1789
      %v1850 = vpack.c.b16 %v1794, %v1790
      %v1851 = vpack.c.b16 %v1795, %v1791
      %v1852 = vpack.c.b16 %v1800, %v1796
      %v1853 = vpack.c.b16 %v1801, %v1797
      %v1854 = vpack.c.b16 %v1802, %v1798
      %v1855 = vpack.c.b16 %v1803, %v1799
      %v1856 = vpack.c.b16 %v1808, %v1804
      %v1857 = vpack.c.b16 %v1809, %v1805
      %v1858 = vpack.c.b16 %v1810, %v1806
      %v1859 = vpack.c.b16 %v1811, %v1807
      %v1860 = vpack.c.b16 %v1816, %v1812
      %v1861 = vpack.c.b16 %v1817, %v1813
      %v1862 = vpack.c.b16 %v1818, %v1814
      %v1863 = vpack.c.b16 %v1819, %v1815
      %v1864 = vpack.c.b16 %v1824, %v1820
      %v1865 = vpack.c.b16 %v1825, %v1821
      %v1866 = vpack.c.b16 %v1826, %v1822
      %v1867 = vpack.c.b16 %v1827, %v1823
      %v1868 = vpack.c.b16 %v1832, %v1828
      %v1869 = vpack.c.b16 %v1833, %v1829
      %v1870 = vpack.c.b16 %v1834, %v1830
      %v1871 = vpack.c.b16 %v1835, %v1831
      %v1872 = vpack.c.b16 %v1840, %v1836
      %v1873 = vpack.c.b16 %v1841, %v1837
      %v1874 = vpack.c.b16 %v1842, %v1838
      %v1875 = vpack.c.b16 %v1843, %v1839
      %1908 = vmatprep.subr.bf16.mxu0 %v1873
      %1909 = vmatpush1.bf16.msra.mxu0 %v1872
      %1910 = vmatprep.subr.bf16.mxu0 %v1869
      %1911 = vmatpush1.bf16.msra.mxu0 %v1868
      %1912 = vmatprep.subr.bf16.mxu0 %v1865
      %1913 = vmatpush1.bf16.msra.mxu0 %v1864
      %1914 = vmatprep.subr.bf16.mxu0 %v1861
      %1915 = vmatpush1.bf16.msra.mxu0 %v1860
      %1916 = vmatprep.subr.bf16.mxu0 %v1857
      %1917 = vmatpush1.bf16.msra.mxu0 %v1856
      %1918 = vmatprep.subr.bf16.mxu0 %v1853
      %1919 = vmatpush1.bf16.msra.mxu0 %v1852
      %1920 = vmatprep.subr.bf16.mxu0 %v1849
      %1921 = vmatpush1.bf16.msra.mxu0 %v1848
      %1922 = vmatprep.subr.bf16.mxu0 %v1845
      %1923 = vmatpush1.bf16.msra.mxu0 %v1844
      %1924 = vmatprep.subr.bf16.mxu0 0
      %1925 = vmatpush2.bf16.msra.mxu0 0
      %1926 = vmatprep.subr.bf16.mxu0 0
      %1927 = vmatpush2.bf16.msra.mxu0 0
      %1928 = vmatprep.subr.bf16.mxu0 0
      %1929 = vmatpush2.bf16.msra.mxu0 0
      %1930 = vmatprep.subr.bf16.mxu0 0
      %1931 = vmatpush2.bf16.msra.mxu0 0
      %1932 = vmatprep.subr.bf16.mxu0 0
      %1933 = vmatpush2.bf16.msra.mxu0 0
      %1934 = vmatprep.subr.bf16.mxu0 0
      %1935 = vmatpush2.bf16.msra.mxu0 0
      %1936 = vmatprep.subr.bf16.mxu0 0
      %1937 = vmatpush2.bf16.msra.mxu0 0
      %1938 = vmatprep.subr.bf16.mxu0 0
      %1939 = vmatpush2.bf16.msra.mxu0 0
      %1940 = vmatprep.mubr.bf16.mxu0 0
      %1941 = vmatmul.mubr.bf16.gmra.mxu0 %v1726
      %v1942 = vpop.f32.mrf.mxu0
      %v1943 = vadd.f32 %v1731, %v1942
      %v1944 = vpop.f32.mrf.mxu0
      %v1945 = vadd.f32 %v1735, %v1944
      %v1946 = vpop.f32.mrf.mxu0
      %v1947 = vadd.f32 %v1731, %v1946
      %v1948 = vpop.f32.mrf.mxu0
      %v1949 = vadd.f32 %v1735, %v1948
      %1950 = vdwg.mxu0
      %1951 = vmatprep.subr.bf16.mxu0 %v1875
      %1952 = vmatpush1.bf16.msra.mxu0 %v1874
      %1953 = vmatprep.subr.bf16.mxu0 %v1871
      %1954 = vmatpush1.bf16.msra.mxu0 %v1870
      %1955 = vmatprep.subr.bf16.mxu0 %v1867
      %1956 = vmatpush1.bf16.msra.mxu0 %v1866
      %1957 = vmatprep.subr.bf16.mxu0 %v1863
      %1958 = vmatpush1.bf16.msra.mxu0 %v1862
      %1959 = vmatprep.subr.bf16.mxu0 %v1859
      %1960 = vmatpush1.bf16.msra.mxu0 %v1858
      %1961 = vmatprep.subr.bf16.mxu0 %v1855
      %1962 = vmatpush1.bf16.msra.mxu0 %v1854
      %1963 = vmatprep.subr.bf16.mxu0 %v1851
      %1964 = vmatpush1.bf16.msra.mxu0 %v1850
      %1965 = vmatprep.subr.bf16.mxu0 %v1847
      %1966 = vmatpush1.bf16.msra.mxu0 %v1846
      %1967 = vmatprep.subr.bf16.mxu0 0
      %1968 = vmatpush2.bf16.msra.mxu0 0
      %1969 = vmatprep.subr.bf16.mxu0 0
      %1970 = vmatpush2.bf16.msra.mxu0 0
      %1971 = vmatprep.subr.bf16.mxu0 0
      %1972 = vmatpush2.bf16.msra.mxu0 0
      %1973 = vmatprep.subr.bf16.mxu0 0
      %1974 = vmatpush2.bf16.msra.mxu0 0
      %1975 = vmatprep.subr.bf16.mxu0 0
      %1976 = vmatpush2.bf16.msra.mxu0 0
      %1977 = vmatprep.subr.bf16.mxu0 0
      %1978 = vmatpush2.bf16.msra.mxu0 0
      %1979 = vmatprep.subr.bf16.mxu0 0
      %1980 = vmatpush2.bf16.msra.mxu0 0
      %1981 = vmatprep.subr.bf16.mxu0 0
      %1982 = vmatpush2.bf16.msra.mxu0 0
      %1983 = vmatprep.mubr.bf16.mxu0 0
      %1984 = vmatmul.mubr.bf16.gmra.mxu0 %v1726
      %v1985 = vpop.f32.mrf.mxu0
      %v1986 = vadd.f32 %v1739, %v1985
      %v1987 = vpop.f32.mrf.mxu0
      %v1988 = vadd.f32 %v1743, %v1987
      %v1989 = vpop.f32.mrf.mxu0
      %v1990 = vadd.f32 %v1739, %v1989
      %v1991 = vpop.f32.mrf.mxu0
      %v1992 = vadd.f32 %v1743, %v1991
      %1993 = vdwg.mxu0
      %v1994 = vmul.f32 %v1943, -1.702
      %v1995 = vmul.f32 %v1945, -1.702
      %v1996 = vmul.f32 %v1986, -1.702
      %v1997 = vmul.f32 %v1988, -1.702
      %v1998 = vmul.f32 %v1947, -1.702
      %v1999 = vmul.f32 %v1949, -1.702
      %v2000 = vmul.f32 %v1990, -1.702
      %v2001 = vmul.f32 %v1992, -1.702
      %v2002 = vmul.f32 %v1994, 1.442695
      %v2003 = vpow.pop %v2002
      %v2004 = vmul.f32 %v1995, 1.442695
      %v2005 = vpow.pop %v2004
      %v2006 = vmul.f32 %v1996, 1.442695
      %v2007 = vpow.pop %v2006
      %v2008 = vmul.f32 %v1997, 1.442695
      %v2009 = vpow.pop %v2008
      %v2010 = vmul.f32 %v1998, 1.442695
      %v2011 = vpow.pop %v2010
      %v2012 = vmul.f32 %v1999, 1.442695
      %v2013 = vpow.pop %v2012
      %v2014 = vmul.f32 %v2000, 1.442695
      %v2015 = vpow.pop %v2014
      %v2016 = vmul.f32 %v2001, 1.442695
      %v2017 = vpow.pop %v2016
      %v2018 = vadd.f32 %v2003, 1.0
      %v2019 = vadd.f32 %v2005, 1.0
      %v2020 = vadd.f32 %v2007, 1.0
      %v2021 = vadd.f32 %v2009, 1.0
      %v2022 = vadd.f32 %v2011, 1.0
      %v2023 = vadd.f32 %v2013, 1.0
      %v2024 = vadd.f32 %v2015, 1.0
      %v2025 = vadd.f32 %v2017, 1.0
      %v2026 = vrcp.pop %v2018
      %v2027 = vrcp.pop %v2019
      %v2028 = vrcp.pop %v2020
      %v2029 = vrcp.pop %v2021
      %v2030 = vrcp.pop %v2022
      %v2031 = vrcp.pop %v2023
      %v2032 = vrcp.pop %v2024
      %v2033 = vrcp.pop %v2025
      %v2034 = vmul.f32 %v1943, %v2026
      %v2035 = vmul.f32 %v1945, %v2027
      %v2036 = vmul.f32 %v1986, %v2028
      %v2037 = vmul.f32 %v1988, %v2029
      %v2038 = vmul.f32 %v1947, %v2030
      %v2039 = vmul.f32 %v1949, %v2031
      %v2040 = vmul.f32 %v1990, %v2032
      %v2041 = vmul.f32 %v1992, %v2033
      %v2042 = vpack.c.bf16 %v2038, %v2034
      %v2043 = vpack.c.bf16 %v2039, %v2035
      %v2044 = vpack.c.bf16 %v2040, %v2036
      %v2045 = vpack.c.bf16 %v2041, %v2037
      %v2047 = vlaneseq
      %v2048 = vshrl.u32 %v2047, 7
      %v2049 = vsub.s32 0, %v2048
      %v2050 = vrot.slane %v818, %v2049
      %v2116 = vunpack.c.l.b16 %v754
      %v2117 = vunpack.c.l.b16 %v755
      %v2118 = vunpack.c.l.b16 %v756
      %v2119 = vunpack.c.l.b16 %v757
      %v2120 = vunpack.c.l.b16 %v758
      %v2121 = vunpack.c.l.b16 %v759
      %v2122 = vunpack.c.l.b16 %v760
      %v2123 = vunpack.c.l.b16 %v761
      %v2124 = vunpack.c.l.b16 %v762
      %v2125 = vunpack.c.l.b16 %v763
      %v2126 = vunpack.c.l.b16 %v764
      %v2127 = vunpack.c.l.b16 %v765
      %v2128 = vunpack.c.l.b16 %v766
      %v2129 = vunpack.c.l.b16 %v767
      %v2130 = vunpack.c.l.b16 %v768
      %v2131 = vunpack.c.l.b16 %v769
      %v2132 = vunpack.c.l.b16 %v770
      %v2133 = vunpack.c.l.b16 %v771
      %v2134 = vunpack.c.l.b16 %v772
      %v2135 = vunpack.c.l.b16 %v773
      %v2136 = vunpack.c.l.b16 %v774
      %v2137 = vunpack.c.l.b16 %v775
      %v2138 = vunpack.c.l.b16 %v776
      %v2139 = vunpack.c.l.b16 %v777
      %v2140 = vunpack.c.l.b16 %v778
      %v2141 = vunpack.c.l.b16 %v779
      %v2142 = vunpack.c.l.b16 %v780
      %v2143 = vunpack.c.l.b16 %v781
      %v2144 = vunpack.c.l.b16 %v782
      %v2145 = vunpack.c.l.b16 %v783
      %v2146 = vunpack.c.l.b16 %v784
      %v2147 = vunpack.c.l.b16 %v785
      %v2148 = vunpack.c.l.b16 %v786
      %v2149 = vunpack.c.l.b16 %v787
      %v2150 = vunpack.c.l.b16 %v788
      %v2151 = vunpack.c.l.b16 %v789
      %v2152 = vunpack.c.l.b16 %v790
      %v2153 = vunpack.c.l.b16 %v791
      %v2154 = vunpack.c.l.b16 %v792
      %v2155 = vunpack.c.l.b16 %v793
      %v2156 = vunpack.c.l.b16 %v794
      %v2157 = vunpack.c.l.b16 %v795
      %v2158 = vunpack.c.l.b16 %v796
      %v2159 = vunpack.c.l.b16 %v797
      %v2160 = vunpack.c.l.b16 %v798
      %v2161 = vunpack.c.l.b16 %v799
      %v2162 = vunpack.c.l.b16 %v800
      %v2163 = vunpack.c.l.b16 %v801
      %v2164 = vunpack.c.l.b16 %v802
      %v2165 = vunpack.c.l.b16 %v803
      %v2166 = vunpack.c.l.b16 %v804
      %v2167 = vunpack.c.l.b16 %v805
      %v2168 = vunpack.c.l.b16 %v806
      %v2169 = vunpack.c.l.b16 %v807
      %v2170 = vunpack.c.l.b16 %v808
      %v2171 = vunpack.c.l.b16 %v809
      %v2172 = vunpack.c.l.b16 %v810
      %v2173 = vunpack.c.l.b16 %v811
      %v2174 = vunpack.c.l.b16 %v812
      %v2175 = vunpack.c.l.b16 %v813
      %v2176 = vunpack.c.l.b16 %v814
      %v2177 = vunpack.c.l.b16 %v815
      %v2178 = vunpack.c.l.b16 %v816
      %v2179 = vunpack.c.l.b16 %v817
      %v2180 = vpack.c.b16 %v2117, %v2116
      %v2181 = vpack.c.b16 %v2119, %v2118
      %v2182 = vpack.c.b16 %v2121, %v2120
      %v2183 = vpack.c.b16 %v2123, %v2122
      %v2184 = vpack.c.b16 %v2125, %v2124
      %v2185 = vpack.c.b16 %v2127, %v2126
      %v2186 = vpack.c.b16 %v2129, %v2128
      %v2187 = vpack.c.b16 %v2131, %v2130
      %v2188 = vpack.c.b16 %v2133, %v2132
      %v2189 = vpack.c.b16 %v2135, %v2134
      %v2190 = vpack.c.b16 %v2137, %v2136
      %v2191 = vpack.c.b16 %v2139, %v2138
      %v2192 = vpack.c.b16 %v2141, %v2140
      %v2193 = vpack.c.b16 %v2143, %v2142
      %v2194 = vpack.c.b16 %v2145, %v2144
      %v2195 = vpack.c.b16 %v2147, %v2146
      %v2196 = vpack.c.b16 %v2149, %v2148
      %v2197 = vpack.c.b16 %v2151, %v2150
      %v2198 = vpack.c.b16 %v2153, %v2152
      %v2199 = vpack.c.b16 %v2155, %v2154
      %v2200 = vpack.c.b16 %v2157, %v2156
      %v2201 = vpack.c.b16 %v2159, %v2158
      %v2202 = vpack.c.b16 %v2161, %v2160
      %v2203 = vpack.c.b16 %v2163, %v2162
      %v2204 = vpack.c.b16 %v2165, %v2164
      %v2205 = vpack.c.b16 %v2167, %v2166
      %v2206 = vpack.c.b16 %v2169, %v2168
      %v2207 = vpack.c.b16 %v2171, %v2170
      %v2208 = vpack.c.b16 %v2173, %v2172
      %v2209 = vpack.c.b16 %v2175, %v2174
      %v2210 = vpack.c.b16 %v2177, %v2176
      %v2211 = vpack.c.b16 %v2179, %v2178
      %2244 = vmatprep.subr.bf16.mxu0 0
      %2245 = vmatpush1.bf16.msra.mxu0 %v2187
      %2246 = vmatprep.subr.bf16.mxu0 0
      %2247 = vmatpush1.bf16.msra.mxu0 %v2186
      %2248 = vmatprep.subr.bf16.mxu0 0
      %2249 = vmatpush1.bf16.msra.mxu0 %v2185
      %2250 = vmatprep.subr.bf16.mxu0 0
      %2251 = vmatpush1.bf16.msra.mxu0 %v2184
      %2252 = vmatprep.subr.bf16.mxu0 0
      %2253 = vmatpush1.bf16.msra.mxu0 %v2183
      %2254 = vmatprep.subr.bf16.mxu0 0
      %2255 = vmatpush1.bf16.msra.mxu0 %v2182
      %2256 = vmatprep.subr.bf16.mxu0 0
      %2257 = vmatpush1.bf16.msra.mxu0 %v2181
      %2258 = vmatprep.subr.bf16.mxu0 0
      %2259 = vmatpush1.bf16.msra.mxu0 %v2180
      %2260 = vmatprep.subr.bf16.mxu0 0
      %2261 = vmatpush2.bf16.msra.mxu0 %v2195
      %2262 = vmatprep.subr.bf16.mxu0 0
      %2263 = vmatpush2.bf16.msra.mxu0 %v2194
      %2264 = vmatprep.subr.bf16.mxu0 0
      %2265 = vmatpush2.bf16.msra.mxu0 %v2193
      %2266 = vmatprep.subr.bf16.mxu0 0
      %2267 = vmatpush2.bf16.msra.mxu0 %v2192
      %2268 = vmatprep.subr.bf16.mxu0 0
      %2269 = vmatpush2.bf16.msra.mxu0 %v2191
      %2270 = vmatprep.subr.bf16.mxu0 0
      %2271 = vmatpush2.bf16.msra.mxu0 %v2190
      %2272 = vmatprep.subr.bf16.mxu0 0
      %2273 = vmatpush2.bf16.msra.mxu0 %v2189
      %2274 = vmatprep.subr.bf16.mxu0 0
      %2275 = vmatpush2.bf16.msra.mxu0 %v2188
      %2276 = vmatprep.mubr.bf16.mxu0 %v2043
      %2277 = vmatmul.mubr.bf16.gmra.mxu0 %v2042
      %v2278 = vpop.f32.mrf.mxu0
      %v2279 = vadd.f32 %v2050, %v2278
      %v2280 = vpop.f32.mrf.mxu0
      %v2281 = vpop.f32.mrf.mxu0
      %v2282 = vadd.f32 %v2050, %v2281
      %v2283 = vpop.f32.mrf.mxu0
      %2284 = vdwg.mxu0
      %2285 = vmatprep.subr.bf16.mxu0 0
      %2286 = vmatpush1.bf16.msra.mxu0 %v2203
      %2287 = vmatprep.subr.bf16.mxu0 0
      %2288 = vmatpush1.bf16.msra.mxu0 %v2202
      %2289 = vmatprep.subr.bf16.mxu0 0
      %2290 = vmatpush1.bf16.msra.mxu0 %v2201
      %2291 = vmatprep.subr.bf16.mxu0 0
      %2292 = vmatpush1.bf16.msra.mxu0 %v2200
      %2293 = vmatprep.subr.bf16.mxu0 0
      %2294 = vmatpush1.bf16.msra.mxu0 %v2199
      %2295 = vmatprep.subr.bf16.mxu0 0
      %2296 = vmatpush1.bf16.msra.mxu0 %v2198
      %2297 = vmatprep.subr.bf16.mxu0 0
      %2298 = vmatpush1.bf16.msra.mxu0 %v2197
      %2299 = vmatprep.subr.bf16.mxu0 0
      %2300 = vmatpush1.bf16.msra.mxu0 %v2196
      %2301 = vmatprep.subr.bf16.mxu0 0
      %2302 = vmatpush2.bf16.msra.mxu0 %v2211
      %2303 = vmatprep.subr.bf16.mxu0 0
      %2304 = vmatpush2.bf16.msra.mxu0 %v2210
      %2305 = vmatprep.subr.bf16.mxu0 0
      %2306 = vmatpush2.bf16.msra.mxu0 %v2209
      %2307 = vmatprep.subr.bf16.mxu0 0
      %2308 = vmatpush2.bf16.msra.mxu0 %v2208
      %2309 = vmatprep.subr.bf16.mxu0 0
      %2310 = vmatpush2.bf16.msra.mxu0 %v2207
      %2311 = vmatprep.subr.bf16.mxu0 0
      %2312 = vmatpush2.bf16.msra.mxu0 %v2206
      %2313 = vmatprep.subr.bf16.mxu0 0
      %2314 = vmatpush2.bf16.msra.mxu0 %v2205
      %2315 = vmatprep.subr.bf16.mxu0 0
      %2316 = vmatpush2.bf16.msra.mxu0 %v2204
      %2317 = vmatprep.mubr.bf16.mxu0 %v2045
      %2318 = vmatmul.mubr.bf16.gmra.mxu0 %v2044
      %v2319 = vpop.f32.mrf.mxu0
      %v2320 = vadd.f32 %v2279, %v2319
      %v2321 = vpop.f32.mrf.mxu0
      %v2322 = vpop.f32.mrf.mxu0
      %v2323 = vadd.f32 %v2282, %v2322
      %v2324 = vpop.f32.mrf.mxu0
      %2325 = vdwg.mxu0
      %v2326 = vadd.f32 %v1686, %v2320
      %v2327 = vadd.f32 %v1687, %v2323
      %2328 = vst [vmem:[#allocation2] sm:$0xff] %v2326
      %2329 = vst [vmem:[#allocation2 + $0x8] sm:$0xff] %v2327
      %p2330 = scmp.eq.s32.totalorder %s26, 1
      // Predicated region
      $region85: #{clip_forward.8} parent=79 // pred_check
        %p2331 = pneg %p2330
      $region86: #{clip_forward.8} parent=79 // pred_check_branch
        %2333 = sbr.rel (%p2331) target = $region88
      $region87: #{clip_forward.8} parent=79 // pred_region
        %v2334 = vld [vmem:[#allocation2] sm:$0xff]
        %v2335 = vld [vmem:[#allocation2 + $0x8] sm:$0xff]
        %2336 = vst [vmem:[%s15] sm:$0xff] %v2334
        %2337 = vst [vmem:[%s15 + $0x8] sm:$0xff] %v2335
      $region88: #{clip_forward.8} parent=79 // pred_fallthru
        _
      // Predicated region
      $region89: #{clip_forward.8} parent=79 // pred_check
        %p2338 = pneg %p414
      $region90: #{clip_forward.8} parent=79 // pred_check_branch
        %2340 = sbr.rel (%p2338) target = $region92
      $region91: #{clip_forward.8} parent=79 // pred_region
        _
      $region92: #{clip_forward.8} parent=79 // pred_fallthru
        _
      // Predicated region
      $region93: #{clip_forward.8} parent=79 // pred_check
        %p2341 = pneg %p414
      $region94: #{clip_forward.8} parent=79 // pred_check_branch
        %2343 = sbr.rel (%p2341) target = $region96
      $region95: #{clip_forward.8} parent=79 // pred_region
        _
      $region96: #{clip_forward.8} parent=79 // pred_fallthru
        _
    $region80: #{clip_forward.8} parent=5 // pred_fallthru
      _
    %p2344 = scmp.le.s32.totalorder 2, %s21
    // Predicated region
    $region97: #{clip_forward.8} parent=5 // pred_check
      %p2345 = pneg %p2344
    $region98: #{clip_forward.8} parent=5 // pred_check_branch
      %2347 = sbr.rel (%p2345) target = $region100
    $region99: #{clip_forward.8} parent=5 // pred_region
      %s2348 = ssub.s32 %s21, 2
    $region100: #{clip_forward.8} parent=5 // pred_fallthru
      _
  $region6: #{clip_forward.8} parent=0 // loop_footer
    %s25 = sadd.s32 1, %s21
  $region7: #{clip_forward.8} parent=0 // loop_footer_branch
    %20 = sbr.rel target = $region3
  $region8: #{clip_forward.8} parent=0 // loop_exit
    _

</llo_original>
